<compile_context>
chip_gen: v5e
topology: v5e:2x2
jax: 0.10.0
libtpu: 0.0.40
codegen_flags: <defaults>
</compile_context>

<pallas_src>
import functools

import jax
import jax.numpy as jnp
from jax.experimental import pallas as pl
from jax.experimental.pallas import tpu as pltpu

_LANE = 128      # pad hidden size so each gate block is lane-aligned
_SUBLANE = 8     # pad batch so per-timestep tiles are sublane-aligned


def _round_up(x, m):
    return (x + m - 1) // m * m


def _largest_divisor_leq(n, cap):
    for d in range(min(n, cap), 0, -1):
        if n % d == 0:
            return d
    return 1


def _fused_gru_kernel(x_ref, *args, num_layers, t_chunk, b_tile, h_pad, unroll):
    """Fused multi-layer GRU forward over one (batch-tile, time-chunk) grid step.

    x_ref:   (Tc, Bt, I)        layer-0 input chunk
    per layer l: wih_t (in_p, 3Hp) bf16, bih (1, 3Hp) f32 (b_ih + folded b_hr/b_hz),
                 whh_t (Hp, 3Hp) bf16, bhn (1, Hp) f32
    out_ref: (Tc, Bt, Hp)       last-layer outputs (lane-dense, 128-wide stores)
    hid_ref: (L, Bt, Hp)        per-layer hidden state; block index constant along
                                the chunk axis -> resident VMEM carry across chunks
    gi_scr:  VMEM (Tc*Bt, 3Hp) f32   hoisted input projection for current layer
    act_scr: VMEM (Tc*Bt, Hp)  f32   inter-layer activations (f32 carry)
    """
    n_p = 4 * num_layers
    param_refs = args[:n_p]
    out_ref, hid_ref, gi_scr, act_scr = args[n_p:n_p + 4]
    Tc, Bt, Hp = t_chunk, b_tile, h_pad

    # Zero the resident hidden-state carry at the first chunk of each batch tile
    # (PyTorch h0 = 0).  It stays in VMEM across the whole 'arbitrary' chunk axis.
    @pl.when(pl.program_id(1) == 0)
    def _init():
        hid_ref[...] = jnp.zeros_like(hid_ref)

    # Layer-0 input for this chunk, flattened to (Tc*Bt, I).  Bt is a multiple of
    # 8 sublanes, so this reshape is relayout-free.
    layer_in = x_ref[...].reshape(Tc * Bt, x_ref.shape[-1]).astype(jnp.float32)

    for layer in range(num_layers):
        wih_ref, bih_ref, whh_ref, bhn_ref = param_refs[4 * layer:4 * layer + 4]
        is_last = layer == num_layers - 1

        # Hoisted input projection over the whole chunk: one batched MXU matmul
        # (bf16 operands, f32 accumulation) with b_ih (+ folded b_hr/b_hz) added.
        gi_scr[...] = (
            jnp.dot(layer_in.astype(jnp.bfloat16), wih_ref[...],
                    preferred_element_type=jnp.float32)
            + bih_ref[...].astype(jnp.float32)
        )

        # Hoist the resident recurrent weight load and b_hn broadcast out of the
        # serial time loop (JAX does not CSE broadcasts inside loops).
        whh = whh_ref[...]                                               # (Hp, 3Hp) bf16
        bhn = jnp.broadcast_to(bhn_ref[...].astype(jnp.float32), (Bt, Hp))

        h0 = hid_ref[layer].astype(jnp.float32)                          # carry from prev chunk

        def step(t, h, whh=whh, bhn=bhn, is_last=is_last):
            row = pl.multiple_of(t * Bt, Bt)                             # 8-aligned
            gi_t = gi_scr[pl.ds(row, Bt), :]                             # (Bt, 3Hp)
            gh = jnp.dot(h.astype(jnp.bfloat16), whh,
                         preferred_element_type=jnp.float32)             # (Bt, 3Hp)
            # PyTorch gate packing [r | z | n]; each gate block sits on a 128-lane
            # boundary, so these slices are lane-aligned (no relayouts).
            r = jax.nn.sigmoid(gi_t[:, 0 * Hp:1 * Hp] + gh[:, 0 * Hp:1 * Hp])
            z = jax.nn.sigmoid(gi_t[:, 1 * Hp:2 * Hp] + gh[:, 1 * Hp:2 * Hp])
            n = jnp.tanh(gi_t[:, 2 * Hp:3 * Hp] + r * (gh[:, 2 * Hp:3 * Hp] + bhn))
            h_new = (1.0 - z) * n + z * h
            if is_last:
                out_ref[t] = h_new.astype(out_ref.dtype)                 # 128-lane dense store
            else:
                act_scr[pl.ds(row, Bt), :] = h_new
            return h_new

        h_final = jax.lax.fori_loop(0, Tc, step, h0, unroll=unroll)
        hid_ref[layer] = h_final.astype(hid_ref.dtype)

        if not is_last:
            layer_in = act_scr[...]                                      # f32 inter-layer carry


@functools.partial(jax.jit,
                   static_argnames=("hidden_size", "time_chunk_target", "batch_tiles"))
def encoder_rnn_forward(x, packed_params, *, hidden_size,
                        time_chunk_target=64, batch_tiles=1):
    """EncoderRNN.forward: returns (outputs, hidden) for a multi-layer GRU.

    x: (seq_len, batch, input_size); packed_params: per-layer pre-packed weights.
    batch_tiles=2 shards the padded batch across the two v7x TensorCores.
    """
    S, B, I = x.shape
    L = len(packed_params)
    Hp = packed_params[0][2].shape[0]            # whh_t: (Hp, 3Hp)
    Bp = _round_up(B, _SUBLANE)

    # Optional megacore batch sharding (v7x): split padded batch into tiles of >=8.
    if batch_tiles > 1 and Bp % (batch_tiles * _SUBLANE) == 0:
        n_btiles = batch_tiles
    else:
        n_btiles = 1
    Bt = Bp // n_btiles

    Tc = _largest_divisor_leq(S, max(1, time_chunk_target))
    n_chunks = S // Tc
    unroll = Tc if Tc <= 8 else 4

    x_p = jnp.pad(x, ((0, 0), (0, Bp - B), (0, 0)))          # (S, Bp, I)

    flat_params = []
    for layer_params in packed_params:
        flat_params.extend(layer_params)

    # Weights/biases: whole-array resident in VMEM (single buffer, no
    # double-buffering — their contents never change across grid steps).
    weight_spec = pl.BlockSpec(memory_space=pltpu.MemorySpace.VMEM)

    in_specs = [pl.BlockSpec((Tc, Bt, I), lambda b, c: (c, b, 0))]
    in_specs += [weight_spec] * len(flat_params)
    out_specs = [
        pl.BlockSpec((Tc, Bt, Hp), lambda b, c: (c, b, 0)),
        # Hidden-state carry: block index constant along the chunk axis ->
        # resident VMEM accumulator, written back when the batch tile changes.
        pl.BlockSpec((L, Bt, Hp), lambda b, c: (0, b, 0)),
    ]

    grid_spec = pltpu.PrefetchScalarGridSpec(
        num_scalar_prefetch=0,
        grid=(n_btiles, n_chunks),
        in_specs=in_specs,
        out_specs=out_specs,
        scratch_shapes=[
            pltpu.VMEM((Tc * Bt, 3 * Hp), jnp.float32),   # hoisted gi for current chunk/layer
            pltpu.VMEM((Tc * Bt, Hp), jnp.float32),       # inter-layer activations
        ],
    )

    # VMEM budget from the actual footprint (chunk-sized pipelined buffers +
    # resident hidden carry + single-buffered weights + scratch) with headroom,
    # capped so it also fits v7x's 64 MiB physical VMEM.
    f32 = 4
    param_bytes = sum(int(p.size) * p.dtype.itemsize for p in flat_params)
    buf_bytes = (2 * Tc * Bt * I * f32            # x chunk, double-buffered
                 + 2 * Tc * Bt * Hp * f32          # out chunk, double-buffered
                 + 2 * L * Bt * Hp * f32           # resident hidden block (+slack)
                 + Tc * Bt * 4 * Hp * f32)         # gi + act scratch
    vmem_limit = int(1.25 * (param_bytes + buf_bytes)) + (4 << 20)
    vmem_limit = min(max(vmem_limit, 16 << 20), 64 << 20)

    flops = 0
    for layer in range(L):
        in_dim = I if layer == 0 else Hp
        flops += 2 * S * Bp * (in_dim + Hp) * 3 * Hp
    cost = pl.CostEstimate(
        flops=int(flops),
        transcendentals=int(3 * S * Bp * Hp * L),
        bytes_accessed=int(S * Bp * I * f32 + param_bytes
                           + S * Bp * Hp * f32 + L * Bp * Hp * f32),
    )

    kernel = functools.partial(
        _fused_gru_kernel, num_layers=L, t_chunk=Tc, b_tile=Bt, h_pad=Hp, unroll=unroll)

    out3d, hid_p = pl.pallas_call(
        kernel,
        out_shape=(
            jax.ShapeDtypeStruct((S, Bp, Hp), x.dtype),
            jax.ShapeDtypeStruct((L, Bp, Hp), x.dtype),
        ),
        grid_spec=grid_spec,
        compiler_params=pltpu.CompilerParams(
            dimension_semantics=("parallel", "arbitrary"),
            vmem_limit_bytes=vmem_limit,
        ),
        cost_estimate=cost,
    )(x_p, *flat_params)

    outputs = out3d[:, :B, :hidden_size]
    hidden = hid_p[:, :B, :hidden_size]
    return outputs, hidden


def init_gru_params(key, input_size, hidden_size, num_layers, dtype=jnp.float32):
    """Deterministic init matching nn.GRU shapes: uniform(-1/sqrt(H), 1/sqrt(H))."""
    params = []
    bound = 1.0 / jnp.sqrt(jnp.float32(hidden_size))
    for layer in range(num_layers):
        in_dim = input_size if layer == 0 else hidden_size
        key, k1, k2, k3, k4 = jax.random.split(key, 5)
        w_ih = jax.random.uniform(k1, (3 * hidden_size, in_dim), dtype, -bound, bound)
        w_hh = jax.random.uniform(k2, (3 * hidden_size, hidden_size), dtype, -bound, bound)
        b_ih = jax.random.uniform(k3, (3 * hidden_size,), dtype, -bound, bound)
        b_hh = jax.random.uniform(k4, (3 * hidden_size,), dtype, -bound, bound)
        params.append((w_ih, w_hh, b_ih, b_hh))
    return params


def pack_gru_params(params, lane=_LANE, mxu_dtype=jnp.bfloat16):
    """Pre-pack PyTorch-layout GRU weights for the kernel (done once, not per call).

    Transposes to (in, 3Hp)/(Hp, 3Hp), pads each gate block's hidden dim to a
    128-lane boundary (zero padding is exactly closed under the GRU update),
    folds b_hr/b_hz into b_ih (only b_hn must stay inside r*(.)), and stores the
    matmul weights in bf16 for MXU throughput (biases stay f32).
    """
    packed = []
    for layer, (w_ih, w_hh, b_ih, b_hh) in enumerate(params):
        three_h, in_dim = w_ih.shape
        H = three_h // 3
        Hp = _round_up(H, lane)
        in_p = in_dim if layer == 0 else Hp
        wih_t = jnp.zeros((in_p, 3 * Hp), jnp.float32)
        whh_t = jnp.zeros((Hp, 3 * Hp), jnp.float32)
        bih = jnp.zeros((1, 3 * Hp), jnp.float32)
        bhn = jnp.zeros((1, Hp), jnp.float32)
        for g in range(3):                               # gates packed [r | z | n]
            wih_t = wih_t.at[:in_dim, g * Hp:g * Hp + H].set(
                w_ih[g * H:(g + 1) * H, :].T.astype(jnp.float32))
            whh_t = whh_t.at[:H, g * Hp:g * Hp + H].set(
                w_hh[g * H:(g + 1) * H, :].T.astype(jnp.float32))
            b = b_ih[g * H:(g + 1) * H].astype(jnp.float32)
            if g < 2:                                    # fold b_hr / b_hz into gi bias
                b = b + b_hh[g * H:(g + 1) * H].astype(jnp.float32)
            bih = bih.at[0, g * Hp:g * Hp + H].set(b)
        bhn = bhn.at[0, :H].set(b_hh[2 * H:3 * H].astype(jnp.float32))
        packed.append((wih_t.astype(mxu_dtype), bih, whh_t.astype(mxu_dtype), bhn))
    return packed


def _reference_gru(x, params):
    """Pure-JAX f32 reference implementing PyTorch GRU equations (sanity check)."""
    layer_in = x
    finals = []
    for (w_ih, w_hh, b_ih, b_hh) in params:
        H = w_hh.shape[1]
        S, B, _ = layer_in.shape
        h = jnp.zeros((B, H), jnp.float32)

        def step(h, x_t):
            gi = x_t @ w_ih.T + b_ih
            gh = h @ w_hh.T + b_hh
            r = jax.nn.sigmoid(gi[:, :H] + gh[:, :H])
            z = jax.nn.sigmoid(gi[:, H:2 * H] + gh[:, H:2 * H])
            n = jnp.tanh(gi[:, 2 * H:] + r * gh[:, 2 * H:])
            h_new = (1.0 - z) * n + z * h
            return h_new, h_new

        h_final, outs = jax.lax.scan(step, h, layer_in.astype(jnp.float32))
        finals.append(h_final)
        layer_in = outs
    return layer_in, jnp.stack(finals, axis=0)


if __name__ == "__main__":
    # Small shapes consistent with the module's forward.
    seq_len, batch = 8, 16
    input_size, hidden_size, num_layers, dropout = 16, 32, 2, 0.1

    key = jax.random.PRNGKey(0)
    key, kx, kp = jax.random.split(key, 3)
    x = jax.random.normal(kx, (seq_len, batch, input_size), jnp.float32)
    params = init_gru_params(kp, input_size, hidden_size, num_layers)
    packed = pack_gru_params(params)

    ref_out, ref_hid = _reference_gru(x, params)
    # bf16 MXU operands -> relaxed tolerance vs. the f32 reference.
    tol = dict(atol=3e-2, rtol=3e-2)

    # 1) Default config (one big time chunk, single batch tile).
    outputs, hidden = encoder_rnn_forward(x, packed, hidden_size=hidden_size)
    outputs = jax.block_until_ready(outputs)
    hidden = jax.block_until_ready(hidden)
    assert outputs.shape == (seq_len, batch, hidden_size)
    assert hidden.shape == (num_layers, batch, hidden_size)
    assert jnp.allclose(outputs, ref_out, **tol), float(jnp.max(jnp.abs(outputs - ref_out)))
    assert jnp.allclose(hidden, ref_hid, **tol), float(jnp.max(jnp.abs(hidden - ref_hid)))

    # 2) Time-chunked + batch-tiled config (exercises the cross-chunk hidden-state
    #    carry and the megacore batch-tile axis).
    outputs2, hidden2 = encoder_rnn_forward(
        x, packed, hidden_size=hidden_size, time_chunk_target=2, batch_tiles=2)
    outputs2 = jax.block_until_ready(outputs2)
    hidden2 = jax.block_until_ready(hidden2)
    assert jnp.allclose(outputs2, ref_out, **tol), float(jnp.max(jnp.abs(outputs2 - ref_out)))
    assert jnp.allclose(hidden2, ref_hid, **tol), float(jnp.max(jnp.abs(hidden2 - ref_hid)))

    print("KERNEL_OK")
</pallas_src>

<mosaic_0001>
module attributes {stable_mosaic.version = 11 : i64} {
  func.func @_fused_gru_kernel(%arg0: i32, %arg1: i32, %arg2: memref<8x16x16xf32, #tpu.memory_space<vmem>>, %arg3: memref<16x384xbf16, #tpu.memory_space<vmem>>, %arg4: memref<1x384xf32, #tpu.memory_space<vmem>>, %arg5: memref<128x384xbf16, #tpu.memory_space<vmem>>, %arg6: memref<1x128xf32, #tpu.memory_space<vmem>>, %arg7: memref<128x384xbf16, #tpu.memory_space<vmem>>, %arg8: memref<1x384xf32, #tpu.memory_space<vmem>>, %arg9: memref<128x384xbf16, #tpu.memory_space<vmem>>, %arg10: memref<1x128xf32, #tpu.memory_space<vmem>>, %arg11: memref<8x16x128xf32, #tpu.memory_space<vmem>>, %arg12: memref<2x16x128xf32, #tpu.memory_space<vmem>>, %arg13: memref<128x384xf32, #tpu.memory_space<vmem>>, %arg14: memref<128x128xf32, #tpu.memory_space<vmem>>) attributes {dimension_semantics = [#tpu.dimension_semantics<parallel>, #tpu.dimension_semantics<arbitrary>], iteration_bounds = array<i64: 1, 1>, scalar_prefetch = 0 : i64, scratch_operands = 2 : i64, tpu.core_type = #tpu.core_type<tc>, window_params = [{transform_indices = @transform_0, window_bounds = array<i64: 8, 16, 16>}, {pipeline_mode = #tpu.pipeline_mode<synchronous>, transform_indices = @transform_1, window_bounds = array<i64: 16, 384>}, {pipeline_mode = #tpu.pipeline_mode<synchronous>, transform_indices = @transform_2, window_bounds = array<i64: 1, 384>}, {pipeline_mode = #tpu.pipeline_mode<synchronous>, transform_indices = @transform_3, window_bounds = array<i64: 128, 384>}, {pipeline_mode = #tpu.pipeline_mode<synchronous>, transform_indices = @transform_4, window_bounds = array<i64: 1, 128>}, {pipeline_mode = #tpu.pipeline_mode<synchronous>, transform_indices = @transform_5, window_bounds = array<i64: 128, 384>}, {pipeline_mode = #tpu.pipeline_mode<synchronous>, transform_indices = @transform_6, window_bounds = array<i64: 1, 384>}, {pipeline_mode = #tpu.pipeline_mode<synchronous>, transform_indices = @transform_7, window_bounds = array<i64: 128, 384>}, {pipeline_mode = #tpu.pipeline_mode<synchronous>, transform_indices = @transform_8, window_bounds = array<i64: 1, 128>}, {transform_indices = @transform_9, window_bounds = array<i64: 8, 16, 128>}, {transform_indices = @transform_10, window_bounds = array<i64: 2, 16, 128>}]} {
    %c0_i32 = arith.constant 0 : i32
    %0 = arith.cmpi eq, %arg1, %c0_i32 : i32
    %1 = arith.extui %0 : i1 to i32
    %c0_i32_0 = arith.constant 0 : i32
    %2 = arith.cmpi ne, %1, %c0_i32_0 : i32
    scf.if %2 {
      %cst_166 = arith.constant 0.000000e+00 : f32
      %614 = vector.broadcast %cst_166 : f32 to vector<2x16x128xf32>
      %c0_167 = arith.constant 0 : index
      %c0_168 = arith.constant 0 : index
      %c0_169 = arith.constant 0 : index
      %615 = vector.load %arg12[%c0_167, %c0_168, %c0_169] : memref<2x16x128xf32, #tpu.memory_space<vmem>>, vector<2x16x128xf32>
      tpu.vector_store %arg12[%c0_167, %c0_168, %c0_169], %614 {strides = array<i32>} : memref<2x16x128xf32, #tpu.memory_space<vmem>>, vector<2x16x128xf32>,
    } else {
    }
    %c0 = arith.constant 0 : index
    %c0_1 = arith.constant 0 : index
    %c0_2 = arith.constant 0 : index
    %3 = vector.load %arg2[%c0, %c0_1, %c0_2] : memref<8x16x16xf32, #tpu.memory_space<vmem>>, vector<8x16x16xf32>
    %4 = vector.shape_cast %3 : vector<8x16x16xf32> to vector<128x16xf32>
    %5 = arith.truncf %4 : vector<128x16xf32> to vector<128x16xbf16>
    %c0_3 = arith.constant 0 : index
    %c0_4 = arith.constant 0 : index
    %6 = vector.load %arg3[%c0_3, %c0_4] : memref<16x384xbf16, #tpu.memory_space<vmem>>, vector<16x384xbf16>
    %cst = arith.constant dense<0.000000e+00> : vector<128x384xf32>
    %7 = tpu.matmul %5, %6, %cst {dimension_numbers = #tpu.dot_dimension_numbers<[1], [0], [0], [1], [0, 0, 1, 1], [], []>} : vector<128x16xbf16>, vector<16x384xbf16>, vector<128x384xf32> -> vector<128x384xf32>
    %c0_5 = arith.constant 0 : index
    %c0_6 = arith.constant 0 : index
    %8 = vector.load %arg4[%c0_5, %c0_6] : memref<1x384xf32, #tpu.memory_space<vmem>>, vector<1x384xf32>
    %9 = vector.broadcast %8 : vector<1x384xf32> to vector<128x384xf32>
    %10 = arith.addf %7, %9 : vector<128x384xf32>
    %c0_7 = arith.constant 0 : index
    %c0_8 = arith.constant 0 : index
    %11 = vector.load %arg13[%c0_7, %c0_8] : memref<128x384xf32, #tpu.memory_space<vmem>>, vector<128x384xf32>
    tpu.vector_store %arg13[%c0_7, %c0_8], %10 {strides = array<i32>} : memref<128x384xf32, #tpu.memory_space<vmem>>, vector<128x384xf32>,
    %c0_9 = arith.constant 0 : index
    %c0_10 = arith.constant 0 : index
    %12 = vector.load %arg5[%c0_9, %c0_10] : memref<128x384xbf16, #tpu.memory_space<vmem>>, vector<128x384xbf16>
    %c0_11 = arith.constant 0 : index
    %c0_12 = arith.constant 0 : index
    %13 = vector.load %arg6[%c0_11, %c0_12] : memref<1x128xf32, #tpu.memory_space<vmem>>, vector<1x128xf32>
    %14 = vector.shape_cast %13 : vector<1x128xf32> to vector<1x128xf32>
    %15 = vector.broadcast %14 : vector<1x128xf32> to vector<16x128xf32>
    %c0_13 = arith.constant 0 : index
    %c0_14 = arith.constant 0 : index
    %c0_15 = arith.constant 0 : index
    %16 = vector.load %arg12[%c0_13, %c0_14, %c0_15] : memref<2x16x128xf32, #tpu.memory_space<vmem>>, vector<1x16x128xf32>
    %17 = vector.shape_cast %16 : vector<1x16x128xf32> to vector<16x128xf32>
    %c0_i32_16 = arith.constant 0 : i32
    %c16_i32 = arith.constant 16 : i32
    %18 = arith.muli %c0_i32_16, %c16_i32 : i32
    %19 = tpu.assume_multiple %18, 16 : i32
    %20 = arith.index_cast %19 : i32 to index
    %c0_17 = arith.constant 0 : index
    %21 = vector.load %arg13[%20, %c0_17] : memref<128x384xf32, #tpu.memory_space<vmem>>, vector<16x384xf32>
    %22 = arith.truncf %17 : vector<16x128xf32> to vector<16x128xbf16>
    %cst_18 = arith.constant dense<0.000000e+00> : vector<16x384xf32>
    %23 = tpu.matmul %22, %12, %cst_18 {dimension_numbers = #tpu.dot_dimension_numbers<[1], [0], [0], [1], [0, 0, 1, 1], [], []>} : vector<16x128xbf16>, vector<128x384xbf16>, vector<16x384xf32> -> vector<16x384xf32>
    %24 = vector.extract_strided_slice %21 {offsets = [0, 0], sizes = [16, 128], strides = [1, 1]} : vector<16x384xf32> to vector<16x128xf32>
    %25 = vector.extract_strided_slice %23 {offsets = [0, 0], sizes = [16, 128], strides = [1, 1]} : vector<16x384xf32> to vector<16x128xf32>
    %26 = arith.addf %24, %25 : vector<16x128xf32>
    %27 = arith.negf %26 : vector<16x128xf32>
    %28 = math.exp %27 : vector<16x128xf32>
    %cst_19 = arith.constant 1.000000e+00 : f32
    %29 = vector.broadcast %cst_19 : f32 to vector<16x128xf32>
    %30 = arith.addf %29, %28 : vector<16x128xf32>
    %31 = arith.divf %29, %30 : vector<16x128xf32>
    %32 = vector.extract_strided_slice %21 {offsets = [0, 128], sizes = [16, 128], strides = [1, 1]} : vector<16x384xf32> to vector<16x128xf32>
    %33 = vector.extract_strided_slice %23 {offsets = [0, 128], sizes = [16, 128], strides = [1, 1]} : vector<16x384xf32> to vector<16x128xf32>
    %34 = arith.addf %32, %33 : vector<16x128xf32>
    %35 = arith.negf %34 : vector<16x128xf32>
    %36 = math.exp %35 : vector<16x128xf32>
    %cst_20 = arith.constant 1.000000e+00 : f32
    %37 = vector.broadcast %cst_20 : f32 to vector<16x128xf32>
    %38 = arith.addf %37, %36 : vector<16x128xf32>
    %39 = arith.divf %37, %38 : vector<16x128xf32>
    %40 = vector.extract_strided_slice %21 {offsets = [0, 256], sizes = [16, 128], strides = [1, 1]} : vector<16x384xf32> to vector<16x128xf32>
    %41 = vector.extract_strided_slice %23 {offsets = [0, 256], sizes = [16, 128], strides = [1, 1]} : vector<16x384xf32> to vector<16x128xf32>
    %42 = arith.addf %41, %15 : vector<16x128xf32>
    %43 = arith.mulf %31, %42 : vector<16x128xf32>
    %44 = arith.addf %40, %43 : vector<16x128xf32>
    %45 = math.tanh %44 : vector<16x128xf32>
    %cst_21 = arith.constant 1.000000e+00 : f32
    %46 = vector.broadcast %cst_21 : f32 to vector<16x128xf32>
    %47 = arith.subf %46, %39 : vector<16x128xf32>
    %48 = arith.mulf %47, %45 : vector<16x128xf32>
    %49 = arith.mulf %39, %17 : vector<16x128xf32>
    %50 = arith.addf %48, %49 : vector<16x128xf32>
    %51 = arith.index_cast %19 : i32 to index
    %c0_22 = arith.constant 0 : index
    %52 = vector.load %arg14[%51, %c0_22] : memref<128x128xf32, #tpu.memory_space<vmem>>, vector<16x128xf32>
    tpu.vector_store %arg14[%51, %c0_22], %50 {strides = array<i32>} : memref<128x128xf32, #tpu.memory_space<vmem>>, vector<16x128xf32>,
    %c1_i32 = arith.constant 1 : i32
    %c16_i32_23 = arith.constant 16 : i32
    %53 = arith.muli %c1_i32, %c16_i32_23 : i32
    %54 = tpu.assume_multiple %53, 16 : i32
    %55 = arith.index_cast %54 : i32 to index
    %c0_24 = arith.constant 0 : index
    %56 = vector.load %arg13[%55, %c0_24] : memref<128x384xf32, #tpu.memory_space<vmem>>, vector<16x384xf32>
    %57 = arith.truncf %50 : vector<16x128xf32> to vector<16x128xbf16>
    %cst_25 = arith.constant dense<0.000000e+00> : vector<16x384xf32>
    %58 = tpu.matmul %57, %12, %cst_25 {dimension_numbers = #tpu.dot_dimension_numbers<[1], [0], [0], [1], [0, 0, 1, 1], [], []>} : vector<16x128xbf16>, vector<128x384xbf16>, vector<16x384xf32> -> vector<16x384xf32>
    %59 = vector.extract_strided_slice %56 {offsets = [0, 0], sizes = [16, 128], strides = [1, 1]} : vector<16x384xf32> to vector<16x128xf32>
    %60 = vector.extract_strided_slice %58 {offsets = [0, 0], sizes = [16, 128], strides = [1, 1]} : vector<16x384xf32> to vector<16x128xf32>
    %61 = arith.addf %59, %60 : vector<16x128xf32>
    %62 = arith.negf %61 : vector<16x128xf32>
    %63 = math.exp %62 : vector<16x128xf32>
    %cst_26 = arith.constant 1.000000e+00 : f32
    %64 = vector.broadcast %cst_26 : f32 to vector<16x128xf32>
    %65 = arith.addf %64, %63 : vector<16x128xf32>
    %66 = arith.divf %64, %65 : vector<16x128xf32>
    %67 = vector.extract_strided_slice %56 {offsets = [0, 128], sizes = [16, 128], strides = [1, 1]} : vector<16x384xf32> to vector<16x128xf32>
    %68 = vector.extract_strided_slice %58 {offsets = [0, 128], sizes = [16, 128], strides = [1, 1]} : vector<16x384xf32> to vector<16x128xf32>
    %69 = arith.addf %67, %68 : vector<16x128xf32>
    %70 = arith.negf %69 : vector<16x128xf32>
    %71 = math.exp %70 : vector<16x128xf32>
    %cst_27 = arith.constant 1.000000e+00 : f32
    %72 = vector.broadcast %cst_27 : f32 to vector<16x128xf32>
    %73 = arith.addf %72, %71 : vector<16x128xf32>
    %74 = arith.divf %72, %73 : vector<16x128xf32>
    %75 = vector.extract_strided_slice %56 {offsets = [0, 256], sizes = [16, 128], strides = [1, 1]} : vector<16x384xf32> to vector<16x128xf32>
    %76 = vector.extract_strided_slice %58 {offsets = [0, 256], sizes = [16, 128], strides = [1, 1]} : vector<16x384xf32> to vector<16x128xf32>
    %77 = arith.addf %76, %15 : vector<16x128xf32>
    %78 = arith.mulf %66, %77 : vector<16x128xf32>
    %79 = arith.addf %75, %78 : vector<16x128xf32>
    %80 = math.tanh %79 : vector<16x128xf32>
    %cst_28 = arith.constant 1.000000e+00 : f32
    %81 = vector.broadcast %cst_28 : f32 to vector<16x128xf32>
    %82 = arith.subf %81, %74 : vector<16x128xf32>
    %83 = arith.mulf %82, %80 : vector<16x128xf32>
    %84 = arith.mulf %74, %50 : vector<16x128xf32>
    %85 = arith.addf %83, %84 : vector<16x128xf32>
    %86 = arith.index_cast %54 : i32 to index
    %c0_29 = arith.constant 0 : index
    %87 = vector.load %arg14[%86, %c0_29] : memref<128x128xf32, #tpu.memory_space<vmem>>, vector<16x128xf32>
    tpu.vector_store %arg14[%86, %c0_29], %85 {strides = array<i32>} : memref<128x128xf32, #tpu.memory_space<vmem>>, vector<16x128xf32>,
    %c2_i32 = arith.constant 2 : i32
    %c16_i32_30 = arith.constant 16 : i32
    %88 = arith.muli %c2_i32, %c16_i32_30 : i32
    %89 = tpu.assume_multiple %88, 16 : i32
    %90 = arith.index_cast %89 : i32 to index
    %c0_31 = arith.constant 0 : index
    %91 = vector.load %arg13[%90, %c0_31] : memref<128x384xf32, #tpu.memory_space<vmem>>, vector<16x384xf32>
    %92 = arith.truncf %85 : vector<16x128xf32> to vector<16x128xbf16>
    %cst_32 = arith.constant dense<0.000000e+00> : vector<16x384xf32>
    %93 = tpu.matmul %92, %12, %cst_32 {dimension_numbers = #tpu.dot_dimension_numbers<[1], [0], [0], [1], [0, 0, 1, 1], [], []>} : vector<16x128xbf16>, vector<128x384xbf16>, vector<16x384xf32> -> vector<16x384xf32>
    %94 = vector.extract_strided_slice %91 {offsets = [0, 0], sizes = [16, 128], strides = [1, 1]} : vector<16x384xf32> to vector<16x128xf32>
    %95 = vector.extract_strided_slice %93 {offsets = [0, 0], sizes = [16, 128], strides = [1, 1]} : vector<16x384xf32> to vector<16x128xf32>
    %96 = arith.addf %94, %95 : vector<16x128xf32>
    %97 = arith.negf %96 : vector<16x128xf32>
    %98 = math.exp %97 : vector<16x128xf32>
    %cst_33 = arith.constant 1.000000e+00 : f32
    %99 = vector.broadcast %cst_33 : f32 to vector<16x128xf32>
    %100 = arith.addf %99, %98 : vector<16x128xf32>
    %101 = arith.divf %99, %100 : vector<16x128xf32>
    %102 = vector.extract_strided_slice %91 {offsets = [0, 128], sizes = [16, 128], strides = [1, 1]} : vector<16x384xf32> to vector<16x128xf32>
    %103 = vector.extract_strided_slice %93 {offsets = [0, 128], sizes = [16, 128], strides = [1, 1]} : vector<16x384xf32> to vector<16x128xf32>
    %104 = arith.addf %102, %103 : vector<16x128xf32>
    %105 = arith.negf %104 : vector<16x128xf32>
    %106 = math.exp %105 : vector<16x128xf32>
    %cst_34 = arith.constant 1.000000e+00 : f32
    %107 = vector.broadcast %cst_34 : f32 to vector<16x128xf32>
    %108 = arith.addf %107, %106 : vector<16x128xf32>
    %109 = arith.divf %107, %108 : vector<16x128xf32>
    %110 = vector.extract_strided_slice %91 {offsets = [0, 256], sizes = [16, 128], strides = [1, 1]} : vector<16x384xf32> to vector<16x128xf32>
    %111 = vector.extract_strided_slice %93 {offsets = [0, 256], sizes = [16, 128], strides = [1, 1]} : vector<16x384xf32> to vector<16x128xf32>
    %112 = arith.addf %111, %15 : vector<16x128xf32>
    %113 = arith.mulf %101, %112 : vector<16x128xf32>
    %114 = arith.addf %110, %113 : vector<16x128xf32>
    %115 = math.tanh %114 : vector<16x128xf32>
    %cst_35 = arith.constant 1.000000e+00 : f32
    %116 = vector.broadcast %cst_35 : f32 to vector<16x128xf32>
    %117 = arith.subf %116, %109 : vector<16x128xf32>
    %118 = arith.mulf %117, %115 : vector<16x128xf32>
    %119 = arith.mulf %109, %85 : vector<16x128xf32>
    %120 = arith.addf %118, %119 : vector<16x128xf32>
    %121 = arith.index_cast %89 : i32 to index
    %c0_36 = arith.constant 0 : index
    %122 = vector.load %arg14[%121, %c0_36] : memref<128x128xf32, #tpu.memory_space<vmem>>, vector<16x128xf32>
    tpu.vector_store %arg14[%121, %c0_36], %120 {strides = array<i32>} : memref<128x128xf32, #tpu.memory_space<vmem>>, vector<16x128xf32>,
    %c3_i32 = arith.constant 3 : i32
    %c16_i32_37 = arith.constant 16 : i32
    %123 = arith.muli %c3_i32, %c16_i32_37 : i32
    %124 = tpu.assume_multiple %123, 16 : i32
    %125 = arith.index_cast %124 : i32 to index
    %c0_38 = arith.constant 0 : index
    %126 = vector.load %arg13[%125, %c0_38] : memref<128x384xf32, #tpu.memory_space<vmem>>, vector<16x384xf32>
    %127 = arith.truncf %120 : vector<16x128xf32> to vector<16x128xbf16>
    %cst_39 = arith.constant dense<0.000000e+00> : vector<16x384xf32>
    %128 = tpu.matmul %127, %12, %cst_39 {dimension_numbers = #tpu.dot_dimension_numbers<[1], [0], [0], [1], [0, 0, 1, 1], [], []>} : vector<16x128xbf16>, vector<128x384xbf16>, vector<16x384xf32> -> vector<16x384xf32>
    %129 = vector.extract_strided_slice %126 {offsets = [0, 0], sizes = [16, 128], strides = [1, 1]} : vector<16x384xf32> to vector<16x128xf32>
    %130 = vector.extract_strided_slice %128 {offsets = [0, 0], sizes = [16, 128], strides = [1, 1]} : vector<16x384xf32> to vector<16x128xf32>
    %131 = arith.addf %129, %130 : vector<16x128xf32>
    %132 = arith.negf %131 : vector<16x128xf32>
    %133 = math.exp %132 : vector<16x128xf32>
    %cst_40 = arith.constant 1.000000e+00 : f32
    %134 = vector.broadcast %cst_40 : f32 to vector<16x128xf32>
    %135 = arith.addf %134, %133 : vector<16x128xf32>
    %136 = arith.divf %134, %135 : vector<16x128xf32>
    %137 = vector.extract_strided_slice %126 {offsets = [0, 128], sizes = [16, 128], strides = [1, 1]} : vector<16x384xf32> to vector<16x128xf32>
    %138 = vector.extract_strided_slice %128 {offsets = [0, 128], sizes = [16, 128], strides = [1, 1]} : vector<16x384xf32> to vector<16x128xf32>
    %139 = arith.addf %137, %138 : vector<16x128xf32>
    %140 = arith.negf %139 : vector<16x128xf32>
    %141 = math.exp %140 : vector<16x128xf32>
    %cst_41 = arith.constant 1.000000e+00 : f32
    %142 = vector.broadcast %cst_41 : f32 to vector<16x128xf32>
    %143 = arith.addf %142, %141 : vector<16x128xf32>
    %144 = arith.divf %142, %143 : vector<16x128xf32>
    %145 = vector.extract_strided_slice %126 {offsets = [0, 256], sizes = [16, 128], strides = [1, 1]} : vector<16x384xf32> to vector<16x128xf32>
    %146 = vector.extract_strided_slice %128 {offsets = [0, 256], sizes = [16, 128], strides = [1, 1]} : vector<16x384xf32> to vector<16x128xf32>
    %147 = arith.addf %146, %15 : vector<16x128xf32>
    %148 = arith.mulf %136, %147 : vector<16x128xf32>
    %149 = arith.addf %145, %148 : vector<16x128xf32>
    %150 = math.tanh %149 : vector<16x128xf32>
    %cst_42 = arith.constant 1.000000e+00 : f32
    %151 = vector.broadcast %cst_42 : f32 to vector<16x128xf32>
    %152 = arith.subf %151, %144 : vector<16x128xf32>
    %153 = arith.mulf %152, %150 : vector<16x128xf32>
    %154 = arith.mulf %144, %120 : vector<16x128xf32>
    %155 = arith.addf %153, %154 : vector<16x128xf32>
    %156 = arith.index_cast %124 : i32 to index
    %c0_43 = arith.constant 0 : index
    %157 = vector.load %arg14[%156, %c0_43] : memref<128x128xf32, #tpu.memory_space<vmem>>, vector<16x128xf32>
    tpu.vector_store %arg14[%156, %c0_43], %155 {strides = array<i32>} : memref<128x128xf32, #tpu.memory_space<vmem>>, vector<16x128xf32>,
    %c4_i32 = arith.constant 4 : i32
    %c16_i32_44 = arith.constant 16 : i32
    %158 = arith.muli %c4_i32, %c16_i32_44 : i32
    %159 = tpu.assume_multiple %158, 16 : i32
    %160 = arith.index_cast %159 : i32 to index
    %c0_45 = arith.constant 0 : index
    %161 = vector.load %arg13[%160, %c0_45] : memref<128x384xf32, #tpu.memory_space<vmem>>, vector<16x384xf32>
    %162 = arith.truncf %155 : vector<16x128xf32> to vector<16x128xbf16>
    %cst_46 = arith.constant dense<0.000000e+00> : vector<16x384xf32>
    %163 = tpu.matmul %162, %12, %cst_46 {dimension_numbers = #tpu.dot_dimension_numbers<[1], [0], [0], [1], [0, 0, 1, 1], [], []>} : vector<16x128xbf16>, vector<128x384xbf16>, vector<16x384xf32> -> vector<16x384xf32>
    %164 = vector.extract_strided_slice %161 {offsets = [0, 0], sizes = [16, 128], strides = [1, 1]} : vector<16x384xf32> to vector<16x128xf32>
    %165 = vector.extract_strided_slice %163 {offsets = [0, 0], sizes = [16, 128], strides = [1, 1]} : vector<16x384xf32> to vector<16x128xf32>
    %166 = arith.addf %164, %165 : vector<16x128xf32>
    %167 = arith.negf %166 : vector<16x128xf32>
    %168 = math.exp %167 : vector<16x128xf32>
    %cst_47 = arith.constant 1.000000e+00 : f32
    %169 = vector.broadcast %cst_47 : f32 to vector<16x128xf32>
    %170 = arith.addf %169, %168 : vector<16x128xf32>
    %171 = arith.divf %169, %170 : vector<16x128xf32>
    %172 = vector.extract_strided_slice %161 {offsets = [0, 128], sizes = [16, 128], strides = [1, 1]} : vector<16x384xf32> to vector<16x128xf32>
    %173 = vector.extract_strided_slice %163 {offsets = [0, 128], sizes = [16, 128], strides = [1, 1]} : vector<16x384xf32> to vector<16x128xf32>
    %174 = arith.addf %172, %173 : vector<16x128xf32>
    %175 = arith.negf %174 : vector<16x128xf32>
    %176 = math.exp %175 : vector<16x128xf32>
    %cst_48 = arith.constant 1.000000e+00 : f32
    %177 = vector.broadcast %cst_48 : f32 to vector<16x128xf32>
    %178 = arith.addf %177, %176 : vector<16x128xf32>
    %179 = arith.divf %177, %178 : vector<16x128xf32>
    %180 = vector.extract_strided_slice %161 {offsets = [0, 256], sizes = [16, 128], strides = [1, 1]} : vector<16x384xf32> to vector<16x128xf32>
    %181 = vector.extract_strided_slice %163 {offsets = [0, 256], sizes = [16, 128], strides = [1, 1]} : vector<16x384xf32> to vector<16x128xf32>
    %182 = arith.addf %181, %15 : vector<16x128xf32>
    %183 = arith.mulf %171, %182 : vector<16x128xf32>
    %184 = arith.addf %180, %183 : vector<16x128xf32>
    %185 = math.tanh %184 : vector<16x128xf32>
    %cst_49 = arith.constant 1.000000e+00 : f32
    %186 = vector.broadcast %cst_49 : f32 to vector<16x128xf32>
    %187 = arith.subf %186, %179 : vector<16x128xf32>
    %188 = arith.mulf %187, %185 : vector<16x128xf32>
    %189 = arith.mulf %179, %155 : vector<16x128xf32>
    %190 = arith.addf %188, %189 : vector<16x128xf32>
    %191 = arith.index_cast %159 : i32 to index
    %c0_50 = arith.constant 0 : index
    %192 = vector.load %arg14[%191, %c0_50] : memref<128x128xf32, #tpu.memory_space<vmem>>, vector<16x128xf32>
    tpu.vector_store %arg14[%191, %c0_50], %190 {strides = array<i32>} : memref<128x128xf32, #tpu.memory_space<vmem>>, vector<16x128xf32>,
    %c5_i32 = arith.constant 5 : i32
    %c16_i32_51 = arith.constant 16 : i32
    %193 = arith.muli %c5_i32, %c16_i32_51 : i32
    %194 = tpu.assume_multiple %193, 16 : i32
    %195 = arith.index_cast %194 : i32 to index
    %c0_52 = arith.constant 0 : index
    %196 = vector.load %arg13[%195, %c0_52] : memref<128x384xf32, #tpu.memory_space<vmem>>, vector<16x384xf32>
    %197 = arith.truncf %190 : vector<16x128xf32> to vector<16x128xbf16>
    %cst_53 = arith.constant dense<0.000000e+00> : vector<16x384xf32>
    %198 = tpu.matmul %197, %12, %cst_53 {dimension_numbers = #tpu.dot_dimension_numbers<[1], [0], [0], [1], [0, 0, 1, 1], [], []>} : vector<16x128xbf16>, vector<128x384xbf16>, vector<16x384xf32> -> vector<16x384xf32>
    %199 = vector.extract_strided_slice %196 {offsets = [0, 0], sizes = [16, 128], strides = [1, 1]} : vector<16x384xf32> to vector<16x128xf32>
    %200 = vector.extract_strided_slice %198 {offsets = [0, 0], sizes = [16, 128], strides = [1, 1]} : vector<16x384xf32> to vector<16x128xf32>
    %201 = arith.addf %199, %200 : vector<16x128xf32>
    %202 = arith.negf %201 : vector<16x128xf32>
    %203 = math.exp %202 : vector<16x128xf32>
    %cst_54 = arith.constant 1.000000e+00 : f32
    %204 = vector.broadcast %cst_54 : f32 to vector<16x128xf32>
    %205 = arith.addf %204, %203 : vector<16x128xf32>
    %206 = arith.divf %204, %205 : vector<16x128xf32>
    %207 = vector.extract_strided_slice %196 {offsets = [0, 128], sizes = [16, 128], strides = [1, 1]} : vector<16x384xf32> to vector<16x128xf32>
    %208 = vector.extract_strided_slice %198 {offsets = [0, 128], sizes = [16, 128], strides = [1, 1]} : vector<16x384xf32> to vector<16x128xf32>
    %209 = arith.addf %207, %208 : vector<16x128xf32>
    %210 = arith.negf %209 : vector<16x128xf32>
    %211 = math.exp %210 : vector<16x128xf32>
    %cst_55 = arith.constant 1.000000e+00 : f32
    %212 = vector.broadcast %cst_55 : f32 to vector<16x128xf32>
    %213 = arith.addf %212, %211 : vector<16x128xf32>
    %214 = arith.divf %212, %213 : vector<16x128xf32>
    %215 = vector.extract_strided_slice %196 {offsets = [0, 256], sizes = [16, 128], strides = [1, 1]} : vector<16x384xf32> to vector<16x128xf32>
    %216 = vector.extract_strided_slice %198 {offsets = [0, 256], sizes = [16, 128], strides = [1, 1]} : vector<16x384xf32> to vector<16x128xf32>
    %217 = arith.addf %216, %15 : vector<16x128xf32>
    %218 = arith.mulf %206, %217 : vector<16x128xf32>
    %219 = arith.addf %215, %218 : vector<16x128xf32>
    %220 = math.tanh %219 : vector<16x128xf32>
    %cst_56 = arith.constant 1.000000e+00 : f32
    %221 = vector.broadcast %cst_56 : f32 to vector<16x128xf32>
    %222 = arith.subf %221, %214 : vector<16x128xf32>
    %223 = arith.mulf %222, %220 : vector<16x128xf32>
    %224 = arith.mulf %214, %190 : vector<16x128xf32>
    %225 = arith.addf %223, %224 : vector<16x128xf32>
    %226 = arith.index_cast %194 : i32 to index
    %c0_57 = arith.constant 0 : index
    %227 = vector.load %arg14[%226, %c0_57] : memref<128x128xf32, #tpu.memory_space<vmem>>, vector<16x128xf32>
    tpu.vector_store %arg14[%226, %c0_57], %225 {strides = array<i32>} : memref<128x128xf32, #tpu.memory_space<vmem>>, vector<16x128xf32>,
    %c6_i32 = arith.constant 6 : i32
    %c16_i32_58 = arith.constant 16 : i32
    %228 = arith.muli %c6_i32, %c16_i32_58 : i32
    %229 = tpu.assume_multiple %228, 16 : i32
    %230 = arith.index_cast %229 : i32 to index
    %c0_59 = arith.constant 0 : index
    %231 = vector.load %arg13[%230, %c0_59] : memref<128x384xf32, #tpu.memory_space<vmem>>, vector<16x384xf32>
    %232 = arith.truncf %225 : vector<16x128xf32> to vector<16x128xbf16>
    %cst_60 = arith.constant dense<0.000000e+00> : vector<16x384xf32>
    %233 = tpu.matmul %232, %12, %cst_60 {dimension_numbers = #tpu.dot_dimension_numbers<[1], [0], [0], [1], [0, 0, 1, 1], [], []>} : vector<16x128xbf16>, vector<128x384xbf16>, vector<16x384xf32> -> vector<16x384xf32>
    %234 = vector.extract_strided_slice %231 {offsets = [0, 0], sizes = [16, 128], strides = [1, 1]} : vector<16x384xf32> to vector<16x128xf32>
    %235 = vector.extract_strided_slice %233 {offsets = [0, 0], sizes = [16, 128], strides = [1, 1]} : vector<16x384xf32> to vector<16x128xf32>
    %236 = arith.addf %234, %235 : vector<16x128xf32>
    %237 = arith.negf %236 : vector<16x128xf32>
    %238 = math.exp %237 : vector<16x128xf32>
    %cst_61 = arith.constant 1.000000e+00 : f32
    %239 = vector.broadcast %cst_61 : f32 to vector<16x128xf32>
    %240 = arith.addf %239, %238 : vector<16x128xf32>
    %241 = arith.divf %239, %240 : vector<16x128xf32>
    %242 = vector.extract_strided_slice %231 {offsets = [0, 128], sizes = [16, 128], strides = [1, 1]} : vector<16x384xf32> to vector<16x128xf32>
    %243 = vector.extract_strided_slice %233 {offsets = [0, 128], sizes = [16, 128], strides = [1, 1]} : vector<16x384xf32> to vector<16x128xf32>
    %244 = arith.addf %242, %243 : vector<16x128xf32>
    %245 = arith.negf %244 : vector<16x128xf32>
    %246 = math.exp %245 : vector<16x128xf32>
    %cst_62 = arith.constant 1.000000e+00 : f32
    %247 = vector.broadcast %cst_62 : f32 to vector<16x128xf32>
    %248 = arith.addf %247, %246 : vector<16x128xf32>
    %249 = arith.divf %247, %248 : vector<16x128xf32>
    %250 = vector.extract_strided_slice %231 {offsets = [0, 256], sizes = [16, 128], strides = [1, 1]} : vector<16x384xf32> to vector<16x128xf32>
    %251 = vector.extract_strided_slice %233 {offsets = [0, 256], sizes = [16, 128], strides = [1, 1]} : vector<16x384xf32> to vector<16x128xf32>
    %252 = arith.addf %251, %15 : vector<16x128xf32>
    %253 = arith.mulf %241, %252 : vector<16x128xf32>
    %254 = arith.addf %250, %253 : vector<16x128xf32>
    %255 = math.tanh %254 : vector<16x128xf32>
    %cst_63 = arith.constant 1.000000e+00 : f32
    %256 = vector.broadcast %cst_63 : f32 to vector<16x128xf32>
    %257 = arith.subf %256, %249 : vector<16x128xf32>
    %258 = arith.mulf %257, %255 : vector<16x128xf32>
    %259 = arith.mulf %249, %225 : vector<16x128xf32>
    %260 = arith.addf %258, %259 : vector<16x128xf32>
    %261 = arith.index_cast %229 : i32 to index
    %c0_64 = arith.constant 0 : index
    %262 = vector.load %arg14[%261, %c0_64] : memref<128x128xf32, #tpu.memory_space<vmem>>, vector<16x128xf32>
    tpu.vector_store %arg14[%261, %c0_64], %260 {strides = array<i32>} : memref<128x128xf32, #tpu.memory_space<vmem>>, vector<16x128xf32>,
    %c7_i32 = arith.constant 7 : i32
    %c16_i32_65 = arith.constant 16 : i32
    %263 = arith.muli %c7_i32, %c16_i32_65 : i32
    %264 = tpu.assume_multiple %263, 16 : i32
    %265 = arith.index_cast %264 : i32 to index
    %c0_66 = arith.constant 0 : index
    %266 = vector.load %arg13[%265, %c0_66] : memref<128x384xf32, #tpu.memory_space<vmem>>, vector<16x384xf32>
    %267 = arith.truncf %260 : vector<16x128xf32> to vector<16x128xbf16>
    %cst_67 = arith.constant dense<0.000000e+00> : vector<16x384xf32>
    %268 = tpu.matmul %267, %12, %cst_67 {dimension_numbers = #tpu.dot_dimension_numbers<[1], [0], [0], [1], [0, 0, 1, 1], [], []>} : vector<16x128xbf16>, vector<128x384xbf16>, vector<16x384xf32> -> vector<16x384xf32>
    %269 = vector.extract_strided_slice %266 {offsets = [0, 0], sizes = [16, 128], strides = [1, 1]} : vector<16x384xf32> to vector<16x128xf32>
    %270 = vector.extract_strided_slice %268 {offsets = [0, 0], sizes = [16, 128], strides = [1, 1]} : vector<16x384xf32> to vector<16x128xf32>
    %271 = arith.addf %269, %270 : vector<16x128xf32>
    %272 = arith.negf %271 : vector<16x128xf32>
    %273 = math.exp %272 : vector<16x128xf32>
    %cst_68 = arith.constant 1.000000e+00 : f32
    %274 = vector.broadcast %cst_68 : f32 to vector<16x128xf32>
    %275 = arith.addf %274, %273 : vector<16x128xf32>
    %276 = arith.divf %274, %275 : vector<16x128xf32>
    %277 = vector.extract_strided_slice %266 {offsets = [0, 128], sizes = [16, 128], strides = [1, 1]} : vector<16x384xf32> to vector<16x128xf32>
    %278 = vector.extract_strided_slice %268 {offsets = [0, 128], sizes = [16, 128], strides = [1, 1]} : vector<16x384xf32> to vector<16x128xf32>
    %279 = arith.addf %277, %278 : vector<16x128xf32>
    %280 = arith.negf %279 : vector<16x128xf32>
    %281 = math.exp %280 : vector<16x128xf32>
    %cst_69 = arith.constant 1.000000e+00 : f32
    %282 = vector.broadcast %cst_69 : f32 to vector<16x128xf32>
    %283 = arith.addf %282, %281 : vector<16x128xf32>
    %284 = arith.divf %282, %283 : vector<16x128xf32>
    %285 = vector.extract_strided_slice %266 {offsets = [0, 256], sizes = [16, 128], strides = [1, 1]} : vector<16x384xf32> to vector<16x128xf32>
    %286 = vector.extract_strided_slice %268 {offsets = [0, 256], sizes = [16, 128], strides = [1, 1]} : vector<16x384xf32> to vector<16x128xf32>
    %287 = arith.addf %286, %15 : vector<16x128xf32>
    %288 = arith.mulf %276, %287 : vector<16x128xf32>
    %289 = arith.addf %285, %288 : vector<16x128xf32>
    %290 = math.tanh %289 : vector<16x128xf32>
    %cst_70 = arith.constant 1.000000e+00 : f32
    %291 = vector.broadcast %cst_70 : f32 to vector<16x128xf32>
    %292 = arith.subf %291, %284 : vector<16x128xf32>
    %293 = arith.mulf %292, %290 : vector<16x128xf32>
    %294 = arith.mulf %284, %260 : vector<16x128xf32>
    %295 = arith.addf %293, %294 : vector<16x128xf32>
    %296 = arith.index_cast %264 : i32 to index
    %c0_71 = arith.constant 0 : index
    %297 = vector.load %arg14[%296, %c0_71] : memref<128x128xf32, #tpu.memory_space<vmem>>, vector<16x128xf32>
    tpu.vector_store %arg14[%296, %c0_71], %295 {strides = array<i32>} : memref<128x128xf32, #tpu.memory_space<vmem>>, vector<16x128xf32>,
    %c8_i32 = arith.constant 8 : i32
    %c0_72 = arith.constant 0 : index
    %c0_73 = arith.constant 0 : index
    %c0_74 = arith.constant 0 : index
    %298 = vector.load %arg12[%c0_72, %c0_73, %c0_74] : memref<2x16x128xf32, #tpu.memory_space<vmem>>, vector<1x16x128xf32>
    %299 = vector.shape_cast %298 : vector<1x16x128xf32> to vector<16x128xf32>
    %300 = vector.shape_cast %295 : vector<16x128xf32> to vector<1x16x128xf32>
    tpu.vector_store %arg12[%c0_72, %c0_73, %c0_74], %300 {strides = array<i32>} : memref<2x16x128xf32, #tpu.memory_space<vmem>>, vector<1x16x128xf32>,
    %c0_75 = arith.constant 0 : index
    %c0_76 = arith.constant 0 : index
    %301 = vector.load %arg14[%c0_75, %c0_76] : memref<128x128xf32, #tpu.memory_space<vmem>>, vector<128x128xf32>
    %302 = arith.truncf %301 : vector<128x128xf32> to vector<128x128xbf16>
    %c0_77 = arith.constant 0 : index
    %c0_78 = arith.constant 0 : index
    %303 = vector.load %arg7[%c0_77, %c0_78] : memref<128x384xbf16, #tpu.memory_space<vmem>>, vector<128x384xbf16>
    %cst_79 = arith.constant dense<0.000000e+00> : vector<128x384xf32>
    %304 = tpu.matmul %302, %303, %cst_79 {dimension_numbers = #tpu.dot_dimension_numbers<[1], [0], [0], [1], [0, 0, 1, 1], [], []>} : vector<128x128xbf16>, vector<128x384xbf16>, vector<128x384xf32> -> vector<128x384xf32>
    %c0_80 = arith.constant 0 : index
    %c0_81 = arith.constant 0 : index
    %305 = vector.load %arg8[%c0_80, %c0_81] : memref<1x384xf32, #tpu.memory_space<vmem>>, vector<1x384xf32>
    %306 = vector.broadcast %305 : vector<1x384xf32> to vector<128x384xf32>
    %307 = arith.addf %304, %306 : vector<128x384xf32>
    %c0_82 = arith.constant 0 : index
    %c0_83 = arith.constant 0 : index
    %308 = vector.load %arg13[%c0_82, %c0_83] : memref<128x384xf32, #tpu.memory_space<vmem>>, vector<128x384xf32>
    tpu.vector_store %arg13[%c0_82, %c0_83], %307 {strides = array<i32>} : memref<128x384xf32, #tpu.memory_space<vmem>>, vector<128x384xf32>,
    %c0_84 = arith.constant 0 : index
    %c0_85 = arith.constant 0 : index
    %309 = vector.load %arg9[%c0_84, %c0_85] : memref<128x384xbf16, #tpu.memory_space<vmem>>, vector<128x384xbf16>
    %c0_86 = arith.constant 0 : index
    %c0_87 = arith.constant 0 : index
    %310 = vector.load %arg10[%c0_86, %c0_87] : memref<1x128xf32, #tpu.memory_space<vmem>>, vector<1x128xf32>
    %311 = vector.shape_cast %310 : vector<1x128xf32> to vector<1x128xf32>
    %312 = vector.broadcast %311 : vector<1x128xf32> to vector<16x128xf32>
    %c1 = arith.constant 1 : index
    %c0_88 = arith.constant 0 : index
    %c0_89 = arith.constant 0 : index
    %313 = vector.load %arg12[%c1, %c0_88, %c0_89] : memref<2x16x128xf32, #tpu.memory_space<vmem>>, vector<1x16x128xf32>
    %314 = vector.shape_cast %313 : vector<1x16x128xf32> to vector<16x128xf32>
    %c0_i32_90 = arith.constant 0 : i32
    %c16_i32_91 = arith.constant 16 : i32
    %315 = arith.muli %c0_i32_90, %c16_i32_91 : i32
    %316 = tpu.assume_multiple %315, 16 : i32
    %317 = arith.index_cast %316 : i32 to index
    %c0_92 = arith.constant 0 : index
    %318 = vector.load %arg13[%317, %c0_92] : memref<128x384xf32, #tpu.memory_space<vmem>>, vector<16x384xf32>
    %319 = arith.truncf %314 : vector<16x128xf32> to vector<16x128xbf16>
    %cst_93 = arith.constant dense<0.000000e+00> : vector<16x384xf32>
    %320 = tpu.matmul %319, %309, %cst_93 {dimension_numbers = #tpu.dot_dimension_numbers<[1], [0], [0], [1], [0, 0, 1, 1], [], []>} : vector<16x128xbf16>, vector<128x384xbf16>, vector<16x384xf32> -> vector<16x384xf32>
    %321 = vector.extract_strided_slice %318 {offsets = [0, 0], sizes = [16, 128], strides = [1, 1]} : vector<16x384xf32> to vector<16x128xf32>
    %322 = vector.extract_strided_slice %320 {offsets = [0, 0], sizes = [16, 128], strides = [1, 1]} : vector<16x384xf32> to vector<16x128xf32>
    %323 = arith.addf %321, %322 : vector<16x128xf32>
    %324 = arith.negf %323 : vector<16x128xf32>
    %325 = math.exp %324 : vector<16x128xf32>
    %cst_94 = arith.constant 1.000000e+00 : f32
    %326 = vector.broadcast %cst_94 : f32 to vector<16x128xf32>
    %327 = arith.addf %326, %325 : vector<16x128xf32>
    %328 = arith.divf %326, %327 : vector<16x128xf32>
    %329 = vector.extract_strided_slice %318 {offsets = [0, 128], sizes = [16, 128], strides = [1, 1]} : vector<16x384xf32> to vector<16x128xf32>
    %330 = vector.extract_strided_slice %320 {offsets = [0, 128], sizes = [16, 128], strides = [1, 1]} : vector<16x384xf32> to vector<16x128xf32>
    %331 = arith.addf %329, %330 : vector<16x128xf32>
    %332 = arith.negf %331 : vector<16x128xf32>
    %333 = math.exp %332 : vector<16x128xf32>
    %cst_95 = arith.constant 1.000000e+00 : f32
    %334 = vector.broadcast %cst_95 : f32 to vector<16x128xf32>
    %335 = arith.addf %334, %333 : vector<16x128xf32>
    %336 = arith.divf %334, %335 : vector<16x128xf32>
    %337 = vector.extract_strided_slice %318 {offsets = [0, 256], sizes = [16, 128], strides = [1, 1]} : vector<16x384xf32> to vector<16x128xf32>
    %338 = vector.extract_strided_slice %320 {offsets = [0, 256], sizes = [16, 128], strides = [1, 1]} : vector<16x384xf32> to vector<16x128xf32>
    %339 = arith.addf %338, %312 : vector<16x128xf32>
    %340 = arith.mulf %328, %339 : vector<16x128xf32>
    %341 = arith.addf %337, %340 : vector<16x128xf32>
    %342 = math.tanh %341 : vector<16x128xf32>
    %cst_96 = arith.constant 1.000000e+00 : f32
    %343 = vector.broadcast %cst_96 : f32 to vector<16x128xf32>
    %344 = arith.subf %343, %336 : vector<16x128xf32>
    %345 = arith.mulf %344, %342 : vector<16x128xf32>
    %346 = arith.mulf %336, %314 : vector<16x128xf32>
    %347 = arith.addf %345, %346 : vector<16x128xf32>
    %348 = arith.index_cast %c0_i32_90 : i32 to index
    %c0_97 = arith.constant 0 : index
    %c0_98 = arith.constant 0 : index
    %349 = vector.load %arg11[%348, %c0_97, %c0_98] : memref<8x16x128xf32, #tpu.memory_space<vmem>>, vector<1x16x128xf32>
    %350 = vector.shape_cast %349 : vector<1x16x128xf32> to vector<16x128xf32>
    %351 = vector.shape_cast %347 : vector<16x128xf32> to vector<1x16x128xf32>
    tpu.vector_store %arg11[%348, %c0_97, %c0_98], %351 {strides = array<i32>} : memref<8x16x128xf32, #tpu.memory_space<vmem>>, vector<1x16x128xf32>,
    %c1_i32_99 = arith.constant 1 : i32
    %c16_i32_100 = arith.constant 16 : i32
    %352 = arith.muli %c1_i32_99, %c16_i32_100 : i32
    %353 = tpu.assume_multiple %352, 16 : i32
    %354 = arith.index_cast %353 : i32 to index
    %c0_101 = arith.constant 0 : index
    %355 = vector.load %arg13[%354, %c0_101] : memref<128x384xf32, #tpu.memory_space<vmem>>, vector<16x384xf32>
    %356 = arith.truncf %347 : vector<16x128xf32> to vector<16x128xbf16>
    %cst_102 = arith.constant dense<0.000000e+00> : vector<16x384xf32>
    %357 = tpu.matmul %356, %309, %cst_102 {dimension_numbers = #tpu.dot_dimension_numbers<[1], [0], [0], [1], [0, 0, 1, 1], [], []>} : vector<16x128xbf16>, vector<128x384xbf16>, vector<16x384xf32> -> vector<16x384xf32>
    %358 = vector.extract_strided_slice %355 {offsets = [0, 0], sizes = [16, 128], strides = [1, 1]} : vector<16x384xf32> to vector<16x128xf32>
    %359 = vector.extract_strided_slice %357 {offsets = [0, 0], sizes = [16, 128], strides = [1, 1]} : vector<16x384xf32> to vector<16x128xf32>
    %360 = arith.addf %358, %359 : vector<16x128xf32>
    %361 = arith.negf %360 : vector<16x128xf32>
    %362 = math.exp %361 : vector<16x128xf32>
    %cst_103 = arith.constant 1.000000e+00 : f32
    %363 = vector.broadcast %cst_103 : f32 to vector<16x128xf32>
    %364 = arith.addf %363, %362 : vector<16x128xf32>
    %365 = arith.divf %363, %364 : vector<16x128xf32>
    %366 = vector.extract_strided_slice %355 {offsets = [0, 128], sizes = [16, 128], strides = [1, 1]} : vector<16x384xf32> to vector<16x128xf32>
    %367 = vector.extract_strided_slice %357 {offsets = [0, 128], sizes = [16, 128], strides = [1, 1]} : vector<16x384xf32> to vector<16x128xf32>
    %368 = arith.addf %366, %367 : vector<16x128xf32>
    %369 = arith.negf %368 : vector<16x128xf32>
    %370 = math.exp %369 : vector<16x128xf32>
    %cst_104 = arith.constant 1.000000e+00 : f32
    %371 = vector.broadcast %cst_104 : f32 to vector<16x128xf32>
    %372 = arith.addf %371, %370 : vector<16x128xf32>
    %373 = arith.divf %371, %372 : vector<16x128xf32>
    %374 = vector.extract_strided_slice %355 {offsets = [0, 256], sizes = [16, 128], strides = [1, 1]} : vector<16x384xf32> to vector<16x128xf32>
    %375 = vector.extract_strided_slice %357 {offsets = [0, 256], sizes = [16, 128], strides = [1, 1]} : vector<16x384xf32> to vector<16x128xf32>
    %376 = arith.addf %375, %312 : vector<16x128xf32>
    %377 = arith.mulf %365, %376 : vector<16x128xf32>
    %378 = arith.addf %374, %377 : vector<16x128xf32>
    %379 = math.tanh %378 : vector<16x128xf32>
    %cst_105 = arith.constant 1.000000e+00 : f32
    %380 = vector.broadcast %cst_105 : f32 to vector<16x128xf32>
    %381 = arith.subf %380, %373 : vector<16x128xf32>
    %382 = arith.mulf %381, %379 : vector<16x128xf32>
    %383 = arith.mulf %373, %347 : vector<16x128xf32>
    %384 = arith.addf %382, %383 : vector<16x128xf32>
    %385 = arith.index_cast %c1_i32_99 : i32 to index
    %c0_106 = arith.constant 0 : index
    %c0_107 = arith.constant 0 : index
    %386 = vector.load %arg11[%385, %c0_106, %c0_107] : memref<8x16x128xf32, #tpu.memory_space<vmem>>, vector<1x16x128xf32>
    %387 = vector.shape_cast %386 : vector<1x16x128xf32> to vector<16x128xf32>
    %388 = vector.shape_cast %384 : vector<16x128xf32> to vector<1x16x128xf32>
    tpu.vector_store %arg11[%385, %c0_106, %c0_107], %388 {strides = array<i32>} : memref<8x16x128xf32, #tpu.memory_space<vmem>>, vector<1x16x128xf32>,
    %c2_i32_108 = arith.constant 2 : i32
    %c16_i32_109 = arith.constant 16 : i32
    %389 = arith.muli %c2_i32_108, %c16_i32_109 : i32
    %390 = tpu.assume_multiple %389, 16 : i32
    %391 = arith.index_cast %390 : i32 to index
    %c0_110 = arith.constant 0 : index
    %392 = vector.load %arg13[%391, %c0_110] : memref<128x384xf32, #tpu.memory_space<vmem>>, vector<16x384xf32>
    %393 = arith.truncf %384 : vector<16x128xf32> to vector<16x128xbf16>
    %cst_111 = arith.constant dense<0.000000e+00> : vector<16x384xf32>
    %394 = tpu.matmul %393, %309, %cst_111 {dimension_numbers = #tpu.dot_dimension_numbers<[1], [0], [0], [1], [0, 0, 1, 1], [], []>} : vector<16x128xbf16>, vector<128x384xbf16>, vector<16x384xf32> -> vector<16x384xf32>
    %395 = vector.extract_strided_slice %392 {offsets = [0, 0], sizes = [16, 128], strides = [1, 1]} : vector<16x384xf32> to vector<16x128xf32>
    %396 = vector.extract_strided_slice %394 {offsets = [0, 0], sizes = [16, 128], strides = [1, 1]} : vector<16x384xf32> to vector<16x128xf32>
    %397 = arith.addf %395, %396 : vector<16x128xf32>
    %398 = arith.negf %397 : vector<16x128xf32>
    %399 = math.exp %398 : vector<16x128xf32>
    %cst_112 = arith.constant 1.000000e+00 : f32
    %400 = vector.broadcast %cst_112 : f32 to vector<16x128xf32>
    %401 = arith.addf %400, %399 : vector<16x128xf32>
    %402 = arith.divf %400, %401 : vector<16x128xf32>
    %403 = vector.extract_strided_slice %392 {offsets = [0, 128], sizes = [16, 128], strides = [1, 1]} : vector<16x384xf32> to vector<16x128xf32>
    %404 = vector.extract_strided_slice %394 {offsets = [0, 128], sizes = [16, 128], strides = [1, 1]} : vector<16x384xf32> to vector<16x128xf32>
    %405 = arith.addf %403, %404 : vector<16x128xf32>
    %406 = arith.negf %405 : vector<16x128xf32>
    %407 = math.exp %406 : vector<16x128xf32>
    %cst_113 = arith.constant 1.000000e+00 : f32
    %408 = vector.broadcast %cst_113 : f32 to vector<16x128xf32>
    %409 = arith.addf %408, %407 : vector<16x128xf32>
    %410 = arith.divf %408, %409 : vector<16x128xf32>
    %411 = vector.extract_strided_slice %392 {offsets = [0, 256], sizes = [16, 128], strides = [1, 1]} : vector<16x384xf32> to vector<16x128xf32>
    %412 = vector.extract_strided_slice %394 {offsets = [0, 256], sizes = [16, 128], strides = [1, 1]} : vector<16x384xf32> to vector<16x128xf32>
    %413 = arith.addf %412, %312 : vector<16x128xf32>
    %414 = arith.mulf %402, %413 : vector<16x128xf32>
    %415 = arith.addf %411, %414 : vector<16x128xf32>
    %416 = math.tanh %415 : vector<16x128xf32>
    %cst_114 = arith.constant 1.000000e+00 : f32
    %417 = vector.broadcast %cst_114 : f32 to vector<16x128xf32>
    %418 = arith.subf %417, %410 : vector<16x128xf32>
    %419 = arith.mulf %418, %416 : vector<16x128xf32>
    %420 = arith.mulf %410, %384 : vector<16x128xf32>
    %421 = arith.addf %419, %420 : vector<16x128xf32>
    %422 = arith.index_cast %c2_i32_108 : i32 to index
    %c0_115 = arith.constant 0 : index
    %c0_116 = arith.constant 0 : index
    %423 = vector.load %arg11[%422, %c0_115, %c0_116] : memref<8x16x128xf32, #tpu.memory_space<vmem>>, vector<1x16x128xf32>
    %424 = vector.shape_cast %423 : vector<1x16x128xf32> to vector<16x128xf32>
    %425 = vector.shape_cast %421 : vector<16x128xf32> to vector<1x16x128xf32>
    tpu.vector_store %arg11[%422, %c0_115, %c0_116], %425 {strides = array<i32>} : memref<8x16x128xf32, #tpu.memory_space<vmem>>, vector<1x16x128xf32>,
    %c3_i32_117 = arith.constant 3 : i32
    %c16_i32_118 = arith.constant 16 : i32
    %426 = arith.muli %c3_i32_117, %c16_i32_118 : i32
    %427 = tpu.assume_multiple %426, 16 : i32
    %428 = arith.index_cast %427 : i32 to index
    %c0_119 = arith.constant 0 : index
    %429 = vector.load %arg13[%428, %c0_119] : memref<128x384xf32, #tpu.memory_space<vmem>>, vector<16x384xf32>
    %430 = arith.truncf %421 : vector<16x128xf32> to vector<16x128xbf16>
    %cst_120 = arith.constant dense<0.000000e+00> : vector<16x384xf32>
    %431 = tpu.matmul %430, %309, %cst_120 {dimension_numbers = #tpu.dot_dimension_numbers<[1], [0], [0], [1], [0, 0, 1, 1], [], []>} : vector<16x128xbf16>, vector<128x384xbf16>, vector<16x384xf32> -> vector<16x384xf32>
    %432 = vector.extract_strided_slice %429 {offsets = [0, 0], sizes = [16, 128], strides = [1, 1]} : vector<16x384xf32> to vector<16x128xf32>
    %433 = vector.extract_strided_slice %431 {offsets = [0, 0], sizes = [16, 128], strides = [1, 1]} : vector<16x384xf32> to vector<16x128xf32>
    %434 = arith.addf %432, %433 : vector<16x128xf32>
    %435 = arith.negf %434 : vector<16x128xf32>
    %436 = math.exp %435 : vector<16x128xf32>
    %cst_121 = arith.constant 1.000000e+00 : f32
    %437 = vector.broadcast %cst_121 : f32 to vector<16x128xf32>
    %438 = arith.addf %437, %436 : vector<16x128xf32>
    %439 = arith.divf %437, %438 : vector<16x128xf32>
    %440 = vector.extract_strided_slice %429 {offsets = [0, 128], sizes = [16, 128], strides = [1, 1]} : vector<16x384xf32> to vector<16x128xf32>
    %441 = vector.extract_strided_slice %431 {offsets = [0, 128], sizes = [16, 128], strides = [1, 1]} : vector<16x384xf32> to vector<16x128xf32>
    %442 = arith.addf %440, %441 : vector<16x128xf32>
    %443 = arith.negf %442 : vector<16x128xf32>
    %444 = math.exp %443 : vector<16x128xf32>
    %cst_122 = arith.constant 1.000000e+00 : f32
    %445 = vector.broadcast %cst_122 : f32 to vector<16x128xf32>
    %446 = arith.addf %445, %444 : vector<16x128xf32>
    %447 = arith.divf %445, %446 : vector<16x128xf32>
    %448 = vector.extract_strided_slice %429 {offsets = [0, 256], sizes = [16, 128], strides = [1, 1]} : vector<16x384xf32> to vector<16x128xf32>
    %449 = vector.extract_strided_slice %431 {offsets = [0, 256], sizes = [16, 128], strides = [1, 1]} : vector<16x384xf32> to vector<16x128xf32>
    %450 = arith.addf %449, %312 : vector<16x128xf32>
    %451 = arith.mulf %439, %450 : vector<16x128xf32>
    %452 = arith.addf %448, %451 : vector<16x128xf32>
    %453 = math.tanh %452 : vector<16x128xf32>
    %cst_123 = arith.constant 1.000000e+00 : f32
    %454 = vector.broadcast %cst_123 : f32 to vector<16x128xf32>
    %455 = arith.subf %454, %447 : vector<16x128xf32>
    %456 = arith.mulf %455, %453 : vector<16x128xf32>
    %457 = arith.mulf %447, %421 : vector<16x128xf32>
    %458 = arith.addf %456, %457 : vector<16x128xf32>
    %459 = arith.index_cast %c3_i32_117 : i32 to index
    %c0_124 = arith.constant 0 : index
    %c0_125 = arith.constant 0 : index
    %460 = vector.load %arg11[%459, %c0_124, %c0_125] : memref<8x16x128xf32, #tpu.memory_space<vmem>>, vector<1x16x128xf32>
    %461 = vector.shape_cast %460 : vector<1x16x128xf32> to vector<16x128xf32>
    %462 = vector.shape_cast %458 : vector<16x128xf32> to vector<1x16x128xf32>
    tpu.vector_store %arg11[%459, %c0_124, %c0_125], %462 {strides = array<i32>} : memref<8x16x128xf32, #tpu.memory_space<vmem>>, vector<1x16x128xf32>,
    %c4_i32_126 = arith.constant 4 : i32
    %c16_i32_127 = arith.constant 16 : i32
    %463 = arith.muli %c4_i32_126, %c16_i32_127 : i32
    %464 = tpu.assume_multiple %463, 16 : i32
    %465 = arith.index_cast %464 : i32 to index
    %c0_128 = arith.constant 0 : index
    %466 = vector.load %arg13[%465, %c0_128] : memref<128x384xf32, #tpu.memory_space<vmem>>, vector<16x384xf32>
    %467 = arith.truncf %458 : vector<16x128xf32> to vector<16x128xbf16>
    %cst_129 = arith.constant dense<0.000000e+00> : vector<16x384xf32>
    %468 = tpu.matmul %467, %309, %cst_129 {dimension_numbers = #tpu.dot_dimension_numbers<[1], [0], [0], [1], [0, 0, 1, 1], [], []>} : vector<16x128xbf16>, vector<128x384xbf16>, vector<16x384xf32> -> vector<16x384xf32>
    %469 = vector.extract_strided_slice %466 {offsets = [0, 0], sizes = [16, 128], strides = [1, 1]} : vector<16x384xf32> to vector<16x128xf32>
    %470 = vector.extract_strided_slice %468 {offsets = [0, 0], sizes = [16, 128], strides = [1, 1]} : vector<16x384xf32> to vector<16x128xf32>
    %471 = arith.addf %469, %470 : vector<16x128xf32>
    %472 = arith.negf %471 : vector<16x128xf32>
    %473 = math.exp %472 : vector<16x128xf32>
    %cst_130 = arith.constant 1.000000e+00 : f32
    %474 = vector.broadcast %cst_130 : f32 to vector<16x128xf32>
    %475 = arith.addf %474, %473 : vector<16x128xf32>
    %476 = arith.divf %474, %475 : vector<16x128xf32>
    %477 = vector.extract_strided_slice %466 {offsets = [0, 128], sizes = [16, 128], strides = [1, 1]} : vector<16x384xf32> to vector<16x128xf32>
    %478 = vector.extract_strided_slice %468 {offsets = [0, 128], sizes = [16, 128], strides = [1, 1]} : vector<16x384xf32> to vector<16x128xf32>
    %479 = arith.addf %477, %478 : vector<16x128xf32>
    %480 = arith.negf %479 : vector<16x128xf32>
    %481 = math.exp %480 : vector<16x128xf32>
    %cst_131 = arith.constant 1.000000e+00 : f32
    %482 = vector.broadcast %cst_131 : f32 to vector<16x128xf32>
    %483 = arith.addf %482, %481 : vector<16x128xf32>
    %484 = arith.divf %482, %483 : vector<16x128xf32>
    %485 = vector.extract_strided_slice %466 {offsets = [0, 256], sizes = [16, 128], strides = [1, 1]} : vector<16x384xf32> to vector<16x128xf32>
    %486 = vector.extract_strided_slice %468 {offsets = [0, 256], sizes = [16, 128], strides = [1, 1]} : vector<16x384xf32> to vector<16x128xf32>
    %487 = arith.addf %486, %312 : vector<16x128xf32>
    %488 = arith.mulf %476, %487 : vector<16x128xf32>
    %489 = arith.addf %485, %488 : vector<16x128xf32>
    %490 = math.tanh %489 : vector<16x128xf32>
    %cst_132 = arith.constant 1.000000e+00 : f32
    %491 = vector.broadcast %cst_132 : f32 to vector<16x128xf32>
    %492 = arith.subf %491, %484 : vector<16x128xf32>
    %493 = arith.mulf %492, %490 : vector<16x128xf32>
    %494 = arith.mulf %484, %458 : vector<16x128xf32>
    %495 = arith.addf %493, %494 : vector<16x128xf32>
    %496 = arith.index_cast %c4_i32_126 : i32 to index
    %c0_133 = arith.constant 0 : index
    %c0_134 = arith.constant 0 : index
    %497 = vector.load %arg11[%496, %c0_133, %c0_134] : memref<8x16x128xf32, #tpu.memory_space<vmem>>, vector<1x16x128xf32>
    %498 = vector.shape_cast %497 : vector<1x16x128xf32> to vector<16x128xf32>
    %499 = vector.shape_cast %495 : vector<16x128xf32> to vector<1x16x128xf32>
    tpu.vector_store %arg11[%496, %c0_133, %c0_134], %499 {strides = array<i32>} : memref<8x16x128xf32, #tpu.memory_space<vmem>>, vector<1x16x128xf32>,
    %c5_i32_135 = arith.constant 5 : i32
    %c16_i32_136 = arith.constant 16 : i32
    %500 = arith.muli %c5_i32_135, %c16_i32_136 : i32
    %501 = tpu.assume_multiple %500, 16 : i32
    %502 = arith.index_cast %501 : i32 to index
    %c0_137 = arith.constant 0 : index
    %503 = vector.load %arg13[%502, %c0_137] : memref<128x384xf32, #tpu.memory_space<vmem>>, vector<16x384xf32>
    %504 = arith.truncf %495 : vector<16x128xf32> to vector<16x128xbf16>
    %cst_138 = arith.constant dense<0.000000e+00> : vector<16x384xf32>
    %505 = tpu.matmul %504, %309, %cst_138 {dimension_numbers = #tpu.dot_dimension_numbers<[1], [0], [0], [1], [0, 0, 1, 1], [], []>} : vector<16x128xbf16>, vector<128x384xbf16>, vector<16x384xf32> -> vector<16x384xf32>
    %506 = vector.extract_strided_slice %503 {offsets = [0, 0], sizes = [16, 128], strides = [1, 1]} : vector<16x384xf32> to vector<16x128xf32>
    %507 = vector.extract_strided_slice %505 {offsets = [0, 0], sizes = [16, 128], strides = [1, 1]} : vector<16x384xf32> to vector<16x128xf32>
    %508 = arith.addf %506, %507 : vector<16x128xf32>
    %509 = arith.negf %508 : vector<16x128xf32>
    %510 = math.exp %509 : vector<16x128xf32>
    %cst_139 = arith.constant 1.000000e+00 : f32
    %511 = vector.broadcast %cst_139 : f32 to vector<16x128xf32>
    %512 = arith.addf %511, %510 : vector<16x128xf32>
    %513 = arith.divf %511, %512 : vector<16x128xf32>
    %514 = vector.extract_strided_slice %503 {offsets = [0, 128], sizes = [16, 128], strides = [1, 1]} : vector<16x384xf32> to vector<16x128xf32>
    %515 = vector.extract_strided_slice %505 {offsets = [0, 128], sizes = [16, 128], strides = [1, 1]} : vector<16x384xf32> to vector<16x128xf32>
    %516 = arith.addf %514, %515 : vector<16x128xf32>
    %517 = arith.negf %516 : vector<16x128xf32>
    %518 = math.exp %517 : vector<16x128xf32>
    %cst_140 = arith.constant 1.000000e+00 : f32
    %519 = vector.broadcast %cst_140 : f32 to vector<16x128xf32>
    %520 = arith.addf %519, %518 : vector<16x128xf32>
    %521 = arith.divf %519, %520 : vector<16x128xf32>
    %522 = vector.extract_strided_slice %503 {offsets = [0, 256], sizes = [16, 128], strides = [1, 1]} : vector<16x384xf32> to vector<16x128xf32>
    %523 = vector.extract_strided_slice %505 {offsets = [0, 256], sizes = [16, 128], strides = [1, 1]} : vector<16x384xf32> to vector<16x128xf32>
    %524 = arith.addf %523, %312 : vector<16x128xf32>
    %525 = arith.mulf %513, %524 : vector<16x128xf32>
    %526 = arith.addf %522, %525 : vector<16x128xf32>
    %527 = math.tanh %526 : vector<16x128xf32>
    %cst_141 = arith.constant 1.000000e+00 : f32
    %528 = vector.broadcast %cst_141 : f32 to vector<16x128xf32>
    %529 = arith.subf %528, %521 : vector<16x128xf32>
    %530 = arith.mulf %529, %527 : vector<16x128xf32>
    %531 = arith.mulf %521, %495 : vector<16x128xf32>
    %532 = arith.addf %530, %531 : vector<16x128xf32>
    %533 = arith.index_cast %c5_i32_135 : i32 to index
    %c0_142 = arith.constant 0 : index
    %c0_143 = arith.constant 0 : index
    %534 = vector.load %arg11[%533, %c0_142, %c0_143] : memref<8x16x128xf32, #tpu.memory_space<vmem>>, vector<1x16x128xf32>
    %535 = vector.shape_cast %534 : vector<1x16x128xf32> to vector<16x128xf32>
    %536 = vector.shape_cast %532 : vector<16x128xf32> to vector<1x16x128xf32>
    tpu.vector_store %arg11[%533, %c0_142, %c0_143], %536 {strides = array<i32>} : memref<8x16x128xf32, #tpu.memory_space<vmem>>, vector<1x16x128xf32>,
    %c6_i32_144 = arith.constant 6 : i32
    %c16_i32_145 = arith.constant 16 : i32
    %537 = arith.muli %c6_i32_144, %c16_i32_145 : i32
    %538 = tpu.assume_multiple %537, 16 : i32
    %539 = arith.index_cast %538 : i32 to index
    %c0_146 = arith.constant 0 : index
    %540 = vector.load %arg13[%539, %c0_146] : memref<128x384xf32, #tpu.memory_space<vmem>>, vector<16x384xf32>
    %541 = arith.truncf %532 : vector<16x128xf32> to vector<16x128xbf16>
    %cst_147 = arith.constant dense<0.000000e+00> : vector<16x384xf32>
    %542 = tpu.matmul %541, %309, %cst_147 {dimension_numbers = #tpu.dot_dimension_numbers<[1], [0], [0], [1], [0, 0, 1, 1], [], []>} : vector<16x128xbf16>, vector<128x384xbf16>, vector<16x384xf32> -> vector<16x384xf32>
    %543 = vector.extract_strided_slice %540 {offsets = [0, 0], sizes = [16, 128], strides = [1, 1]} : vector<16x384xf32> to vector<16x128xf32>
    %544 = vector.extract_strided_slice %542 {offsets = [0, 0], sizes = [16, 128], strides = [1, 1]} : vector<16x384xf32> to vector<16x128xf32>
    %545 = arith.addf %543, %544 : vector<16x128xf32>
    %546 = arith.negf %545 : vector<16x128xf32>
    %547 = math.exp %546 : vector<16x128xf32>
    %cst_148 = arith.constant 1.000000e+00 : f32
    %548 = vector.broadcast %cst_148 : f32 to vector<16x128xf32>
    %549 = arith.addf %548, %547 : vector<16x128xf32>
    %550 = arith.divf %548, %549 : vector<16x128xf32>
    %551 = vector.extract_strided_slice %540 {offsets = [0, 128], sizes = [16, 128], strides = [1, 1]} : vector<16x384xf32> to vector<16x128xf32>
    %552 = vector.extract_strided_slice %542 {offsets = [0, 128], sizes = [16, 128], strides = [1, 1]} : vector<16x384xf32> to vector<16x128xf32>
    %553 = arith.addf %551, %552 : vector<16x128xf32>
    %554 = arith.negf %553 : vector<16x128xf32>
    %555 = math.exp %554 : vector<16x128xf32>
    %cst_149 = arith.constant 1.000000e+00 : f32
    %556 = vector.broadcast %cst_149 : f32 to vector<16x128xf32>
    %557 = arith.addf %556, %555 : vector<16x128xf32>
    %558 = arith.divf %556, %557 : vector<16x128xf32>
    %559 = vector.extract_strided_slice %540 {offsets = [0, 256], sizes = [16, 128], strides = [1, 1]} : vector<16x384xf32> to vector<16x128xf32>
    %560 = vector.extract_strided_slice %542 {offsets = [0, 256], sizes = [16, 128], strides = [1, 1]} : vector<16x384xf32> to vector<16x128xf32>
    %561 = arith.addf %560, %312 : vector<16x128xf32>
    %562 = arith.mulf %550, %561 : vector<16x128xf32>
    %563 = arith.addf %559, %562 : vector<16x128xf32>
    %564 = math.tanh %563 : vector<16x128xf32>
    %cst_150 = arith.constant 1.000000e+00 : f32
    %565 = vector.broadcast %cst_150 : f32 to vector<16x128xf32>
    %566 = arith.subf %565, %558 : vector<16x128xf32>
    %567 = arith.mulf %566, %564 : vector<16x128xf32>
    %568 = arith.mulf %558, %532 : vector<16x128xf32>
    %569 = arith.addf %567, %568 : vector<16x128xf32>
    %570 = arith.index_cast %c6_i32_144 : i32 to index
    %c0_151 = arith.constant 0 : index
    %c0_152 = arith.constant 0 : index
    %571 = vector.load %arg11[%570, %c0_151, %c0_152] : memref<8x16x128xf32, #tpu.memory_space<vmem>>, vector<1x16x128xf32>
    %572 = vector.shape_cast %571 : vector<1x16x128xf32> to vector<16x128xf32>
    %573 = vector.shape_cast %569 : vector<16x128xf32> to vector<1x16x128xf32>
    tpu.vector_store %arg11[%570, %c0_151, %c0_152], %573 {strides = array<i32>} : memref<8x16x128xf32, #tpu.memory_space<vmem>>, vector<1x16x128xf32>,
    %c7_i32_153 = arith.constant 7 : i32
    %c16_i32_154 = arith.constant 16 : i32
    %574 = arith.muli %c7_i32_153, %c16_i32_154 : i32
    %575 = tpu.assume_multiple %574, 16 : i32
    %576 = arith.index_cast %575 : i32 to index
    %c0_155 = arith.constant 0 : index
    %577 = vector.load %arg13[%576, %c0_155] : memref<128x384xf32, #tpu.memory_space<vmem>>, vector<16x384xf32>
    %578 = arith.truncf %569 : vector<16x128xf32> to vector<16x128xbf16>
    %cst_156 = arith.constant dense<0.000000e+00> : vector<16x384xf32>
    %579 = tpu.matmul %578, %309, %cst_156 {dimension_numbers = #tpu.dot_dimension_numbers<[1], [0], [0], [1], [0, 0, 1, 1], [], []>} : vector<16x128xbf16>, vector<128x384xbf16>, vector<16x384xf32> -> vector<16x384xf32>
    %580 = vector.extract_strided_slice %577 {offsets = [0, 0], sizes = [16, 128], strides = [1, 1]} : vector<16x384xf32> to vector<16x128xf32>
    %581 = vector.extract_strided_slice %579 {offsets = [0, 0], sizes = [16, 128], strides = [1, 1]} : vector<16x384xf32> to vector<16x128xf32>
    %582 = arith.addf %580, %581 : vector<16x128xf32>
    %583 = arith.negf %582 : vector<16x128xf32>
    %584 = math.exp %583 : vector<16x128xf32>
    %cst_157 = arith.constant 1.000000e+00 : f32
    %585 = vector.broadcast %cst_157 : f32 to vector<16x128xf32>
    %586 = arith.addf %585, %584 : vector<16x128xf32>
    %587 = arith.divf %585, %586 : vector<16x128xf32>
    %588 = vector.extract_strided_slice %577 {offsets = [0, 128], sizes = [16, 128], strides = [1, 1]} : vector<16x384xf32> to vector<16x128xf32>
    %589 = vector.extract_strided_slice %579 {offsets = [0, 128], sizes = [16, 128], strides = [1, 1]} : vector<16x384xf32> to vector<16x128xf32>
    %590 = arith.addf %588, %589 : vector<16x128xf32>
    %591 = arith.negf %590 : vector<16x128xf32>
    %592 = math.exp %591 : vector<16x128xf32>
    %cst_158 = arith.constant 1.000000e+00 : f32
    %593 = vector.broadcast %cst_158 : f32 to vector<16x128xf32>
    %594 = arith.addf %593, %592 : vector<16x128xf32>
    %595 = arith.divf %593, %594 : vector<16x128xf32>
    %596 = vector.extract_strided_slice %577 {offsets = [0, 256], sizes = [16, 128], strides = [1, 1]} : vector<16x384xf32> to vector<16x128xf32>
    %597 = vector.extract_strided_slice %579 {offsets = [0, 256], sizes = [16, 128], strides = [1, 1]} : vector<16x384xf32> to vector<16x128xf32>
    %598 = arith.addf %597, %312 : vector<16x128xf32>
    %599 = arith.mulf %587, %598 : vector<16x128xf32>
    %600 = arith.addf %596, %599 : vector<16x128xf32>
    %601 = math.tanh %600 : vector<16x128xf32>
    %cst_159 = arith.constant 1.000000e+00 : f32
    %602 = vector.broadcast %cst_159 : f32 to vector<16x128xf32>
    %603 = arith.subf %602, %595 : vector<16x128xf32>
    %604 = arith.mulf %603, %601 : vector<16x128xf32>
    %605 = arith.mulf %595, %569 : vector<16x128xf32>
    %606 = arith.addf %604, %605 : vector<16x128xf32>
    %607 = arith.index_cast %c7_i32_153 : i32 to index
    %c0_160 = arith.constant 0 : index
    %c0_161 = arith.constant 0 : index
    %608 = vector.load %arg11[%607, %c0_160, %c0_161] : memref<8x16x128xf32, #tpu.memory_space<vmem>>, vector<1x16x128xf32>
    %609 = vector.shape_cast %608 : vector<1x16x128xf32> to vector<16x128xf32>
    %610 = vector.shape_cast %606 : vector<16x128xf32> to vector<1x16x128xf32>
    tpu.vector_store %arg11[%607, %c0_160, %c0_161], %610 {strides = array<i32>} : memref<8x16x128xf32, #tpu.memory_space<vmem>>, vector<1x16x128xf32>,
    %c8_i32_162 = arith.constant 8 : i32
    %c1_163 = arith.constant 1 : index
    %c0_164 = arith.constant 0 : index
    %c0_165 = arith.constant 0 : index
    %611 = vector.load %arg12[%c1_163, %c0_164, %c0_165] : memref<2x16x128xf32, #tpu.memory_space<vmem>>, vector<1x16x128xf32>
    %612 = vector.shape_cast %611 : vector<1x16x128xf32> to vector<16x128xf32>
    %613 = vector.shape_cast %606 : vector<16x128xf32> to vector<1x16x128xf32>
    tpu.vector_store %arg12[%c1_163, %c0_164, %c0_165], %613 {strides = array<i32>} : memref<2x16x128xf32, #tpu.memory_space<vmem>>, vector<1x16x128xf32>,
    return
  }
  func.func @transform_0(%arg0: i32, %arg1: i32) -> (i32, i32, i32) {
    %c0_i32 = arith.constant 0 : i32
    %c0_i32_0 = arith.constant 0 : i32
    return %arg1, %arg0, %c0_i32 : i32, i32, i32
  }
  func.func @transform_1(%arg0: i32, %arg1: i32) -> (i32, i32) {
    %c0_i32 = arith.constant 0 : i32
    %c0_i32_0 = arith.constant 0 : i32
    %c0_i32_1 = arith.constant 0 : i32
    return %c0_i32, %c0_i32_0 : i32, i32
  }
  func.func @transform_2(%arg0: i32, %arg1: i32) -> (i32, i32) {
    %c0_i32 = arith.constant 0 : i32
    %c0_i32_0 = arith.constant 0 : i32
    %c0_i32_1 = arith.constant 0 : i32
    return %c0_i32, %c0_i32_0 : i32, i32
  }
  func.func @transform_3(%arg0: i32, %arg1: i32) -> (i32, i32) {
    %c0_i32 = arith.constant 0 : i32
    %c0_i32_0 = arith.constant 0 : i32
    %c0_i32_1 = arith.constant 0 : i32
    return %c0_i32, %c0_i32_0 : i32, i32
  }
  func.func @transform_4(%arg0: i32, %arg1: i32) -> (i32, i32) {
    %c0_i32 = arith.constant 0 : i32
    %c0_i32_0 = arith.constant 0 : i32
    %c0_i32_1 = arith.constant 0 : i32
    return %c0_i32, %c0_i32_0 : i32, i32
  }
  func.func @transform_5(%arg0: i32, %arg1: i32) -> (i32, i32) {
    %c0_i32 = arith.constant 0 : i32
    %c0_i32_0 = arith.constant 0 : i32
    %c0_i32_1 = arith.constant 0 : i32
    return %c0_i32, %c0_i32_0 : i32, i32
  }
  func.func @transform_6(%arg0: i32, %arg1: i32) -> (i32, i32) {
    %c0_i32 = arith.constant 0 : i32
    %c0_i32_0 = arith.constant 0 : i32
    %c0_i32_1 = arith.constant 0 : i32
    return %c0_i32, %c0_i32_0 : i32, i32
  }
  func.func @transform_7(%arg0: i32, %arg1: i32) -> (i32, i32) {
    %c0_i32 = arith.constant 0 : i32
    %c0_i32_0 = arith.constant 0 : i32
    %c0_i32_1 = arith.constant 0 : i32
    return %c0_i32, %c0_i32_0 : i32, i32
  }
  func.func @transform_8(%arg0: i32, %arg1: i32) -> (i32, i32) {
    %c0_i32 = arith.constant 0 : i32
    %c0_i32_0 = arith.constant 0 : i32
    %c0_i32_1 = arith.constant 0 : i32
    return %c0_i32, %c0_i32_0 : i32, i32
  }
  func.func @transform_9(%arg0: i32, %arg1: i32) -> (i32, i32, i32) {
    %c0_i32 = arith.constant 0 : i32
    %c0_i32_0 = arith.constant 0 : i32
    return %arg1, %arg0, %c0_i32 : i32, i32, i32
  }
  func.func @transform_10(%arg0: i32, %arg1: i32) -> (i32, i32, i32) {
    %c0_i32 = arith.constant 0 : i32
    %c0_i32_0 = arith.constant 0 : i32
    %c0_i32_1 = arith.constant 0 : i32
    return %c0_i32, %arg0, %c0_i32_0 : i32, i32, i32
  }
}

</mosaic_0001>

<llo_original>
// kernel: encoder_rnn_forward.1
$region0: #{encoder_rnn_forward.1}
  #allocation0 [shape = 'u32[]', space=smem, size = 0x4, offset = 0x4, fixed_abs, tag = 'smem constant byte address 0x4 - core index']
  #allocation1 [shape = 'u32[72,128]{1,0:T(1,128)}', space=vmem, size = 0x9000, scoped, tag = 'internal scratch']
  #allocation2 [shape = 'f32[128,384]{1,0:T(8,128)}', space=vmem, size = 0x30000, scoped, tag = 'scratch operand']
  #allocation3 [shape = 'f32[128,128]{1,0:T(8,128)}', space=vmem, size = 0x10000, scoped, tag = 'scratch operand']
  %s0 = inlined_call_operand.hbm [shape: f32[8,16,16], index: 0, kind: input, shape index: {}]
  %s1 = inlined_call_operand.hbm [shape: bf16[16,384], index: 1, kind: input, shape index: {}]
  %s2 = inlined_call_operand.hbm [shape: f32[1,384], index: 2, kind: input, shape index: {}]
  %s3 = inlined_call_operand.hbm [shape: bf16[128,384], index: 3, kind: input, shape index: {}]
  %s4 = inlined_call_operand.vmem [shape: f32[1,128], index: 4, kind: input, shape index: {}]
  %s5 = inlined_call_operand.hbm [shape: bf16[128,384], index: 5, kind: input, shape index: {}]
  %s6 = inlined_call_operand.vmem [shape: f32[1,384], index: 6, kind: input, shape index: {}]
  %s7 = inlined_call_operand.hbm [shape: bf16[128,384], index: 7, kind: input, shape index: {}]
  %s8 = inlined_call_operand.vmem [shape: f32[1,128], index: 8, kind: input, shape index: {}]
  %s9 = inlined_call_operand.hbm [shape: f32[8,16,128], index: 9, kind: output, shape index: {0}]
  %s10 = inlined_call_operand.hbm [shape: f32[2,16,128], index: 10, kind: output, shape index: {1}]
  %11 = xla_tuple %s9, %s10
  %s12 = sld [smem:[#allocation0]]
  $region82: #{encoder_rnn_forward.1} parent=0
    _
  %s14 = ssub.s32 1, %s12
  %s15 = scalar_select 0, %s14, %s12
  $region1: #{encoder_rnn_forward.1} parent=0
    #allocation4 [shape = 'u8[65536]{0}', space=vmem, size = 0x10000, scoped, tag = 'input window, operand 0, single buffered']
    #allocation5 [shape = 's32[1]{0}', space=sflag, size = 0x4, scoped, tag = 'scoped memory for encoder_rnn_forward.1']
    #allocation6 [shape = 's32[1]{0}', space=sflag, size = 0x4, scoped, tag = 'scoped memory for encoder_rnn_forward.1']
    #allocation7 [shape = 'u8[12288]{0}', space=vmem, size = 0x3000, scoped, tag = 'input window, operand 1, single buffered']
    #allocation8 [shape = 's32[1]{0}', space=sflag, size = 0x4, scoped, tag = 'scoped memory for encoder_rnn_forward.1']
    #allocation9 [shape = 'u8[1536]{0}', space=vmem, size = 0x800, scoped, tag = 'input window, operand 2, single buffered']
    #allocation10 [shape = 'u8[98304]{0}', space=vmem, size = 0x18000, scoped, tag = 'input window, operand 3, single buffered']
    #allocation11 [shape = 's32[1]{0}', space=sflag, size = 0x4, scoped, tag = 'scoped memory for encoder_rnn_forward.1']
    #allocation12 [shape = 'u8[98304]{0}', space=vmem, size = 0x18000, scoped, tag = 'input window, operand 5, single buffered']
    #allocation13 [shape = 'u8[98304]{0}', space=vmem, size = 0x18000, scoped, tag = 'input window, operand 7, single buffered']
    #allocation14 [shape = 's32[1]{0}', space=sflag, size = 0x4, scoped, tag = 'scoped memory for encoder_rnn_forward.1']
    #allocation15 [shape = 'u8[65536]{0}', space=vmem, size = 0x10000, scoped, tag = 'output window, operand 0, single buffered']
    #allocation16 [shape = 'u8[16384]{0}', space=vmem, size = 0x4000, scoped, tag = 'output window, operand 1, single buffered']
    #allocation17 [shape = 's32[1]{0}', space=sflag, size = 0x4, scoped, tag = 'scoped memory for encoder_rnn_forward.1']
    %16 = vsyncpa [#allocation5], 0
    %17 = vsyncpa [#allocation8], 0
    %18 = vsyncpa [#allocation11], 0
    %19 = vsyncpa [#allocation14], 0
    %20 = vsyncpa [#allocation6], 0
    %21 = vsyncpa [#allocation17], 0
    // Predicated region
    $region2: #{encoder_rnn_forward.1} parent=1 // pred_check
      _
    $region3: #{encoder_rnn_forward.1} parent=1 // pred_check_branch
      %23 = sbr.rel (0) target = $region5
    $region4: #{encoder_rnn_forward.1} parent=1 // pred_region
      %25 = vsyncadd [#allocation5], 0
      %s26 = sshll.u32 %s0, 4
      %s27 = int_to_ptr.hbm [resolvable:$true] %s26
      %s28 = sshll.u32 [#allocation4], 4
      %s29 = int_to_ptr.vmem [resolvable:$true] %s28
      %34 = dma.hbm_to_vmem [thread:$0]  %s27, 2048, %s29, [#allocation5], 128, 128, 8
    $region5: #{encoder_rnn_forward.1} parent=1 // pred_fallthru
      _
    // Predicated region
    $region6: #{encoder_rnn_forward.1} parent=1 // pred_check
      _
    $region7: #{encoder_rnn_forward.1} parent=1 // pred_check_branch
      %36 = sbr.rel (0) target = $region9
    $region8: #{encoder_rnn_forward.1} parent=1 // pred_region
      %38 = vsyncadd [#allocation8], 0
      %s39 = sshll.u32 %s1, 4
      %s40 = int_to_ptr.hbm [resolvable:$true] %s39
      %s41 = sshll.u32 [#allocation7], 4
      %s42 = int_to_ptr.vmem [resolvable:$true] %s41
      %47 = dma.hbm_to_vmem [thread:$0]  %s40, 384, %s42, [#allocation8], 192, 192, 12
    $region9: #{encoder_rnn_forward.1} parent=1 // pred_fallthru
      _
    // Predicated region
    $region10: #{encoder_rnn_forward.1} parent=1 // pred_check
      _
    $region11: #{encoder_rnn_forward.1} parent=1 // pred_check_branch
      %49 = sbr.rel (0) target = $region13
    $region12: #{encoder_rnn_forward.1} parent=1 // pred_region
      %51 = vsyncadd [#allocation8], 0
      %s53 = sshll.u32 %s2, 4
      %s54 = int_to_ptr.hbm [resolvable:$true] %s53
      %s55 = sshll.u32 [#allocation9], 4
      %s56 = int_to_ptr.vmem [resolvable:$true] %s55
      %58 = dma.hbm_to_vmem [thread:$0]  %s54, 48, %s56, [#allocation8]
    $region13: #{encoder_rnn_forward.1} parent=1 // pred_fallthru
      _
    // Predicated region
    $region14: #{encoder_rnn_forward.1} parent=1 // pred_check
      _
    $region15: #{encoder_rnn_forward.1} parent=1 // pred_check_branch
      %60 = sbr.rel (0) target = $region17
    $region16: #{encoder_rnn_forward.1} parent=1 // pred_region
      %62 = vsyncadd [#allocation11], 0
      %s63 = sshll.u32 %s3, 4
      %s64 = int_to_ptr.hbm [resolvable:$true] %s63
      %s65 = sshll.u32 [#allocation10], 4
      %s66 = int_to_ptr.vmem [resolvable:$true] %s65
      %71 = dma.hbm_to_vmem [thread:$0]  %s64, 3072, %s66, [#allocation11], 192, 192, 12
    $region17: #{encoder_rnn_forward.1} parent=1 // pred_fallthru
      _
    // Predicated region
    $region18: #{encoder_rnn_forward.1} parent=1 // pred_check
      _
    $region19: #{encoder_rnn_forward.1} parent=1 // pred_check_branch
      %73 = sbr.rel (0) target = $region21
    $region20: #{encoder_rnn_forward.1} parent=1 // pred_region
      _
    $region21: #{encoder_rnn_forward.1} parent=1 // pred_fallthru
      _
    // Predicated region
    $region22: #{encoder_rnn_forward.1} parent=1 // pred_check
      _
    $region23: #{encoder_rnn_forward.1} parent=1 // pred_check_branch
      %75 = sbr.rel (0) target = $region25
    $region24: #{encoder_rnn_forward.1} parent=1 // pred_region
      %77 = vsyncadd [#allocation11], 0
      %s78 = sshll.u32 %s5, 4
      %s79 = int_to_ptr.hbm [resolvable:$true] %s78
      %s80 = sshll.u32 [#allocation12], 4
      %s81 = int_to_ptr.vmem [resolvable:$true] %s80
      %86 = dma.hbm_to_vmem [thread:$0]  %s79, 3072, %s81, [#allocation11], 192, 192, 12
    $region25: #{encoder_rnn_forward.1} parent=1 // pred_fallthru
      _
    // Predicated region
    $region26: #{encoder_rnn_forward.1} parent=1 // pred_check
      _
    $region27: #{encoder_rnn_forward.1} parent=1 // pred_check_branch
      %88 = sbr.rel (0) target = $region29
    $region28: #{encoder_rnn_forward.1} parent=1 // pred_region
      _
    $region29: #{encoder_rnn_forward.1} parent=1 // pred_fallthru
      _
    // Predicated region
    $region30: #{encoder_rnn_forward.1} parent=1 // pred_check
      _
    $region31: #{encoder_rnn_forward.1} parent=1 // pred_check_branch
      %90 = sbr.rel (0) target = $region33
    $region32: #{encoder_rnn_forward.1} parent=1 // pred_region
      %92 = vsyncadd [#allocation14], 0
      %s93 = sshll.u32 %s7, 4
      %s94 = int_to_ptr.hbm [resolvable:$true] %s93
      %s95 = sshll.u32 [#allocation13], 4
      %s96 = int_to_ptr.vmem [resolvable:$true] %s95
      %101 = dma.hbm_to_vmem [thread:$0]  %s94, 3072, %s96, [#allocation14], 192, 192, 12
    $region33: #{encoder_rnn_forward.1} parent=1 // pred_fallthru
      _
    // Predicated region
    $region34: #{encoder_rnn_forward.1} parent=1 // pred_check
      _
    $region35: #{encoder_rnn_forward.1} parent=1 // pred_check_branch
      %103 = sbr.rel (0) target = $region37
    $region36: #{encoder_rnn_forward.1} parent=1 // pred_region
      _
    $region37: #{encoder_rnn_forward.1} parent=1 // pred_fallthru
      _
    // Predicated region
    $region38: #{encoder_rnn_forward.1} parent=1 // pred_check
      _
    $region39: #{encoder_rnn_forward.1} parent=1 // pred_check_branch
      %105 = sbr.rel (0) target = $region41
    $region40: #{encoder_rnn_forward.1} parent=1 // pred_region
      %107 = dma.done [#allocation5], 2048
    $region41: #{encoder_rnn_forward.1} parent=1 // pred_fallthru
      _
    // Predicated region
    $region42: #{encoder_rnn_forward.1} parent=1 // pred_check
      _
    $region43: #{encoder_rnn_forward.1} parent=1 // pred_check_branch
      %109 = sbr.rel (0) target = $region45
    $region44: #{encoder_rnn_forward.1} parent=1 // pred_region
      %111 = dma.done [#allocation8], 384
    $region45: #{encoder_rnn_forward.1} parent=1 // pred_fallthru
      _
    // Predicated region
    $region46: #{encoder_rnn_forward.1} parent=1 // pred_check
      _
    $region47: #{encoder_rnn_forward.1} parent=1 // pred_check_branch
      %113 = sbr.rel (0) target = $region49
    $region48: #{encoder_rnn_forward.1} parent=1 // pred_region
      %115 = dma.done [#allocation8], 48
    $region49: #{encoder_rnn_forward.1} parent=1 // pred_fallthru
      _
    // Predicated region
    $region50: #{encoder_rnn_forward.1} parent=1 // pred_check
      _
    $region51: #{encoder_rnn_forward.1} parent=1 // pred_check_branch
      %117 = sbr.rel (0) target = $region53
    $region52: #{encoder_rnn_forward.1} parent=1 // pred_region
      %119 = dma.done [#allocation11], 3072
    $region53: #{encoder_rnn_forward.1} parent=1 // pred_fallthru
      _
    // Predicated region
    $region54: #{encoder_rnn_forward.1} parent=1 // pred_check
      _
    $region55: #{encoder_rnn_forward.1} parent=1 // pred_check_branch
      %121 = sbr.rel (0) target = $region57
    $region56: #{encoder_rnn_forward.1} parent=1 // pred_region
      %123 = dma.done [#allocation11], 3072
    $region57: #{encoder_rnn_forward.1} parent=1 // pred_fallthru
      _
    // Predicated region
    $region58: #{encoder_rnn_forward.1} parent=1 // pred_check
      _
    $region59: #{encoder_rnn_forward.1} parent=1 // pred_check_branch
      %125 = sbr.rel (0) target = $region61
    $region60: #{encoder_rnn_forward.1} parent=1 // pred_region
      %127 = dma.done [#allocation14], 3072
    $region61: #{encoder_rnn_forward.1} parent=1 // pred_fallthru
      _
    %p129 = scmp.eq.s32.totalorder 0, 0
    // Predicated region
    $region62: #{encoder_rnn_forward.1} parent=1 // pred_check
      %p130 = pneg %p129
    $region63: #{encoder_rnn_forward.1} parent=1 // pred_check_branch
      %132 = sbr.rel (%p130) target = $region65
    $region64: #{encoder_rnn_forward.1} parent=1 // pred_region
      %133 = vst [vmem:[#allocation16] sm:$0xff] 0.0
      %134 = vst [vmem:[#allocation16 + $0x8] sm:$0xff] 0.0
      %135 = vst [vmem:[#allocation16 + $0x10] sm:$0xff] 0.0
      %136 = vst [vmem:[#allocation16 + $0x18] sm:$0xff] 0.0
    $region65: #{encoder_rnn_forward.1} parent=1 // pred_fallthru
      _
    %v137 = vld [vmem:[#allocation4] sm:$0xff]
    %v138 = vld [vmem:[#allocation4 + $0x8] sm:$0xff]
    %v139 = vld [vmem:[#allocation4 + $0x10] sm:$0xff]
    %v140 = vld [vmem:[#allocation4 + $0x18] sm:$0xff]
    %v141 = vld [vmem:[#allocation4 + $0x20] sm:$0xff]
    %v142 = vld [vmem:[#allocation4 + $0x28] sm:$0xff]
    %v143 = vld [vmem:[#allocation4 + $0x30] sm:$0xff]
    %v144 = vld [vmem:[#allocation4 + $0x38] sm:$0xff]
    %v145 = vld [vmem:[#allocation4 + $0x40] sm:$0xff]
    %v146 = vld [vmem:[#allocation4 + $0x48] sm:$0xff]
    %v147 = vld [vmem:[#allocation4 + $0x50] sm:$0xff]
    %v148 = vld [vmem:[#allocation4 + $0x58] sm:$0xff]
    %v149 = vld [vmem:[#allocation4 + $0x60] sm:$0xff]
    %v150 = vld [vmem:[#allocation4 + $0x68] sm:$0xff]
    %v151 = vld [vmem:[#allocation4 + $0x70] sm:$0xff]
    %v152 = vld [vmem:[#allocation4 + $0x78] sm:$0xff]
    %v153 = vpack.c.bf16 %v138, %v137
    %v154 = vpack.c.bf16 %v140, %v139
    %v155 = vpack.c.bf16 %v142, %v141
    %v156 = vpack.c.bf16 %v144, %v143
    %v157 = vpack.c.bf16 %v146, %v145
    %v158 = vpack.c.bf16 %v148, %v147
    %v159 = vpack.c.bf16 %v150, %v149
    %v160 = vpack.c.bf16 %v152, %v151
    %v161 = vld [vmem:[#allocation7] sm:$0xff]
    %v162 = vld [vmem:[#allocation7 + $0x8] sm:$0xf]
    %v163 = vld [vmem:[#allocation7 + $0xc] sm:$0xff]
    %v164 = vld [vmem:[#allocation7 + $0x14] sm:$0xf]
    %v165 = vld [vmem:[#allocation9] sm:$0x7]
    %v167 = vperm.slane %v165, 0
    %v168 = vperm.slane %v165, 1
    %v169 = vperm.slane %v165, 2
    %v177 = vunpack.c.l.b16 %v161
    %v178 = vunpack.c.h.b16 %v161
    %v179 = vunpack.c.l.b16 %v162
    %v180 = vunpack.c.l.b16 %v163
    %v181 = vunpack.c.h.b16 %v163
    %v182 = vunpack.c.l.b16 %v164
    %v183 = vpack.c.b16 %v180, %v177
    %v184 = vpack.c.b16 %v181, %v178
    %v185 = vpack.c.b16 %v182, %v179
    %vm189 = vcmask 130048
    %v191 = vsel %vm189, %v153, 0
    %v194 = vsel %vm189, %v154, 0
    %v197 = vsel %vm189, %v155, 0
    %v200 = vsel %vm189, %v156, 0
    %v203 = vsel %vm189, %v157, 0
    %v206 = vsel %vm189, %v158, 0
    %v209 = vsel %vm189, %v159, 0
    %v212 = vsel %vm189, %v160, 0
    %214 = vmatpush.bf16.msra.mxu0 0
    %215 = vmatpush.bf16.msra.mxu0 0
    %216 = vmatpush.bf16.msra.mxu0 0
    %217 = vmatpush.bf16.msra.mxu0 0
    %218 = vmatpush.bf16.msra.mxu0 0
    %219 = vmatpush.bf16.msra.mxu0 0
    %220 = vmatpush.bf16.msra.mxu0 0
    %221 = vmatpush.bf16.msra.mxu0 %v183
    %222 = vmatmul.bf16.gmra.mxu0 %v191
    %v223 = vpop.f32.mrf.mxu0
    %v224 = vadd.f32 %v167, %v223
    %v225 = vpop.f32.mrf.mxu0
    %v226 = vadd.f32 %v167, %v225
    %227 = vmatmul.bf16.gmra.mxu0 %v194
    %v228 = vpop.f32.mrf.mxu0
    %v229 = vadd.f32 %v167, %v228
    %v230 = vpop.f32.mrf.mxu0
    %v231 = vadd.f32 %v167, %v230
    %232 = vmatmul.bf16.gmra.mxu0 %v197
    %v233 = vpop.f32.mrf.mxu0
    %v234 = vadd.f32 %v167, %v233
    %v235 = vpop.f32.mrf.mxu0
    %v236 = vadd.f32 %v167, %v235
    %237 = vmatmul.bf16.gmra.mxu0 %v200
    %v238 = vpop.f32.mrf.mxu0
    %v239 = vadd.f32 %v167, %v238
    %v240 = vpop.f32.mrf.mxu0
    %v241 = vadd.f32 %v167, %v240
    %242 = vmatmul.bf16.gmra.mxu0 %v203
    %v243 = vpop.f32.mrf.mxu0
    %v244 = vadd.f32 %v167, %v243
    %v245 = vpop.f32.mrf.mxu0
    %v246 = vadd.f32 %v167, %v245
    %247 = vmatmul.bf16.gmra.mxu0 %v206
    %v248 = vpop.f32.mrf.mxu0
    %v249 = vadd.f32 %v167, %v248
    %v250 = vpop.f32.mrf.mxu0
    %v251 = vadd.f32 %v167, %v250
    %252 = vmatmul.bf16.gmra.mxu0 %v209
    %v253 = vpop.f32.mrf.mxu0
    %v254 = vadd.f32 %v167, %v253
    %v255 = vpop.f32.mrf.mxu0
    %v256 = vadd.f32 %v167, %v255
    %257 = vmatmul.bf16.gmra.mxu0 %v212
    %v258 = vpop.f32.mrf.mxu0
    %v259 = vadd.f32 %v167, %v258
    %v260 = vpop.f32.mrf.mxu0
    %v261 = vadd.f32 %v167, %v260
    %262 = vdwg.mxu0
    %263 = vmatpush.bf16.msra.mxu0 0
    %264 = vmatpush.bf16.msra.mxu0 0
    %265 = vmatpush.bf16.msra.mxu0 0
    %266 = vmatpush.bf16.msra.mxu0 0
    %267 = vmatpush.bf16.msra.mxu0 0
    %268 = vmatpush.bf16.msra.mxu0 0
    %269 = vmatpush.bf16.msra.mxu0 0
    %270 = vmatpush.bf16.msra.mxu0 %v184
    %271 = vmatmul.bf16.gmra.mxu0 %v191
    %v272 = vpop.f32.mrf.mxu0
    %v273 = vadd.f32 %v168, %v272
    %v274 = vpop.f32.mrf.mxu0
    %v275 = vadd.f32 %v168, %v274
    %276 = vmatmul.bf16.gmra.mxu0 %v194
    %v277 = vpop.f32.mrf.mxu0
    %v278 = vadd.f32 %v168, %v277
    %v279 = vpop.f32.mrf.mxu0
    %v280 = vadd.f32 %v168, %v279
    %281 = vmatmul.bf16.gmra.mxu0 %v197
    %v282 = vpop.f32.mrf.mxu0
    %v283 = vadd.f32 %v168, %v282
    %v284 = vpop.f32.mrf.mxu0
    %v285 = vadd.f32 %v168, %v284
    %286 = vmatmul.bf16.gmra.mxu0 %v200
    %v287 = vpop.f32.mrf.mxu0
    %v288 = vadd.f32 %v168, %v287
    %v289 = vpop.f32.mrf.mxu0
    %v290 = vadd.f32 %v168, %v289
    %291 = vmatmul.bf16.gmra.mxu0 %v203
    %v292 = vpop.f32.mrf.mxu0
    %v293 = vadd.f32 %v168, %v292
    %v294 = vpop.f32.mrf.mxu0
    %v295 = vadd.f32 %v168, %v294
    %296 = vmatmul.bf16.gmra.mxu0 %v206
    %v297 = vpop.f32.mrf.mxu0
    %v298 = vadd.f32 %v168, %v297
    %v299 = vpop.f32.mrf.mxu0
    %v300 = vadd.f32 %v168, %v299
    %301 = vmatmul.bf16.gmra.mxu0 %v209
    %v302 = vpop.f32.mrf.mxu0
    %v303 = vadd.f32 %v168, %v302
    %v304 = vpop.f32.mrf.mxu0
    %v305 = vadd.f32 %v168, %v304
    %306 = vmatmul.bf16.gmra.mxu0 %v212
    %v307 = vpop.f32.mrf.mxu0
    %v308 = vadd.f32 %v168, %v307
    %v309 = vpop.f32.mrf.mxu0
    %v310 = vadd.f32 %v168, %v309
    %311 = vdwg.mxu0
    %312 = vmatpush.bf16.msra.mxu0 0
    %313 = vmatpush.bf16.msra.mxu0 0
    %314 = vmatpush.bf16.msra.mxu0 0
    %315 = vmatpush.bf16.msra.mxu0 0
    %316 = vmatpush.bf16.msra.mxu0 0
    %317 = vmatpush.bf16.msra.mxu0 0
    %318 = vmatpush.bf16.msra.mxu0 0
    %319 = vmatpush.bf16.msra.mxu0 %v185
    %320 = vmatmul.bf16.gmra.mxu0 %v191
    %v321 = vpop.f32.mrf.mxu0
    %v322 = vadd.f32 %v169, %v321
    %v323 = vpop.f32.mrf.mxu0
    %v324 = vadd.f32 %v169, %v323
    %325 = vmatmul.bf16.gmra.mxu0 %v194
    %v326 = vpop.f32.mrf.mxu0
    %v327 = vadd.f32 %v169, %v326
    %v328 = vpop.f32.mrf.mxu0
    %v329 = vadd.f32 %v169, %v328
    %330 = vmatmul.bf16.gmra.mxu0 %v197
    %v331 = vpop.f32.mrf.mxu0
    %v332 = vadd.f32 %v169, %v331
    %v333 = vpop.f32.mrf.mxu0
    %v334 = vadd.f32 %v169, %v333
    %335 = vmatmul.bf16.gmra.mxu0 %v200
    %v336 = vpop.f32.mrf.mxu0
    %v337 = vadd.f32 %v169, %v336
    %v338 = vpop.f32.mrf.mxu0
    %v339 = vadd.f32 %v169, %v338
    %340 = vmatmul.bf16.gmra.mxu0 %v203
    %v341 = vpop.f32.mrf.mxu0
    %v342 = vadd.f32 %v169, %v341
    %v343 = vpop.f32.mrf.mxu0
    %v344 = vadd.f32 %v169, %v343
    %345 = vmatmul.bf16.gmra.mxu0 %v206
    %v346 = vpop.f32.mrf.mxu0
    %v347 = vadd.f32 %v169, %v346
    %v348 = vpop.f32.mrf.mxu0
    %v349 = vadd.f32 %v169, %v348
    %350 = vmatmul.bf16.gmra.mxu0 %v209
    %v351 = vpop.f32.mrf.mxu0
    %v352 = vadd.f32 %v169, %v351
    %v353 = vpop.f32.mrf.mxu0
    %v354 = vadd.f32 %v169, %v353
    %355 = vmatmul.bf16.gmra.mxu0 %v212
    %v356 = vpop.f32.mrf.mxu0
    %v357 = vadd.f32 %v169, %v356
    %v358 = vpop.f32.mrf.mxu0
    %v359 = vadd.f32 %v169, %v358
    %360 = vdwg.mxu0
    %361 = vst [vmem:[#allocation2] sm:$0xff] %v224
    %362 = vst [vmem:[#allocation2 + $0x8] sm:$0xff] %v273
    %363 = vst [vmem:[#allocation2 + $0x10] sm:$0xff] %v322
    %364 = vst [vmem:[#allocation2 + $0x18] sm:$0xff] %v226
    %365 = vst [vmem:[#allocation2 + $0x20] sm:$0xff] %v275
    %366 = vst [vmem:[#allocation2 + $0x28] sm:$0xff] %v324
    %367 = vst [vmem:[#allocation2 + $0x30] sm:$0xff] %v229
    %368 = vst [vmem:[#allocation2 + $0x38] sm:$0xff] %v278
    %369 = vst [vmem:[#allocation2 + $0x40] sm:$0xff] %v327
    %370 = vst [vmem:[#allocation2 + $0x48] sm:$0xff] %v231
    %371 = vst [vmem:[#allocation2 + $0x50] sm:$0xff] %v280
    %372 = vst [vmem:[#allocation2 + $0x58] sm:$0xff] %v329
    %373 = vst [vmem:[#allocation2 + $0x60] sm:$0xff] %v234
    %374 = vst [vmem:[#allocation2 + $0x68] sm:$0xff] %v283
    %375 = vst [vmem:[#allocation2 + $0x70] sm:$0xff] %v332
    %376 = vst [vmem:[#allocation2 + $0x78] sm:$0xff] %v236
    %377 = vst [vmem:[#allocation2 + $0x80] sm:$0xff] %v285
    %378 = vst [vmem:[#allocation2 + $0x88] sm:$0xff] %v334
    %379 = vst [vmem:[#allocation2 + $0x90] sm:$0xff] %v239
    %380 = vst [vmem:[#allocation2 + $0x98] sm:$0xff] %v288
    %381 = vst [vmem:[#allocation2 + $0xa0] sm:$0xff] %v337
    %382 = vst [vmem:[#allocation2 + $0xa8] sm:$0xff] %v241
    %383 = vst [vmem:[#allocation2 + $0xb0] sm:$0xff] %v290
    %384 = vst [vmem:[#allocation2 + $0xb8] sm:$0xff] %v339
    %385 = vst [vmem:[#allocation2 + $0xc0] sm:$0xff] %v244
    %386 = vst [vmem:[#allocation2 + $0xc8] sm:$0xff] %v293
    %387 = vst [vmem:[#allocation2 + $0xd0] sm:$0xff] %v342
    %388 = vst [vmem:[#allocation2 + $0xd8] sm:$0xff] %v246
    %389 = vst [vmem:[#allocation2 + $0xe0] sm:$0xff] %v295
    %390 = vst [vmem:[#allocation2 + $0xe8] sm:$0xff] %v344
    %391 = vst [vmem:[#allocation2 + $0xf0] sm:$0xff] %v249
    %392 = vst [vmem:[#allocation2 + $0xf8] sm:$0xff] %v298
    %393 = vst [vmem:[#allocation2 + $0x100] sm:$0xff] %v347
    %394 = vst [vmem:[#allocation2 + $0x108] sm:$0xff] %v251
    %395 = vst [vmem:[#allocation2 + $0x110] sm:$0xff] %v300
    %396 = vst [vmem:[#allocation2 + $0x118] sm:$0xff] %v349
    %397 = vst [vmem:[#allocation2 + $0x120] sm:$0xff] %v254
    %398 = vst [vmem:[#allocation2 + $0x128] sm:$0xff] %v303
    %399 = vst [vmem:[#allocation2 + $0x130] sm:$0xff] %v352
    %400 = vst [vmem:[#allocation2 + $0x138] sm:$0xff] %v256
    %401 = vst [vmem:[#allocation2 + $0x140] sm:$0xff] %v305
    %402 = vst [vmem:[#allocation2 + $0x148] sm:$0xff] %v354
    %403 = vst [vmem:[#allocation2 + $0x150] sm:$0xff] %v259
    %404 = vst [vmem:[#allocation2 + $0x158] sm:$0xff] %v308
    %405 = vst [vmem:[#allocation2 + $0x160] sm:$0xff] %v357
    %406 = vst [vmem:[#allocation2 + $0x168] sm:$0xff] %v261
    %407 = vst [vmem:[#allocation2 + $0x170] sm:$0xff] %v310
    %408 = vst [vmem:[#allocation2 + $0x178] sm:$0xff] %v359
    %v409 = vld [vmem:[#allocation10] sm:$0xff]
    %v410 = vld [vmem:[#allocation10 + $0x8] sm:$0xf]
    %v411 = vld [vmem:[#allocation10 + $0xc] sm:$0xff]
    %v412 = vld [vmem:[#allocation10 + $0x14] sm:$0xf]
    %v413 = vld [vmem:[#allocation10 + $0x18] sm:$0xff]
    %v414 = vld [vmem:[#allocation10 + $0x20] sm:$0xf]
    %v415 = vld [vmem:[#allocation10 + $0x24] sm:$0xff]
    %v416 = vld [vmem:[#allocation10 + $0x2c] sm:$0xf]
    %v417 = vld [vmem:[#allocation10 + $0x30] sm:$0xff]
    %v418 = vld [vmem:[#allocation10 + $0x38] sm:$0xf]
    %v419 = vld [vmem:[#allocation10 + $0x3c] sm:$0xff]
    %v420 = vld [vmem:[#allocation10 + $0x44] sm:$0xf]
    %v421 = vld [vmem:[#allocation10 + $0x48] sm:$0xff]
    %v422 = vld [vmem:[#allocation10 + $0x50] sm:$0xf]
    %v423 = vld [vmem:[#allocation10 + $0x54] sm:$0xff]
    %v424 = vld [vmem:[#allocation10 + $0x5c] sm:$0xf]
    %v425 = vld [vmem:[#allocation10 + $0x60] sm:$0xff]
    %v426 = vld [vmem:[#allocation10 + $0x68] sm:$0xf]
    %v427 = vld [vmem:[#allocation10 + $0x6c] sm:$0xff]
    %v428 = vld [vmem:[#allocation10 + $0x74] sm:$0xf]
    %v429 = vld [vmem:[#allocation10 + $0x78] sm:$0xff]
    %v430 = vld [vmem:[#allocation10 + $0x80] sm:$0xf]
    %v431 = vld [vmem:[#allocation10 + $0x84] sm:$0xff]
    %v432 = vld [vmem:[#allocation10 + $0x8c] sm:$0xf]
    %v433 = vld [vmem:[#allocation10 + $0x90] sm:$0xff]
    %v434 = vld [vmem:[#allocation10 + $0x98] sm:$0xf]
    %v435 = vld [vmem:[#allocation10 + $0x9c] sm:$0xff]
    %v436 = vld [vmem:[#allocation10 + $0xa4] sm:$0xf]
    %v437 = vld [vmem:[#allocation10 + $0xa8] sm:$0xff]
    %v438 = vld [vmem:[#allocation10 + $0xb0] sm:$0xf]
    %v439 = vld [vmem:[#allocation10 + $0xb4] sm:$0xff]
    %v440 = vld [vmem:[#allocation10 + $0xbc] sm:$0xf]
    %v441 = vld [vmem:[%s4] sm:$0x1]
    %v443 = vperm.slane %v441, 0
    %v445 = vld [vmem:[#allocation16] sm:$0xff]
    %v446 = vld [vmem:[#allocation16 + $0x8] sm:$0xff]
    %s447 = smul.u32 0, 3
    %s448 = smul.addr %s447, 8
    %s449 = scalar_lea.vmem [#allocation2], %s448
    %v450 = vld [vmem:[%s449] sm:$0xff]
    %v451 = vld [vmem:[%s449 + $0x8] sm:$0xff]
    %v452 = vld [vmem:[%s449 + $0x10] sm:$0xff]
    %v453 = vld [vmem:[%s449 + $0x18] sm:$0xff]
    %v454 = vld [vmem:[%s449 + $0x20] sm:$0xff]
    %v455 = vld [vmem:[%s449 + $0x28] sm:$0xff]
    %v456 = vpack.c.bf16 %v446, %v445
    %v489 = vunpack.c.l.b16 %v409
    %v490 = vunpack.c.h.b16 %v409
    %v491 = vunpack.c.l.b16 %v410
    %v492 = vunpack.c.l.b16 %v411
    %v493 = vunpack.c.h.b16 %v411
    %v494 = vunpack.c.l.b16 %v412
    %v495 = vunpack.c.l.b16 %v413
    %v496 = vunpack.c.h.b16 %v413
    %v497 = vunpack.c.l.b16 %v414
    %v498 = vunpack.c.l.b16 %v415
    %v499 = vunpack.c.h.b16 %v415
    %v500 = vunpack.c.l.b16 %v416
    %v501 = vunpack.c.l.b16 %v417
    %v502 = vunpack.c.h.b16 %v417
    %v503 = vunpack.c.l.b16 %v418
    %v504 = vunpack.c.l.b16 %v419
    %v505 = vunpack.c.h.b16 %v419
    %v506 = vunpack.c.l.b16 %v420
    %v507 = vunpack.c.l.b16 %v421
    %v508 = vunpack.c.h.b16 %v421
    %v509 = vunpack.c.l.b16 %v422
    %v510 = vunpack.c.l.b16 %v423
    %v511 = vunpack.c.h.b16 %v423
    %v512 = vunpack.c.l.b16 %v424
    %v513 = vunpack.c.l.b16 %v425
    %v514 = vunpack.c.h.b16 %v425
    %v515 = vunpack.c.l.b16 %v426
    %v516 = vunpack.c.l.b16 %v427
    %v517 = vunpack.c.h.b16 %v427
    %v518 = vunpack.c.l.b16 %v428
    %v519 = vunpack.c.l.b16 %v429
    %v520 = vunpack.c.h.b16 %v429
    %v521 = vunpack.c.l.b16 %v430
    %v522 = vunpack.c.l.b16 %v431
    %v523 = vunpack.c.h.b16 %v431
    %v524 = vunpack.c.l.b16 %v432
    %v525 = vunpack.c.l.b16 %v433
    %v526 = vunpack.c.h.b16 %v433
    %v527 = vunpack.c.l.b16 %v434
    %v528 = vunpack.c.l.b16 %v435
    %v529 = vunpack.c.h.b16 %v435
    %v530 = vunpack.c.l.b16 %v436
    %v531 = vunpack.c.l.b16 %v437
    %v532 = vunpack.c.h.b16 %v437
    %v533 = vunpack.c.l.b16 %v438
    %v534 = vunpack.c.l.b16 %v439
    %v535 = vunpack.c.h.b16 %v439
    %v536 = vunpack.c.l.b16 %v440
    %v537 = vpack.c.b16 %v492, %v489
    %v538 = vpack.c.b16 %v493, %v490
    %v539 = vpack.c.b16 %v494, %v491
    %v540 = vpack.c.b16 %v498, %v495
    %v541 = vpack.c.b16 %v499, %v496
    %v542 = vpack.c.b16 %v500, %v497
    %v543 = vpack.c.b16 %v504, %v501
    %v544 = vpack.c.b16 %v505, %v502
    %v545 = vpack.c.b16 %v506, %v503
    %v546 = vpack.c.b16 %v510, %v507
    %v547 = vpack.c.b16 %v511, %v508
    %v548 = vpack.c.b16 %v512, %v509
    %v549 = vpack.c.b16 %v516, %v513
    %v550 = vpack.c.b16 %v517, %v514
    %v551 = vpack.c.b16 %v518, %v515
    %v552 = vpack.c.b16 %v522, %v519
    %v553 = vpack.c.b16 %v523, %v520
    %v554 = vpack.c.b16 %v524, %v521
    %v555 = vpack.c.b16 %v528, %v525
    %v556 = vpack.c.b16 %v529, %v526
    %v557 = vpack.c.b16 %v530, %v527
    %v558 = vpack.c.b16 %v534, %v531
    %v559 = vpack.c.b16 %v535, %v532
    %v560 = vpack.c.b16 %v536, %v533
    %585 = vmatpush.bf16.msra.mxu0 %v558
    %586 = vmatpush.bf16.msra.mxu0 %v555
    %587 = vmatpush.bf16.msra.mxu0 %v552
    %588 = vmatpush.bf16.msra.mxu0 %v549
    %589 = vmatpush.bf16.msra.mxu0 %v546
    %590 = vmatpush.bf16.msra.mxu0 %v543
    %591 = vmatpush.bf16.msra.mxu0 %v540
    %592 = vmatpush.bf16.msra.mxu0 %v537
    %593 = vmatmul.bf16.gmra.mxu0 %v456
    %v594 = vpop.f32.mrf.mxu0
    %v595 = vadd.f32 0.0, %v594
    %v596 = vpop.f32.mrf.mxu0
    %v597 = vadd.f32 0.0, %v596
    %598 = vdwg.mxu0
    %599 = vmatpush.bf16.msra.mxu0 %v559
    %600 = vmatpush.bf16.msra.mxu0 %v556
    %601 = vmatpush.bf16.msra.mxu0 %v553
    %602 = vmatpush.bf16.msra.mxu0 %v550
    %603 = vmatpush.bf16.msra.mxu0 %v547
    %604 = vmatpush.bf16.msra.mxu0 %v544
    %605 = vmatpush.bf16.msra.mxu0 %v541
    %606 = vmatpush.bf16.msra.mxu0 %v538
    %607 = vmatmul.bf16.gmra.mxu0 %v456
    %v608 = vpop.f32.mrf.mxu0
    %v609 = vadd.f32 0.0, %v608
    %v610 = vpop.f32.mrf.mxu0
    %v611 = vadd.f32 0.0, %v610
    %612 = vdwg.mxu0
    %613 = vmatpush.bf16.msra.mxu0 %v560
    %614 = vmatpush.bf16.msra.mxu0 %v557
    %615 = vmatpush.bf16.msra.mxu0 %v554
    %616 = vmatpush.bf16.msra.mxu0 %v551
    %617 = vmatpush.bf16.msra.mxu0 %v548
    %618 = vmatpush.bf16.msra.mxu0 %v545
    %619 = vmatpush.bf16.msra.mxu0 %v542
    %620 = vmatpush.bf16.msra.mxu0 %v539
    %621 = vmatmul.bf16.gmra.mxu0 %v456
    %v622 = vpop.f32.mrf.mxu0
    %v623 = vadd.f32 0.0, %v622
    %v624 = vpop.f32.mrf.mxu0
    %v625 = vadd.f32 0.0, %v624
    %626 = vdwg.mxu0
    %v627 = vadd.f32 %v450, %v595
    %v628 = vadd.f32 %v453, %v597
    %v629 = vxor.u32 %v627, 2147483648
    %v630 = vxor.u32 %v628, 2147483648
    %v631 = vmul.f32 %v629, 1.442695
    %v632 = vpow.pop %v631
    %v633 = vmul.f32 %v630, 1.442695
    %v634 = vpow.pop %v633
    %v635 = vadd.f32 %v632, 1.0
    %v636 = vadd.f32 %v634, 1.0
    %v637 = vrcp.pop %v635
    %v638 = vmul.f32 %v635, %v637
    %v639 = vsub.f32 1.0, %v638
    %v640 = vmul.f32 %v637, %v639
    %v641 = vadd.f32 %v637, %v640
    %vm642 = vweird.f32 %v635
    %vm643 = vweird.f32 %v637
    %vm644 = vmor %vm642, %vm643
    %v645 = vsel %vm644, %v637, %v641
    %v646 = vand.u32 2147483647, %v635
    %vm647 = vcmp.eq.f32.partialorder %v646, 8.507059e+37
    %v648 = vand.u32 %v635, 2147483648
    %v649 = vor.u32 1.1754944e-38, %v648
    %v650 = vsel %vm647, %v649, %v645
    %v651 = vmul.f32 1.0, %v650
    %v652 = vrcp.pop %v636
    %v653 = vmul.f32 %v636, %v652
    %v654 = vsub.f32 1.0, %v653
    %v655 = vmul.f32 %v652, %v654
    %v656 = vadd.f32 %v652, %v655
    %vm657 = vweird.f32 %v636
    %vm658 = vweird.f32 %v652
    %vm659 = vmor %vm657, %vm658
    %v660 = vsel %vm659, %v652, %v656
    %v661 = vand.u32 2147483647, %v636
    %vm662 = vcmp.eq.f32.partialorder %v661, 8.507059e+37
    %v663 = vand.u32 %v636, 2147483648
    %v664 = vor.u32 1.1754944e-38, %v663
    %v665 = vsel %vm662, %v664, %v660
    %v666 = vmul.f32 1.0, %v665
    %v667 = vadd.f32 %v451, %v609
    %v668 = vadd.f32 %v454, %v611
    %v669 = vxor.u32 %v667, 2147483648
    %v670 = vxor.u32 %v668, 2147483648
    %v671 = vmul.f32 %v669, 1.442695
    %v672 = vpow.pop %v671
    %v673 = vmul.f32 %v670, 1.442695
    %v674 = vpow.pop %v673
    %v675 = vadd.f32 %v672, 1.0
    %v676 = vadd.f32 %v674, 1.0
    %v677 = vrcp.pop %v675
    %v678 = vmul.f32 %v675, %v677
    %v679 = vsub.f32 1.0, %v678
    %v680 = vmul.f32 %v677, %v679
    %v681 = vadd.f32 %v677, %v680
    %vm682 = vweird.f32 %v675
    %vm683 = vweird.f32 %v677
    %vm684 = vmor %vm682, %vm683
    %v685 = vsel %vm684, %v677, %v681
    %v686 = vand.u32 2147483647, %v675
    %vm687 = vcmp.eq.f32.partialorder %v686, 8.507059e+37
    %v688 = vand.u32 %v675, 2147483648
    %v689 = vor.u32 1.1754944e-38, %v688
    %v690 = vsel %vm687, %v689, %v685
    %v691 = vmul.f32 1.0, %v690
    %v692 = vrcp.pop %v676
    %v693 = vmul.f32 %v676, %v692
    %v694 = vsub.f32 1.0, %v693
    %v695 = vmul.f32 %v692, %v694
    %v696 = vadd.f32 %v692, %v695
    %vm697 = vweird.f32 %v676
    %vm698 = vweird.f32 %v692
    %vm699 = vmor %vm697, %vm698
    %v700 = vsel %vm699, %v692, %v696
    %v701 = vand.u32 2147483647, %v676
    %vm702 = vcmp.eq.f32.partialorder %v701, 8.507059e+37
    %v703 = vand.u32 %v676, 2147483648
    %v704 = vor.u32 1.1754944e-38, %v703
    %v705 = vsel %vm702, %v704, %v700
    %v706 = vmul.f32 1.0, %v705
    %v707 = vadd.f32 %v623, %v443
    %v708 = vadd.f32 %v625, %v443
    %v709 = vmul.f32 %v651, %v707
    %v710 = vmul.f32 %v666, %v708
    %v711 = vadd.f32 %v452, %v709
    %v712 = vadd.f32 %v455, %v710
    %v713 = vtanh.pop %v711
    %v714 = vtanh.pop %v712
    %v715 = vsub.f32 1.0, %v691
    %v716 = vsub.f32 1.0, %v706
    %v717 = vmul.f32 %v715, %v713
    %v718 = vmul.f32 %v716, %v714
    %v719 = vmul.f32 %v691, %v445
    %v720 = vmul.f32 %v706, %v446
    %v721 = vadd.f32 %v717, %v719
    %v722 = vadd.f32 %v718, %v720
    %723 = vst [vmem:[#allocation3] sm:$0xff] %v721
    %724 = vst [vmem:[#allocation3 + $0x8] sm:$0xff] %v722
    %s725 = smul.u32 2, 3
    %s726 = smul.addr %s725, 8
    %s727 = scalar_lea.vmem [#allocation2], %s726
    %v728 = vld [vmem:[%s727] sm:$0xff]
    %v729 = vld [vmem:[%s727 + $0x8] sm:$0xff]
    %v730 = vld [vmem:[%s727 + $0x10] sm:$0xff]
    %v731 = vld [vmem:[%s727 + $0x18] sm:$0xff]
    %v732 = vld [vmem:[%s727 + $0x20] sm:$0xff]
    %v733 = vld [vmem:[%s727 + $0x28] sm:$0xff]
    %v734 = vpack.c.bf16 %v722, %v721
    %735 = vmatpush.bf16.msra.mxu0 %v558
    %736 = vmatpush.bf16.msra.mxu0 %v555
    %737 = vmatpush.bf16.msra.mxu0 %v552
    %738 = vmatpush.bf16.msra.mxu0 %v549
    %739 = vmatpush.bf16.msra.mxu0 %v546
    %740 = vmatpush.bf16.msra.mxu0 %v543
    %741 = vmatpush.bf16.msra.mxu0 %v540
    %742 = vmatpush.bf16.msra.mxu0 %v537
    %743 = vmatmul.bf16.gmra.mxu0 %v734
    %v744 = vpop.f32.mrf.mxu0
    %v745 = vadd.f32 0.0, %v744
    %v746 = vpop.f32.mrf.mxu0
    %v747 = vadd.f32 0.0, %v746
    %748 = vdwg.mxu0
    %749 = vmatpush.bf16.msra.mxu0 %v559
    %750 = vmatpush.bf16.msra.mxu0 %v556
    %751 = vmatpush.bf16.msra.mxu0 %v553
    %752 = vmatpush.bf16.msra.mxu0 %v550
    %753 = vmatpush.bf16.msra.mxu0 %v547
    %754 = vmatpush.bf16.msra.mxu0 %v544
    %755 = vmatpush.bf16.msra.mxu0 %v541
    %756 = vmatpush.bf16.msra.mxu0 %v538
    %757 = vmatmul.bf16.gmra.mxu0 %v734
    %v758 = vpop.f32.mrf.mxu0
    %v759 = vadd.f32 0.0, %v758
    %v760 = vpop.f32.mrf.mxu0
    %v761 = vadd.f32 0.0, %v760
    %762 = vdwg.mxu0
    %763 = vmatpush.bf16.msra.mxu0 %v560
    %764 = vmatpush.bf16.msra.mxu0 %v557
    %765 = vmatpush.bf16.msra.mxu0 %v554
    %766 = vmatpush.bf16.msra.mxu0 %v551
    %767 = vmatpush.bf16.msra.mxu0 %v548
    %768 = vmatpush.bf16.msra.mxu0 %v545
    %769 = vmatpush.bf16.msra.mxu0 %v542
    %770 = vmatpush.bf16.msra.mxu0 %v539
    %771 = vmatmul.bf16.gmra.mxu0 %v734
    %v772 = vpop.f32.mrf.mxu0
    %v773 = vadd.f32 0.0, %v772
    %v774 = vpop.f32.mrf.mxu0
    %v775 = vadd.f32 0.0, %v774
    %776 = vdwg.mxu0
    %v777 = vadd.f32 %v728, %v745
    %v778 = vadd.f32 %v731, %v747
    %v779 = vxor.u32 %v777, 2147483648
    %v780 = vxor.u32 %v778, 2147483648
    %v781 = vmul.f32 %v779, 1.442695
    %v782 = vpow.pop %v781
    %v783 = vmul.f32 %v780, 1.442695
    %v784 = vpow.pop %v783
    %v785 = vadd.f32 %v782, 1.0
    %v786 = vadd.f32 %v784, 1.0
    %v787 = vrcp.pop %v785
    %v788 = vmul.f32 %v785, %v787
    %v789 = vsub.f32 1.0, %v788
    %v790 = vmul.f32 %v787, %v789
    %v791 = vadd.f32 %v787, %v790
    %vm792 = vweird.f32 %v785
    %vm793 = vweird.f32 %v787
    %vm794 = vmor %vm792, %vm793
    %v795 = vsel %vm794, %v787, %v791
    %v796 = vand.u32 2147483647, %v785
    %vm797 = vcmp.eq.f32.partialorder %v796, 8.507059e+37
    %v798 = vand.u32 %v785, 2147483648
    %v799 = vor.u32 1.1754944e-38, %v798
    %v800 = vsel %vm797, %v799, %v795
    %v801 = vmul.f32 1.0, %v800
    %v802 = vrcp.pop %v786
    %v803 = vmul.f32 %v786, %v802
    %v804 = vsub.f32 1.0, %v803
    %v805 = vmul.f32 %v802, %v804
    %v806 = vadd.f32 %v802, %v805
    %vm807 = vweird.f32 %v786
    %vm808 = vweird.f32 %v802
    %vm809 = vmor %vm807, %vm808
    %v810 = vsel %vm809, %v802, %v806
    %v811 = vand.u32 2147483647, %v786
    %vm812 = vcmp.eq.f32.partialorder %v811, 8.507059e+37
    %v813 = vand.u32 %v786, 2147483648
    %v814 = vor.u32 1.1754944e-38, %v813
    %v815 = vsel %vm812, %v814, %v810
    %v816 = vmul.f32 1.0, %v815
    %v817 = vadd.f32 %v729, %v759
    %v818 = vadd.f32 %v732, %v761
    %v819 = vxor.u32 %v817, 2147483648
    %v820 = vxor.u32 %v818, 2147483648
    %v821 = vmul.f32 %v819, 1.442695
    %v822 = vpow.pop %v821
    %v823 = vmul.f32 %v820, 1.442695
    %v824 = vpow.pop %v823
    %v825 = vadd.f32 %v822, 1.0
    %v826 = vadd.f32 %v824, 1.0
    %v827 = vrcp.pop %v825
    %v828 = vmul.f32 %v825, %v827
    %v829 = vsub.f32 1.0, %v828
    %v830 = vmul.f32 %v827, %v829
    %v831 = vadd.f32 %v827, %v830
    %vm832 = vweird.f32 %v825
    %vm833 = vweird.f32 %v827
    %vm834 = vmor %vm832, %vm833
    %v835 = vsel %vm834, %v827, %v831
    %v836 = vand.u32 2147483647, %v825
    %vm837 = vcmp.eq.f32.partialorder %v836, 8.507059e+37
    %v838 = vand.u32 %v825, 2147483648
    %v839 = vor.u32 1.1754944e-38, %v838
    %v840 = vsel %vm837, %v839, %v835
    %v841 = vmul.f32 1.0, %v840
    %v842 = vrcp.pop %v826
    %v843 = vmul.f32 %v826, %v842
    %v844 = vsub.f32 1.0, %v843
    %v845 = vmul.f32 %v842, %v844
    %v846 = vadd.f32 %v842, %v845
    %vm847 = vweird.f32 %v826
    %vm848 = vweird.f32 %v842
    %vm849 = vmor %vm847, %vm848
    %v850 = vsel %vm849, %v842, %v846
    %v851 = vand.u32 2147483647, %v826
    %vm852 = vcmp.eq.f32.partialorder %v851, 8.507059e+37
    %v853 = vand.u32 %v826, 2147483648
    %v854 = vor.u32 1.1754944e-38, %v853
    %v855 = vsel %vm852, %v854, %v850
    %v856 = vmul.f32 1.0, %v855
    %v857 = vadd.f32 %v773, %v443
    %v858 = vadd.f32 %v775, %v443
    %v859 = vmul.f32 %v801, %v857
    %v860 = vmul.f32 %v816, %v858
    %v861 = vadd.f32 %v730, %v859
    %v862 = vadd.f32 %v733, %v860
    %v863 = vtanh.pop %v861
    %v864 = vtanh.pop %v862
    %v865 = vsub.f32 1.0, %v841
    %v866 = vsub.f32 1.0, %v856
    %v867 = vmul.f32 %v865, %v863
    %v868 = vmul.f32 %v866, %v864
    %v869 = vmul.f32 %v841, %v721
    %v870 = vmul.f32 %v856, %v722
    %v871 = vadd.f32 %v867, %v869
    %v872 = vadd.f32 %v868, %v870
    %s873 = scalar_lea.vmem [#allocation3], 16
    %874 = vst [vmem:[%s873] sm:$0xff] %v871
    %875 = vst [vmem:[%s873 + $0x8] sm:$0xff] %v872
    %s876 = smul.u32 4, 3
    %s877 = smul.addr %s876, 8
    %s878 = scalar_lea.vmem [#allocation2], %s877
    %v879 = vld [vmem:[%s878] sm:$0xff]
    %v880 = vld [vmem:[%s878 + $0x8] sm:$0xff]
    %v881 = vld [vmem:[%s878 + $0x10] sm:$0xff]
    %v882 = vld [vmem:[%s878 + $0x18] sm:$0xff]
    %v883 = vld [vmem:[%s878 + $0x20] sm:$0xff]
    %v884 = vld [vmem:[%s878 + $0x28] sm:$0xff]
    %v885 = vpack.c.bf16 %v872, %v871
    %886 = vmatpush.bf16.msra.mxu0 %v558
    %887 = vmatpush.bf16.msra.mxu0 %v555
    %888 = vmatpush.bf16.msra.mxu0 %v552
    %889 = vmatpush.bf16.msra.mxu0 %v549
    %890 = vmatpush.bf16.msra.mxu0 %v546
    %891 = vmatpush.bf16.msra.mxu0 %v543
    %892 = vmatpush.bf16.msra.mxu0 %v540
    %893 = vmatpush.bf16.msra.mxu0 %v537
    %894 = vmatmul.bf16.gmra.mxu0 %v885
    %v895 = vpop.f32.mrf.mxu0
    %v896 = vadd.f32 0.0, %v895
    %v897 = vpop.f32.mrf.mxu0
    %v898 = vadd.f32 0.0, %v897
    %899 = vdwg.mxu0
    %900 = vmatpush.bf16.msra.mxu0 %v559
    %901 = vmatpush.bf16.msra.mxu0 %v556
    %902 = vmatpush.bf16.msra.mxu0 %v553
    %903 = vmatpush.bf16.msra.mxu0 %v550
    %904 = vmatpush.bf16.msra.mxu0 %v547
    %905 = vmatpush.bf16.msra.mxu0 %v544
    %906 = vmatpush.bf16.msra.mxu0 %v541
    %907 = vmatpush.bf16.msra.mxu0 %v538
    %908 = vmatmul.bf16.gmra.mxu0 %v885
    %v909 = vpop.f32.mrf.mxu0
    %v910 = vadd.f32 0.0, %v909
    %v911 = vpop.f32.mrf.mxu0
    %v912 = vadd.f32 0.0, %v911
    %913 = vdwg.mxu0
    %914 = vmatpush.bf16.msra.mxu0 %v560
    %915 = vmatpush.bf16.msra.mxu0 %v557
    %916 = vmatpush.bf16.msra.mxu0 %v554
    %917 = vmatpush.bf16.msra.mxu0 %v551
    %918 = vmatpush.bf16.msra.mxu0 %v548
    %919 = vmatpush.bf16.msra.mxu0 %v545
    %920 = vmatpush.bf16.msra.mxu0 %v542
    %921 = vmatpush.bf16.msra.mxu0 %v539
    %922 = vmatmul.bf16.gmra.mxu0 %v885
    %v923 = vpop.f32.mrf.mxu0
    %v924 = vadd.f32 0.0, %v923
    %v925 = vpop.f32.mrf.mxu0
    %v926 = vadd.f32 0.0, %v925
    %927 = vdwg.mxu0
    %v928 = vadd.f32 %v879, %v896
    %v929 = vadd.f32 %v882, %v898
    %v930 = vxor.u32 %v928, 2147483648
    %v931 = vxor.u32 %v929, 2147483648
    %v932 = vmul.f32 %v930, 1.442695
    %v933 = vpow.pop %v932
    %v934 = vmul.f32 %v931, 1.442695
    %v935 = vpow.pop %v934
    %v936 = vadd.f32 %v933, 1.0
    %v937 = vadd.f32 %v935, 1.0
    %v938 = vrcp.pop %v936
    %v939 = vmul.f32 %v936, %v938
    %v940 = vsub.f32 1.0, %v939
    %v941 = vmul.f32 %v938, %v940
    %v942 = vadd.f32 %v938, %v941
    %vm943 = vweird.f32 %v936
    %vm944 = vweird.f32 %v938
    %vm945 = vmor %vm943, %vm944
    %v946 = vsel %vm945, %v938, %v942
    %v947 = vand.u32 2147483647, %v936
    %vm948 = vcmp.eq.f32.partialorder %v947, 8.507059e+37
    %v949 = vand.u32 %v936, 2147483648
    %v950 = vor.u32 1.1754944e-38, %v949
    %v951 = vsel %vm948, %v950, %v946
    %v952 = vmul.f32 1.0, %v951
    %v953 = vrcp.pop %v937
    %v954 = vmul.f32 %v937, %v953
    %v955 = vsub.f32 1.0, %v954
    %v956 = vmul.f32 %v953, %v955
    %v957 = vadd.f32 %v953, %v956
    %vm958 = vweird.f32 %v937
    %vm959 = vweird.f32 %v953
    %vm960 = vmor %vm958, %vm959
    %v961 = vsel %vm960, %v953, %v957
    %v962 = vand.u32 2147483647, %v937
    %vm963 = vcmp.eq.f32.partialorder %v962, 8.507059e+37
    %v964 = vand.u32 %v937, 2147483648
    %v965 = vor.u32 1.1754944e-38, %v964
    %v966 = vsel %vm963, %v965, %v961
    %v967 = vmul.f32 1.0, %v966
    %v968 = vadd.f32 %v880, %v910
    %v969 = vadd.f32 %v883, %v912
    %v970 = vxor.u32 %v968, 2147483648
    %v971 = vxor.u32 %v969, 2147483648
    %v972 = vmul.f32 %v970, 1.442695
    %v973 = vpow.pop %v972
    %v974 = vmul.f32 %v971, 1.442695
    %v975 = vpow.pop %v974
    %v976 = vadd.f32 %v973, 1.0
    %v977 = vadd.f32 %v975, 1.0
    %v978 = vrcp.pop %v976
    %v979 = vmul.f32 %v976, %v978
    %v980 = vsub.f32 1.0, %v979
    %v981 = vmul.f32 %v978, %v980
    %v982 = vadd.f32 %v978, %v981
    %vm983 = vweird.f32 %v976
    %vm984 = vweird.f32 %v978
    %vm985 = vmor %vm983, %vm984
    %v986 = vsel %vm985, %v978, %v982
    %v987 = vand.u32 2147483647, %v976
    %vm988 = vcmp.eq.f32.partialorder %v987, 8.507059e+37
    %v989 = vand.u32 %v976, 2147483648
    %v990 = vor.u32 1.1754944e-38, %v989
    %v991 = vsel %vm988, %v990, %v986
    %v992 = vmul.f32 1.0, %v991
    %v993 = vrcp.pop %v977
    %v994 = vmul.f32 %v977, %v993
    %v995 = vsub.f32 1.0, %v994
    %v996 = vmul.f32 %v993, %v995
    %v997 = vadd.f32 %v993, %v996
    %vm998 = vweird.f32 %v977
    %vm999 = vweird.f32 %v993
    %vm1000 = vmor %vm998, %vm999
    %v1001 = vsel %vm1000, %v993, %v997
    %v1002 = vand.u32 2147483647, %v977
    %vm1003 = vcmp.eq.f32.partialorder %v1002, 8.507059e+37
    %v1004 = vand.u32 %v977, 2147483648
    %v1005 = vor.u32 1.1754944e-38, %v1004
    %v1006 = vsel %vm1003, %v1005, %v1001
    %v1007 = vmul.f32 1.0, %v1006
    %v1008 = vadd.f32 %v924, %v443
    %v1009 = vadd.f32 %v926, %v443
    %v1010 = vmul.f32 %v952, %v1008
    %v1011 = vmul.f32 %v967, %v1009
    %v1012 = vadd.f32 %v881, %v1010
    %v1013 = vadd.f32 %v884, %v1011
    %v1014 = vtanh.pop %v1012
    %v1015 = vtanh.pop %v1013
    %v1016 = vsub.f32 1.0, %v992
    %v1017 = vsub.f32 1.0, %v1007
    %v1018 = vmul.f32 %v1016, %v1014
    %v1019 = vmul.f32 %v1017, %v1015
    %v1020 = vmul.f32 %v992, %v871
    %v1021 = vmul.f32 %v1007, %v872
    %v1022 = vadd.f32 %v1018, %v1020
    %v1023 = vadd.f32 %v1019, %v1021
    %s1024 = scalar_lea.vmem [#allocation3], 32
    %1025 = vst [vmem:[%s1024] sm:$0xff] %v1022
    %1026 = vst [vmem:[%s1024 + $0x8] sm:$0xff] %v1023
    %s1027 = smul.u32 6, 3
    %s1028 = smul.addr %s1027, 8
    %s1029 = scalar_lea.vmem [#allocation2], %s1028
    %v1030 = vld [vmem:[%s1029] sm:$0xff]
    %v1031 = vld [vmem:[%s1029 + $0x8] sm:$0xff]
    %v1032 = vld [vmem:[%s1029 + $0x10] sm:$0xff]
    %v1033 = vld [vmem:[%s1029 + $0x18] sm:$0xff]
    %v1034 = vld [vmem:[%s1029 + $0x20] sm:$0xff]
    %v1035 = vld [vmem:[%s1029 + $0x28] sm:$0xff]
    %v1036 = vpack.c.bf16 %v1023, %v1022
    %1037 = vmatpush.bf16.msra.mxu0 %v558
    %1038 = vmatpush.bf16.msra.mxu0 %v555
    %1039 = vmatpush.bf16.msra.mxu0 %v552
    %1040 = vmatpush.bf16.msra.mxu0 %v549
    %1041 = vmatpush.bf16.msra.mxu0 %v546
    %1042 = vmatpush.bf16.msra.mxu0 %v543
    %1043 = vmatpush.bf16.msra.mxu0 %v540
    %1044 = vmatpush.bf16.msra.mxu0 %v537
    %1045 = vmatmul.bf16.gmra.mxu0 %v1036
    %v1046 = vpop.f32.mrf.mxu0
    %v1047 = vadd.f32 0.0, %v1046
    %v1048 = vpop.f32.mrf.mxu0
    %v1049 = vadd.f32 0.0, %v1048
    %1050 = vdwg.mxu0
    %1051 = vmatpush.bf16.msra.mxu0 %v559
    %1052 = vmatpush.bf16.msra.mxu0 %v556
    %1053 = vmatpush.bf16.msra.mxu0 %v553
    %1054 = vmatpush.bf16.msra.mxu0 %v550
    %1055 = vmatpush.bf16.msra.mxu0 %v547
    %1056 = vmatpush.bf16.msra.mxu0 %v544
    %1057 = vmatpush.bf16.msra.mxu0 %v541
    %1058 = vmatpush.bf16.msra.mxu0 %v538
    %1059 = vmatmul.bf16.gmra.mxu0 %v1036
    %v1060 = vpop.f32.mrf.mxu0
    %v1061 = vadd.f32 0.0, %v1060
    %v1062 = vpop.f32.mrf.mxu0
    %v1063 = vadd.f32 0.0, %v1062
    %1064 = vdwg.mxu0
    %1065 = vmatpush.bf16.msra.mxu0 %v560
    %1066 = vmatpush.bf16.msra.mxu0 %v557
    %1067 = vmatpush.bf16.msra.mxu0 %v554
    %1068 = vmatpush.bf16.msra.mxu0 %v551
    %1069 = vmatpush.bf16.msra.mxu0 %v548
    %1070 = vmatpush.bf16.msra.mxu0 %v545
    %1071 = vmatpush.bf16.msra.mxu0 %v542
    %1072 = vmatpush.bf16.msra.mxu0 %v539
    %1073 = vmatmul.bf16.gmra.mxu0 %v1036
    %v1074 = vpop.f32.mrf.mxu0
    %v1075 = vadd.f32 0.0, %v1074
    %v1076 = vpop.f32.mrf.mxu0
    %v1077 = vadd.f32 0.0, %v1076
    %1078 = vdwg.mxu0
    %v1079 = vadd.f32 %v1030, %v1047
    %v1080 = vadd.f32 %v1033, %v1049
    %v1081 = vxor.u32 %v1079, 2147483648
    %v1082 = vxor.u32 %v1080, 2147483648
    %v1083 = vmul.f32 %v1081, 1.442695
    %v1084 = vpow.pop %v1083
    %v1085 = vmul.f32 %v1082, 1.442695
    %v1086 = vpow.pop %v1085
    %v1087 = vadd.f32 %v1084, 1.0
    %v1088 = vadd.f32 %v1086, 1.0
    %v1089 = vrcp.pop %v1087
    %v1090 = vmul.f32 %v1087, %v1089
    %v1091 = vsub.f32 1.0, %v1090
    %v1092 = vmul.f32 %v1089, %v1091
    %v1093 = vadd.f32 %v1089, %v1092
    %vm1094 = vweird.f32 %v1087
    %vm1095 = vweird.f32 %v1089
    %vm1096 = vmor %vm1094, %vm1095
    %v1097 = vsel %vm1096, %v1089, %v1093
    %v1098 = vand.u32 2147483647, %v1087
    %vm1099 = vcmp.eq.f32.partialorder %v1098, 8.507059e+37
    %v1100 = vand.u32 %v1087, 2147483648
    %v1101 = vor.u32 1.1754944e-38, %v1100
    %v1102 = vsel %vm1099, %v1101, %v1097
    %v1103 = vmul.f32 1.0, %v1102
    %v1104 = vrcp.pop %v1088
    %v1105 = vmul.f32 %v1088, %v1104
    %v1106 = vsub.f32 1.0, %v1105
    %v1107 = vmul.f32 %v1104, %v1106
    %v1108 = vadd.f32 %v1104, %v1107
    %vm1109 = vweird.f32 %v1088
    %vm1110 = vweird.f32 %v1104
    %vm1111 = vmor %vm1109, %vm1110
    %v1112 = vsel %vm1111, %v1104, %v1108
    %v1113 = vand.u32 2147483647, %v1088
    %vm1114 = vcmp.eq.f32.partialorder %v1113, 8.507059e+37
    %v1115 = vand.u32 %v1088, 2147483648
    %v1116 = vor.u32 1.1754944e-38, %v1115
    %v1117 = vsel %vm1114, %v1116, %v1112
    %v1118 = vmul.f32 1.0, %v1117
    %v1119 = vadd.f32 %v1031, %v1061
    %v1120 = vadd.f32 %v1034, %v1063
    %v1121 = vxor.u32 %v1119, 2147483648
    %v1122 = vxor.u32 %v1120, 2147483648
    %v1123 = vmul.f32 %v1121, 1.442695
    %v1124 = vpow.pop %v1123
    %v1125 = vmul.f32 %v1122, 1.442695
    %v1126 = vpow.pop %v1125
    %v1127 = vadd.f32 %v1124, 1.0
    %v1128 = vadd.f32 %v1126, 1.0
    %v1129 = vrcp.pop %v1127
    %v1130 = vmul.f32 %v1127, %v1129
    %v1131 = vsub.f32 1.0, %v1130
    %v1132 = vmul.f32 %v1129, %v1131
    %v1133 = vadd.f32 %v1129, %v1132
    %vm1134 = vweird.f32 %v1127
    %vm1135 = vweird.f32 %v1129
    %vm1136 = vmor %vm1134, %vm1135
    %v1137 = vsel %vm1136, %v1129, %v1133
    %v1138 = vand.u32 2147483647, %v1127
    %vm1139 = vcmp.eq.f32.partialorder %v1138, 8.507059e+37
    %v1140 = vand.u32 %v1127, 2147483648
    %v1141 = vor.u32 1.1754944e-38, %v1140
    %v1142 = vsel %vm1139, %v1141, %v1137
    %v1143 = vmul.f32 1.0, %v1142
    %v1144 = vrcp.pop %v1128
    %v1145 = vmul.f32 %v1128, %v1144
    %v1146 = vsub.f32 1.0, %v1145
    %v1147 = vmul.f32 %v1144, %v1146
    %v1148 = vadd.f32 %v1144, %v1147
    %vm1149 = vweird.f32 %v1128
    %vm1150 = vweird.f32 %v1144
    %vm1151 = vmor %vm1149, %vm1150
    %v1152 = vsel %vm1151, %v1144, %v1148
    %v1153 = vand.u32 2147483647, %v1128
    %vm1154 = vcmp.eq.f32.partialorder %v1153, 8.507059e+37
    %v1155 = vand.u32 %v1128, 2147483648
    %v1156 = vor.u32 1.1754944e-38, %v1155
    %v1157 = vsel %vm1154, %v1156, %v1152
    %v1158 = vmul.f32 1.0, %v1157
    %v1159 = vadd.f32 %v1075, %v443
    %v1160 = vadd.f32 %v1077, %v443
    %v1161 = vmul.f32 %v1103, %v1159
    %v1162 = vmul.f32 %v1118, %v1160
    %v1163 = vadd.f32 %v1032, %v1161
    %v1164 = vadd.f32 %v1035, %v1162
    %v1165 = vtanh.pop %v1163
    %v1166 = vtanh.pop %v1164
    %v1167 = vsub.f32 1.0, %v1143
    %v1168 = vsub.f32 1.0, %v1158
    %v1169 = vmul.f32 %v1167, %v1165
    %v1170 = vmul.f32 %v1168, %v1166
    %v1171 = vmul.f32 %v1143, %v1022
    %v1172 = vmul.f32 %v1158, %v1023
    %v1173 = vadd.f32 %v1169, %v1171
    %v1174 = vadd.f32 %v1170, %v1172
    %s1175 = scalar_lea.vmem [#allocation3], 48
    %1176 = vst [vmem:[%s1175] sm:$0xff] %v1173
    %1177 = vst [vmem:[%s1175 + $0x8] sm:$0xff] %v1174
    %s1178 = smul.u32 8, 3
    %s1179 = smul.addr %s1178, 8
    %s1180 = scalar_lea.vmem [#allocation2], %s1179
    %v1181 = vld [vmem:[%s1180] sm:$0xff]
    %v1182 = vld [vmem:[%s1180 + $0x8] sm:$0xff]
    %v1183 = vld [vmem:[%s1180 + $0x10] sm:$0xff]
    %v1184 = vld [vmem:[%s1180 + $0x18] sm:$0xff]
    %v1185 = vld [vmem:[%s1180 + $0x20] sm:$0xff]
    %v1186 = vld [vmem:[%s1180 + $0x28] sm:$0xff]
    %v1187 = vpack.c.bf16 %v1174, %v1173
    %1188 = vmatpush.bf16.msra.mxu0 %v558
    %1189 = vmatpush.bf16.msra.mxu0 %v555
    %1190 = vmatpush.bf16.msra.mxu0 %v552
    %1191 = vmatpush.bf16.msra.mxu0 %v549
    %1192 = vmatpush.bf16.msra.mxu0 %v546
    %1193 = vmatpush.bf16.msra.mxu0 %v543
    %1194 = vmatpush.bf16.msra.mxu0 %v540
    %1195 = vmatpush.bf16.msra.mxu0 %v537
    %1196 = vmatmul.bf16.gmra.mxu0 %v1187
    %v1197 = vpop.f32.mrf.mxu0
    %v1198 = vadd.f32 0.0, %v1197
    %v1199 = vpop.f32.mrf.mxu0
    %v1200 = vadd.f32 0.0, %v1199
    %1201 = vdwg.mxu0
    %1202 = vmatpush.bf16.msra.mxu0 %v559
    %1203 = vmatpush.bf16.msra.mxu0 %v556
    %1204 = vmatpush.bf16.msra.mxu0 %v553
    %1205 = vmatpush.bf16.msra.mxu0 %v550
    %1206 = vmatpush.bf16.msra.mxu0 %v547
    %1207 = vmatpush.bf16.msra.mxu0 %v544
    %1208 = vmatpush.bf16.msra.mxu0 %v541
    %1209 = vmatpush.bf16.msra.mxu0 %v538
    %1210 = vmatmul.bf16.gmra.mxu0 %v1187
    %v1211 = vpop.f32.mrf.mxu0
    %v1212 = vadd.f32 0.0, %v1211
    %v1213 = vpop.f32.mrf.mxu0
    %v1214 = vadd.f32 0.0, %v1213
    %1215 = vdwg.mxu0
    %1216 = vmatpush.bf16.msra.mxu0 %v560
    %1217 = vmatpush.bf16.msra.mxu0 %v557
    %1218 = vmatpush.bf16.msra.mxu0 %v554
    %1219 = vmatpush.bf16.msra.mxu0 %v551
    %1220 = vmatpush.bf16.msra.mxu0 %v548
    %1221 = vmatpush.bf16.msra.mxu0 %v545
    %1222 = vmatpush.bf16.msra.mxu0 %v542
    %1223 = vmatpush.bf16.msra.mxu0 %v539
    %1224 = vmatmul.bf16.gmra.mxu0 %v1187
    %v1225 = vpop.f32.mrf.mxu0
    %v1226 = vadd.f32 0.0, %v1225
    %v1227 = vpop.f32.mrf.mxu0
    %v1228 = vadd.f32 0.0, %v1227
    %1229 = vdwg.mxu0
    %v1230 = vadd.f32 %v1181, %v1198
    %v1231 = vadd.f32 %v1184, %v1200
    %v1232 = vxor.u32 %v1230, 2147483648
    %v1233 = vxor.u32 %v1231, 2147483648
    %v1234 = vmul.f32 %v1232, 1.442695
    %v1235 = vpow.pop %v1234
    %v1236 = vmul.f32 %v1233, 1.442695
    %v1237 = vpow.pop %v1236
    %v1238 = vadd.f32 %v1235, 1.0
    %v1239 = vadd.f32 %v1237, 1.0
    %v1240 = vrcp.pop %v1238
    %v1241 = vmul.f32 %v1238, %v1240
    %v1242 = vsub.f32 1.0, %v1241
    %v1243 = vmul.f32 %v1240, %v1242
    %v1244 = vadd.f32 %v1240, %v1243
    %vm1245 = vweird.f32 %v1238
    %vm1246 = vweird.f32 %v1240
    %vm1247 = vmor %vm1245, %vm1246
    %v1248 = vsel %vm1247, %v1240, %v1244
    %v1249 = vand.u32 2147483647, %v1238
    %vm1250 = vcmp.eq.f32.partialorder %v1249, 8.507059e+37
    %v1251 = vand.u32 %v1238, 2147483648
    %v1252 = vor.u32 1.1754944e-38, %v1251
    %v1253 = vsel %vm1250, %v1252, %v1248
    %v1254 = vmul.f32 1.0, %v1253
    %v1255 = vrcp.pop %v1239
    %v1256 = vmul.f32 %v1239, %v1255
    %v1257 = vsub.f32 1.0, %v1256
    %v1258 = vmul.f32 %v1255, %v1257
    %v1259 = vadd.f32 %v1255, %v1258
    %vm1260 = vweird.f32 %v1239
    %vm1261 = vweird.f32 %v1255
    %vm1262 = vmor %vm1260, %vm1261
    %v1263 = vsel %vm1262, %v1255, %v1259
    %v1264 = vand.u32 2147483647, %v1239
    %vm1265 = vcmp.eq.f32.partialorder %v1264, 8.507059e+37
    %v1266 = vand.u32 %v1239, 2147483648
    %v1267 = vor.u32 1.1754944e-38, %v1266
    %v1268 = vsel %vm1265, %v1267, %v1263
    %v1269 = vmul.f32 1.0, %v1268
    %v1270 = vadd.f32 %v1182, %v1212
    %v1271 = vadd.f32 %v1185, %v1214
    %v1272 = vxor.u32 %v1270, 2147483648
    %v1273 = vxor.u32 %v1271, 2147483648
    %v1274 = vmul.f32 %v1272, 1.442695
    %v1275 = vpow.pop %v1274
    %v1276 = vmul.f32 %v1273, 1.442695
    %v1277 = vpow.pop %v1276
    %v1278 = vadd.f32 %v1275, 1.0
    %v1279 = vadd.f32 %v1277, 1.0
    %v1280 = vrcp.pop %v1278
    %v1281 = vmul.f32 %v1278, %v1280
    %v1282 = vsub.f32 1.0, %v1281
    %v1283 = vmul.f32 %v1280, %v1282
    %v1284 = vadd.f32 %v1280, %v1283
    %vm1285 = vweird.f32 %v1278
    %vm1286 = vweird.f32 %v1280
    %vm1287 = vmor %vm1285, %vm1286
    %v1288 = vsel %vm1287, %v1280, %v1284
    %v1289 = vand.u32 2147483647, %v1278
    %vm1290 = vcmp.eq.f32.partialorder %v1289, 8.507059e+37
    %v1291 = vand.u32 %v1278, 2147483648
    %v1292 = vor.u32 1.1754944e-38, %v1291
    %v1293 = vsel %vm1290, %v1292, %v1288
    %v1294 = vmul.f32 1.0, %v1293
    %v1295 = vrcp.pop %v1279
    %v1296 = vmul.f32 %v1279, %v1295
    %v1297 = vsub.f32 1.0, %v1296
    %v1298 = vmul.f32 %v1295, %v1297
    %v1299 = vadd.f32 %v1295, %v1298
    %vm1300 = vweird.f32 %v1279
    %vm1301 = vweird.f32 %v1295
    %vm1302 = vmor %vm1300, %vm1301
    %v1303 = vsel %vm1302, %v1295, %v1299
    %v1304 = vand.u32 2147483647, %v1279
    %vm1305 = vcmp.eq.f32.partialorder %v1304, 8.507059e+37
    %v1306 = vand.u32 %v1279, 2147483648
    %v1307 = vor.u32 1.1754944e-38, %v1306
    %v1308 = vsel %vm1305, %v1307, %v1303
    %v1309 = vmul.f32 1.0, %v1308
    %v1310 = vadd.f32 %v1226, %v443
    %v1311 = vadd.f32 %v1228, %v443
    %v1312 = vmul.f32 %v1254, %v1310
    %v1313 = vmul.f32 %v1269, %v1311
    %v1314 = vadd.f32 %v1183, %v1312
    %v1315 = vadd.f32 %v1186, %v1313
    %v1316 = vtanh.pop %v1314
    %v1317 = vtanh.pop %v1315
    %v1318 = vsub.f32 1.0, %v1294
    %v1319 = vsub.f32 1.0, %v1309
    %v1320 = vmul.f32 %v1318, %v1316
    %v1321 = vmul.f32 %v1319, %v1317
    %v1322 = vmul.f32 %v1294, %v1173
    %v1323 = vmul.f32 %v1309, %v1174
    %v1324 = vadd.f32 %v1320, %v1322
    %v1325 = vadd.f32 %v1321, %v1323
    %s1326 = scalar_lea.vmem [#allocation3], 64
    %1327 = vst [vmem:[%s1326] sm:$0xff] %v1324
    %1328 = vst [vmem:[%s1326 + $0x8] sm:$0xff] %v1325
    %s1329 = smul.u32 10, 3
    %s1330 = smul.addr %s1329, 8
    %s1331 = scalar_lea.vmem [#allocation2], %s1330
    %v1332 = vld [vmem:[%s1331] sm:$0xff]
    %v1333 = vld [vmem:[%s1331 + $0x8] sm:$0xff]
    %v1334 = vld [vmem:[%s1331 + $0x10] sm:$0xff]
    %v1335 = vld [vmem:[%s1331 + $0x18] sm:$0xff]
    %v1336 = vld [vmem:[%s1331 + $0x20] sm:$0xff]
    %v1337 = vld [vmem:[%s1331 + $0x28] sm:$0xff]
    %v1338 = vpack.c.bf16 %v1325, %v1324
    %1339 = vmatpush.bf16.msra.mxu0 %v558
    %1340 = vmatpush.bf16.msra.mxu0 %v555
    %1341 = vmatpush.bf16.msra.mxu0 %v552
    %1342 = vmatpush.bf16.msra.mxu0 %v549
    %1343 = vmatpush.bf16.msra.mxu0 %v546
    %1344 = vmatpush.bf16.msra.mxu0 %v543
    %1345 = vmatpush.bf16.msra.mxu0 %v540
    %1346 = vmatpush.bf16.msra.mxu0 %v537
    %1347 = vmatmul.bf16.gmra.mxu0 %v1338
    %v1348 = vpop.f32.mrf.mxu0
    %v1349 = vadd.f32 0.0, %v1348
    %v1350 = vpop.f32.mrf.mxu0
    %v1351 = vadd.f32 0.0, %v1350
    %1352 = vdwg.mxu0
    %1353 = vmatpush.bf16.msra.mxu0 %v559
    %1354 = vmatpush.bf16.msra.mxu0 %v556
    %1355 = vmatpush.bf16.msra.mxu0 %v553
    %1356 = vmatpush.bf16.msra.mxu0 %v550
    %1357 = vmatpush.bf16.msra.mxu0 %v547
    %1358 = vmatpush.bf16.msra.mxu0 %v544
    %1359 = vmatpush.bf16.msra.mxu0 %v541
    %1360 = vmatpush.bf16.msra.mxu0 %v538
    %1361 = vmatmul.bf16.gmra.mxu0 %v1338
    %v1362 = vpop.f32.mrf.mxu0
    %v1363 = vadd.f32 0.0, %v1362
    %v1364 = vpop.f32.mrf.mxu0
    %v1365 = vadd.f32 0.0, %v1364
    %1366 = vdwg.mxu0
    %1367 = vmatpush.bf16.msra.mxu0 %v560
    %1368 = vmatpush.bf16.msra.mxu0 %v557
    %1369 = vmatpush.bf16.msra.mxu0 %v554
    %1370 = vmatpush.bf16.msra.mxu0 %v551
    %1371 = vmatpush.bf16.msra.mxu0 %v548
    %1372 = vmatpush.bf16.msra.mxu0 %v545
    %1373 = vmatpush.bf16.msra.mxu0 %v542
    %1374 = vmatpush.bf16.msra.mxu0 %v539
    %1375 = vmatmul.bf16.gmra.mxu0 %v1338
    %v1376 = vpop.f32.mrf.mxu0
    %v1377 = vadd.f32 0.0, %v1376
    %v1378 = vpop.f32.mrf.mxu0
    %v1379 = vadd.f32 0.0, %v1378
    %1380 = vdwg.mxu0
    %v1381 = vadd.f32 %v1332, %v1349
    %v1382 = vadd.f32 %v1335, %v1351
    %v1383 = vxor.u32 %v1381, 2147483648
    %v1384 = vxor.u32 %v1382, 2147483648
    %v1385 = vmul.f32 %v1383, 1.442695
    %v1386 = vpow.pop %v1385
    %v1387 = vmul.f32 %v1384, 1.442695
    %v1388 = vpow.pop %v1387
    %v1389 = vadd.f32 %v1386, 1.0
    %v1390 = vadd.f32 %v1388, 1.0
    %v1391 = vrcp.pop %v1389
    %v1392 = vmul.f32 %v1389, %v1391
    %v1393 = vsub.f32 1.0, %v1392
    %v1394 = vmul.f32 %v1391, %v1393
    %v1395 = vadd.f32 %v1391, %v1394
    %vm1396 = vweird.f32 %v1389
    %vm1397 = vweird.f32 %v1391
    %vm1398 = vmor %vm1396, %vm1397
    %v1399 = vsel %vm1398, %v1391, %v1395
    %v1400 = vand.u32 2147483647, %v1389
    %vm1401 = vcmp.eq.f32.partialorder %v1400, 8.507059e+37
    %v1402 = vand.u32 %v1389, 2147483648
    %v1403 = vor.u32 1.1754944e-38, %v1402
    %v1404 = vsel %vm1401, %v1403, %v1399
    %v1405 = vmul.f32 1.0, %v1404
    %v1406 = vrcp.pop %v1390
    %v1407 = vmul.f32 %v1390, %v1406
    %v1408 = vsub.f32 1.0, %v1407
    %v1409 = vmul.f32 %v1406, %v1408
    %v1410 = vadd.f32 %v1406, %v1409
    %vm1411 = vweird.f32 %v1390
    %vm1412 = vweird.f32 %v1406
    %vm1413 = vmor %vm1411, %vm1412
    %v1414 = vsel %vm1413, %v1406, %v1410
    %v1415 = vand.u32 2147483647, %v1390
    %vm1416 = vcmp.eq.f32.partialorder %v1415, 8.507059e+37
    %v1417 = vand.u32 %v1390, 2147483648
    %v1418 = vor.u32 1.1754944e-38, %v1417
    %v1419 = vsel %vm1416, %v1418, %v1414
    %v1420 = vmul.f32 1.0, %v1419
    %v1421 = vadd.f32 %v1333, %v1363
    %v1422 = vadd.f32 %v1336, %v1365
    %v1423 = vxor.u32 %v1421, 2147483648
    %v1424 = vxor.u32 %v1422, 2147483648
    %v1425 = vmul.f32 %v1423, 1.442695
    %v1426 = vpow.pop %v1425
    %v1427 = vmul.f32 %v1424, 1.442695
    %v1428 = vpow.pop %v1427
    %v1429 = vadd.f32 %v1426, 1.0
    %v1430 = vadd.f32 %v1428, 1.0
    %v1431 = vrcp.pop %v1429
    %v1432 = vmul.f32 %v1429, %v1431
    %v1433 = vsub.f32 1.0, %v1432
    %v1434 = vmul.f32 %v1431, %v1433
    %v1435 = vadd.f32 %v1431, %v1434
    %vm1436 = vweird.f32 %v1429
    %vm1437 = vweird.f32 %v1431
    %vm1438 = vmor %vm1436, %vm1437
    %v1439 = vsel %vm1438, %v1431, %v1435
    %v1440 = vand.u32 2147483647, %v1429
    %vm1441 = vcmp.eq.f32.partialorder %v1440, 8.507059e+37
    %v1442 = vand.u32 %v1429, 2147483648
    %v1443 = vor.u32 1.1754944e-38, %v1442
    %v1444 = vsel %vm1441, %v1443, %v1439
    %v1445 = vmul.f32 1.0, %v1444
    %v1446 = vrcp.pop %v1430
    %v1447 = vmul.f32 %v1430, %v1446
    %v1448 = vsub.f32 1.0, %v1447
    %v1449 = vmul.f32 %v1446, %v1448
    %v1450 = vadd.f32 %v1446, %v1449
    %vm1451 = vweird.f32 %v1430
    %vm1452 = vweird.f32 %v1446
    %vm1453 = vmor %vm1451, %vm1452
    %v1454 = vsel %vm1453, %v1446, %v1450
    %v1455 = vand.u32 2147483647, %v1430
    %vm1456 = vcmp.eq.f32.partialorder %v1455, 8.507059e+37
    %v1457 = vand.u32 %v1430, 2147483648
    %v1458 = vor.u32 1.1754944e-38, %v1457
    %v1459 = vsel %vm1456, %v1458, %v1454
    %v1460 = vmul.f32 1.0, %v1459
    %v1461 = vadd.f32 %v1377, %v443
    %v1462 = vadd.f32 %v1379, %v443
    %v1463 = vmul.f32 %v1405, %v1461
    %v1464 = vmul.f32 %v1420, %v1462
    %v1465 = vadd.f32 %v1334, %v1463
    %v1466 = vadd.f32 %v1337, %v1464
    %v1467 = vtanh.pop %v1465
    %v1468 = vtanh.pop %v1466
    %v1469 = vsub.f32 1.0, %v1445
    %v1470 = vsub.f32 1.0, %v1460
    %v1471 = vmul.f32 %v1469, %v1467
    %v1472 = vmul.f32 %v1470, %v1468
    %v1473 = vmul.f32 %v1445, %v1324
    %v1474 = vmul.f32 %v1460, %v1325
    %v1475 = vadd.f32 %v1471, %v1473
    %v1476 = vadd.f32 %v1472, %v1474
    %s1477 = scalar_lea.vmem [#allocation3], 80
    %1478 = vst [vmem:[%s1477] sm:$0xff] %v1475
    %1479 = vst [vmem:[%s1477 + $0x8] sm:$0xff] %v1476
    %s1480 = smul.u32 12, 3
    %s1481 = smul.addr %s1480, 8
    %s1482 = scalar_lea.vmem [#allocation2], %s1481
    %v1483 = vld [vmem:[%s1482] sm:$0xff]
    %v1484 = vld [vmem:[%s1482 + $0x8] sm:$0xff]
    %v1485 = vld [vmem:[%s1482 + $0x10] sm:$0xff]
    %v1486 = vld [vmem:[%s1482 + $0x18] sm:$0xff]
    %v1487 = vld [vmem:[%s1482 + $0x20] sm:$0xff]
    %v1488 = vld [vmem:[%s1482 + $0x28] sm:$0xff]
    %v1489 = vpack.c.bf16 %v1476, %v1475
    %1490 = vmatpush.bf16.msra.mxu0 %v558
    %1491 = vmatpush.bf16.msra.mxu0 %v555
    %1492 = vmatpush.bf16.msra.mxu0 %v552
    %1493 = vmatpush.bf16.msra.mxu0 %v549
    %1494 = vmatpush.bf16.msra.mxu0 %v546
    %1495 = vmatpush.bf16.msra.mxu0 %v543
    %1496 = vmatpush.bf16.msra.mxu0 %v540
    %1497 = vmatpush.bf16.msra.mxu0 %v537
    %1498 = vmatmul.bf16.gmra.mxu0 %v1489
    %v1499 = vpop.f32.mrf.mxu0
    %v1500 = vadd.f32 0.0, %v1499
    %v1501 = vpop.f32.mrf.mxu0
    %v1502 = vadd.f32 0.0, %v1501
    %1503 = vdwg.mxu0
    %1504 = vmatpush.bf16.msra.mxu0 %v559
    %1505 = vmatpush.bf16.msra.mxu0 %v556
    %1506 = vmatpush.bf16.msra.mxu0 %v553
    %1507 = vmatpush.bf16.msra.mxu0 %v550
    %1508 = vmatpush.bf16.msra.mxu0 %v547
    %1509 = vmatpush.bf16.msra.mxu0 %v544
    %1510 = vmatpush.bf16.msra.mxu0 %v541
    %1511 = vmatpush.bf16.msra.mxu0 %v538
    %1512 = vmatmul.bf16.gmra.mxu0 %v1489
    %v1513 = vpop.f32.mrf.mxu0
    %v1514 = vadd.f32 0.0, %v1513
    %v1515 = vpop.f32.mrf.mxu0
    %v1516 = vadd.f32 0.0, %v1515
    %1517 = vdwg.mxu0
    %1518 = vmatpush.bf16.msra.mxu0 %v560
    %1519 = vmatpush.bf16.msra.mxu0 %v557
    %1520 = vmatpush.bf16.msra.mxu0 %v554
    %1521 = vmatpush.bf16.msra.mxu0 %v551
    %1522 = vmatpush.bf16.msra.mxu0 %v548
    %1523 = vmatpush.bf16.msra.mxu0 %v545
    %1524 = vmatpush.bf16.msra.mxu0 %v542
    %1525 = vmatpush.bf16.msra.mxu0 %v539
    %1526 = vmatmul.bf16.gmra.mxu0 %v1489
    %v1527 = vpop.f32.mrf.mxu0
    %v1528 = vadd.f32 0.0, %v1527
    %v1529 = vpop.f32.mrf.mxu0
    %v1530 = vadd.f32 0.0, %v1529
    %1531 = vdwg.mxu0
    %v1532 = vadd.f32 %v1483, %v1500
    %v1533 = vadd.f32 %v1486, %v1502
    %v1534 = vxor.u32 %v1532, 2147483648
    %v1535 = vxor.u32 %v1533, 2147483648
    %v1536 = vmul.f32 %v1534, 1.442695
    %v1537 = vpow.pop %v1536
    %v1538 = vmul.f32 %v1535, 1.442695
    %v1539 = vpow.pop %v1538
    %v1540 = vadd.f32 %v1537, 1.0
    %v1541 = vadd.f32 %v1539, 1.0
    %v1542 = vrcp.pop %v1540
    %v1543 = vmul.f32 %v1540, %v1542
    %v1544 = vsub.f32 1.0, %v1543
    %v1545 = vmul.f32 %v1542, %v1544
    %v1546 = vadd.f32 %v1542, %v1545
    %vm1547 = vweird.f32 %v1540
    %vm1548 = vweird.f32 %v1542
    %vm1549 = vmor %vm1547, %vm1548
    %v1550 = vsel %vm1549, %v1542, %v1546
    %v1551 = vand.u32 2147483647, %v1540
    %vm1552 = vcmp.eq.f32.partialorder %v1551, 8.507059e+37
    %v1553 = vand.u32 %v1540, 2147483648
    %v1554 = vor.u32 1.1754944e-38, %v1553
    %v1555 = vsel %vm1552, %v1554, %v1550
    %v1556 = vmul.f32 1.0, %v1555
    %v1557 = vrcp.pop %v1541
    %v1558 = vmul.f32 %v1541, %v1557
    %v1559 = vsub.f32 1.0, %v1558
    %v1560 = vmul.f32 %v1557, %v1559
    %v1561 = vadd.f32 %v1557, %v1560
    %vm1562 = vweird.f32 %v1541
    %vm1563 = vweird.f32 %v1557
    %vm1564 = vmor %vm1562, %vm1563
    %v1565 = vsel %vm1564, %v1557, %v1561
    %v1566 = vand.u32 2147483647, %v1541
    %vm1567 = vcmp.eq.f32.partialorder %v1566, 8.507059e+37
    %v1568 = vand.u32 %v1541, 2147483648
    %v1569 = vor.u32 1.1754944e-38, %v1568
    %v1570 = vsel %vm1567, %v1569, %v1565
    %v1571 = vmul.f32 1.0, %v1570
    %v1572 = vadd.f32 %v1484, %v1514
    %v1573 = vadd.f32 %v1487, %v1516
    %v1574 = vxor.u32 %v1572, 2147483648
    %v1575 = vxor.u32 %v1573, 2147483648
    %v1576 = vmul.f32 %v1574, 1.442695
    %v1577 = vpow.pop %v1576
    %v1578 = vmul.f32 %v1575, 1.442695
    %v1579 = vpow.pop %v1578
    %v1580 = vadd.f32 %v1577, 1.0
    %v1581 = vadd.f32 %v1579, 1.0
    %v1582 = vrcp.pop %v1580
    %v1583 = vmul.f32 %v1580, %v1582
    %v1584 = vsub.f32 1.0, %v1583
    %v1585 = vmul.f32 %v1582, %v1584
    %v1586 = vadd.f32 %v1582, %v1585
    %vm1587 = vweird.f32 %v1580
    %vm1588 = vweird.f32 %v1582
    %vm1589 = vmor %vm1587, %vm1588
    %v1590 = vsel %vm1589, %v1582, %v1586
    %v1591 = vand.u32 2147483647, %v1580
    %vm1592 = vcmp.eq.f32.partialorder %v1591, 8.507059e+37
    %v1593 = vand.u32 %v1580, 2147483648
    %v1594 = vor.u32 1.1754944e-38, %v1593
    %v1595 = vsel %vm1592, %v1594, %v1590
    %v1596 = vmul.f32 1.0, %v1595
    %v1597 = vrcp.pop %v1581
    %v1598 = vmul.f32 %v1581, %v1597
    %v1599 = vsub.f32 1.0, %v1598
    %v1600 = vmul.f32 %v1597, %v1599
    %v1601 = vadd.f32 %v1597, %v1600
    %vm1602 = vweird.f32 %v1581
    %vm1603 = vweird.f32 %v1597
    %vm1604 = vmor %vm1602, %vm1603
    %v1605 = vsel %vm1604, %v1597, %v1601
    %v1606 = vand.u32 2147483647, %v1581
    %vm1607 = vcmp.eq.f32.partialorder %v1606, 8.507059e+37
    %v1608 = vand.u32 %v1581, 2147483648
    %v1609 = vor.u32 1.1754944e-38, %v1608
    %v1610 = vsel %vm1607, %v1609, %v1605
    %v1611 = vmul.f32 1.0, %v1610
    %v1612 = vadd.f32 %v1528, %v443
    %v1613 = vadd.f32 %v1530, %v443
    %v1614 = vmul.f32 %v1556, %v1612
    %v1615 = vmul.f32 %v1571, %v1613
    %v1616 = vadd.f32 %v1485, %v1614
    %v1617 = vadd.f32 %v1488, %v1615
    %v1618 = vtanh.pop %v1616
    %v1619 = vtanh.pop %v1617
    %v1620 = vsub.f32 1.0, %v1596
    %v1621 = vsub.f32 1.0, %v1611
    %v1622 = vmul.f32 %v1620, %v1618
    %v1623 = vmul.f32 %v1621, %v1619
    %v1624 = vmul.f32 %v1596, %v1475
    %v1625 = vmul.f32 %v1611, %v1476
    %v1626 = vadd.f32 %v1622, %v1624
    %v1627 = vadd.f32 %v1623, %v1625
    %s1628 = scalar_lea.vmem [#allocation3], 96
    %1629 = vst [vmem:[%s1628] sm:$0xff] %v1626
    %1630 = vst [vmem:[%s1628 + $0x8] sm:$0xff] %v1627
    %s1631 = smul.u32 14, 3
    %s1632 = smul.addr %s1631, 8
    %s1633 = scalar_lea.vmem [#allocation2], %s1632
    %v1634 = vld [vmem:[%s1633] sm:$0xff]
    %v1635 = vld [vmem:[%s1633 + $0x8] sm:$0xff]
    %v1636 = vld [vmem:[%s1633 + $0x10] sm:$0xff]
    %v1637 = vld [vmem:[%s1633 + $0x18] sm:$0xff]
    %v1638 = vld [vmem:[%s1633 + $0x20] sm:$0xff]
    %v1639 = vld [vmem:[%s1633 + $0x28] sm:$0xff]
    %v1640 = vpack.c.bf16 %v1627, %v1626
    %1641 = vmatpush.bf16.msra.mxu0 %v558
    %1642 = vmatpush.bf16.msra.mxu0 %v555
    %1643 = vmatpush.bf16.msra.mxu0 %v552
    %1644 = vmatpush.bf16.msra.mxu0 %v549
    %1645 = vmatpush.bf16.msra.mxu0 %v546
    %1646 = vmatpush.bf16.msra.mxu0 %v543
    %1647 = vmatpush.bf16.msra.mxu0 %v540
    %1648 = vmatpush.bf16.msra.mxu0 %v537
    %1649 = vmatmul.bf16.gmra.mxu0 %v1640
    %v1650 = vpop.f32.mrf.mxu0
    %v1651 = vadd.f32 0.0, %v1650
    %v1652 = vpop.f32.mrf.mxu0
    %v1653 = vadd.f32 0.0, %v1652
    %1654 = vdwg.mxu0
    %1655 = vmatpush.bf16.msra.mxu0 %v559
    %1656 = vmatpush.bf16.msra.mxu0 %v556
    %1657 = vmatpush.bf16.msra.mxu0 %v553
    %1658 = vmatpush.bf16.msra.mxu0 %v550
    %1659 = vmatpush.bf16.msra.mxu0 %v547
    %1660 = vmatpush.bf16.msra.mxu0 %v544
    %1661 = vmatpush.bf16.msra.mxu0 %v541
    %1662 = vmatpush.bf16.msra.mxu0 %v538
    %1663 = vmatmul.bf16.gmra.mxu0 %v1640
    %v1664 = vpop.f32.mrf.mxu0
    %v1665 = vadd.f32 0.0, %v1664
    %v1666 = vpop.f32.mrf.mxu0
    %v1667 = vadd.f32 0.0, %v1666
    %1668 = vdwg.mxu0
    %1669 = vmatpush.bf16.msra.mxu0 %v560
    %1670 = vmatpush.bf16.msra.mxu0 %v557
    %1671 = vmatpush.bf16.msra.mxu0 %v554
    %1672 = vmatpush.bf16.msra.mxu0 %v551
    %1673 = vmatpush.bf16.msra.mxu0 %v548
    %1674 = vmatpush.bf16.msra.mxu0 %v545
    %1675 = vmatpush.bf16.msra.mxu0 %v542
    %1676 = vmatpush.bf16.msra.mxu0 %v539
    %1677 = vmatmul.bf16.gmra.mxu0 %v1640
    %v1678 = vpop.f32.mrf.mxu0
    %v1679 = vadd.f32 0.0, %v1678
    %v1680 = vpop.f32.mrf.mxu0
    %v1681 = vadd.f32 0.0, %v1680
    %1682 = vdwg.mxu0
    %v1683 = vadd.f32 %v1634, %v1651
    %v1684 = vadd.f32 %v1637, %v1653
    %v1685 = vxor.u32 %v1683, 2147483648
    %v1686 = vxor.u32 %v1684, 2147483648
    %v1687 = vmul.f32 %v1685, 1.442695
    %v1688 = vpow.pop %v1687
    %v1689 = vmul.f32 %v1686, 1.442695
    %v1690 = vpow.pop %v1689
    %v1691 = vadd.f32 %v1688, 1.0
    %v1692 = vadd.f32 %v1690, 1.0
    %v1693 = vrcp.pop %v1691
    %v1694 = vmul.f32 %v1691, %v1693
    %v1695 = vsub.f32 1.0, %v1694
    %v1696 = vmul.f32 %v1693, %v1695
    %v1697 = vadd.f32 %v1693, %v1696
    %vm1698 = vweird.f32 %v1691
    %vm1699 = vweird.f32 %v1693
    %vm1700 = vmor %vm1698, %vm1699
    %v1701 = vsel %vm1700, %v1693, %v1697
    %v1702 = vand.u32 2147483647, %v1691
    %vm1703 = vcmp.eq.f32.partialorder %v1702, 8.507059e+37
    %v1704 = vand.u32 %v1691, 2147483648
    %v1705 = vor.u32 1.1754944e-38, %v1704
    %v1706 = vsel %vm1703, %v1705, %v1701
    %v1707 = vmul.f32 1.0, %v1706
    %v1708 = vrcp.pop %v1692
    %v1709 = vmul.f32 %v1692, %v1708
    %v1710 = vsub.f32 1.0, %v1709
    %v1711 = vmul.f32 %v1708, %v1710
    %v1712 = vadd.f32 %v1708, %v1711
    %vm1713 = vweird.f32 %v1692
    %vm1714 = vweird.f32 %v1708
    %vm1715 = vmor %vm1713, %vm1714
    %v1716 = vsel %vm1715, %v1708, %v1712
    %v1717 = vand.u32 2147483647, %v1692
    %vm1718 = vcmp.eq.f32.partialorder %v1717, 8.507059e+37
    %v1719 = vand.u32 %v1692, 2147483648
    %v1720 = vor.u32 1.1754944e-38, %v1719
    %v1721 = vsel %vm1718, %v1720, %v1716
    %v1722 = vmul.f32 1.0, %v1721
    %v1723 = vadd.f32 %v1635, %v1665
    %v1724 = vadd.f32 %v1638, %v1667
    %v1725 = vxor.u32 %v1723, 2147483648
    %v1726 = vxor.u32 %v1724, 2147483648
    %v1727 = vmul.f32 %v1725, 1.442695
    %v1728 = vpow.pop %v1727
    %v1729 = vmul.f32 %v1726, 1.442695
    %v1730 = vpow.pop %v1729
    %v1731 = vadd.f32 %v1728, 1.0
    %v1732 = vadd.f32 %v1730, 1.0
    %v1733 = vrcp.pop %v1731
    %v1734 = vmul.f32 %v1731, %v1733
    %v1735 = vsub.f32 1.0, %v1734
    %v1736 = vmul.f32 %v1733, %v1735
    %v1737 = vadd.f32 %v1733, %v1736
    %vm1738 = vweird.f32 %v1731
    %vm1739 = vweird.f32 %v1733
    %vm1740 = vmor %vm1738, %vm1739
    %v1741 = vsel %vm1740, %v1733, %v1737
    %v1742 = vand.u32 2147483647, %v1731
    %vm1743 = vcmp.eq.f32.partialorder %v1742, 8.507059e+37
    %v1744 = vand.u32 %v1731, 2147483648
    %v1745 = vor.u32 1.1754944e-38, %v1744
    %v1746 = vsel %vm1743, %v1745, %v1741
    %v1747 = vmul.f32 1.0, %v1746
    %v1748 = vrcp.pop %v1732
    %v1749 = vmul.f32 %v1732, %v1748
    %v1750 = vsub.f32 1.0, %v1749
    %v1751 = vmul.f32 %v1748, %v1750
    %v1752 = vadd.f32 %v1748, %v1751
    %vm1753 = vweird.f32 %v1732
    %vm1754 = vweird.f32 %v1748
    %vm1755 = vmor %vm1753, %vm1754
    %v1756 = vsel %vm1755, %v1748, %v1752
    %v1757 = vand.u32 2147483647, %v1732
    %vm1758 = vcmp.eq.f32.partialorder %v1757, 8.507059e+37
    %v1759 = vand.u32 %v1732, 2147483648
    %v1760 = vor.u32 1.1754944e-38, %v1759
    %v1761 = vsel %vm1758, %v1760, %v1756
    %v1762 = vmul.f32 1.0, %v1761
    %v1763 = vadd.f32 %v1679, %v443
    %v1764 = vadd.f32 %v1681, %v443
    %v1765 = vmul.f32 %v1707, %v1763
    %v1766 = vmul.f32 %v1722, %v1764
    %v1767 = vadd.f32 %v1636, %v1765
    %v1768 = vadd.f32 %v1639, %v1766
    %v1769 = vtanh.pop %v1767
    %v1770 = vtanh.pop %v1768
    %v1771 = vsub.f32 1.0, %v1747
    %v1772 = vsub.f32 1.0, %v1762
    %v1773 = vmul.f32 %v1771, %v1769
    %v1774 = vmul.f32 %v1772, %v1770
    %v1775 = vmul.f32 %v1747, %v1626
    %v1776 = vmul.f32 %v1762, %v1627
    %v1777 = vadd.f32 %v1773, %v1775
    %v1778 = vadd.f32 %v1774, %v1776
    %s1779 = scalar_lea.vmem [#allocation3], 112
    %1780 = vst [vmem:[%s1779] sm:$0xff] %v1777
    %1781 = vst [vmem:[%s1779 + $0x8] sm:$0xff] %v1778
    %1782 = vst [vmem:[#allocation16] sm:$0xff] %v1777
    %1783 = vst [vmem:[#allocation16 + $0x8] sm:$0xff] %v1778
    %v1784 = vld [vmem:[#allocation3] sm:$0xff]
    %v1785 = vld [vmem:[#allocation3 + $0x8] sm:$0xff]
    %v1786 = vld [vmem:[#allocation3 + $0x10] sm:$0xff]
    %v1787 = vld [vmem:[#allocation3 + $0x18] sm:$0xff]
    %v1788 = vld [vmem:[#allocation3 + $0x20] sm:$0xff]
    %v1789 = vld [vmem:[#allocation3 + $0x28] sm:$0xff]
    %v1790 = vld [vmem:[#allocation3 + $0x30] sm:$0xff]
    %v1791 = vld [vmem:[#allocation3 + $0x38] sm:$0xff]
    %v1792 = vld [vmem:[#allocation3 + $0x40] sm:$0xff]
    %v1793 = vld [vmem:[#allocation3 + $0x48] sm:$0xff]
    %v1794 = vld [vmem:[#allocation3 + $0x50] sm:$0xff]
    %v1795 = vld [vmem:[#allocation3 + $0x58] sm:$0xff]
    %v1796 = vld [vmem:[#allocation3 + $0x60] sm:$0xff]
    %v1797 = vld [vmem:[#allocation3 + $0x68] sm:$0xff]
    %v1798 = vld [vmem:[#allocation3 + $0x70] sm:$0xff]
    %v1799 = vld [vmem:[#allocation3 + $0x78] sm:$0xff]
    %v1800 = vpack.c.bf16 %v1785, %v1784
    %v1801 = vpack.c.bf16 %v1787, %v1786
    %v1802 = vpack.c.bf16 %v1789, %v1788
    %v1803 = vpack.c.bf16 %v1791, %v1790
    %v1804 = vpack.c.bf16 %v1793, %v1792
    %v1805 = vpack.c.bf16 %v1795, %v1794
    %v1806 = vpack.c.bf16 %v1797, %v1796
    %v1807 = vpack.c.bf16 %v1799, %v1798
    %v1808 = vld [vmem:[#allocation12] sm:$0xff]
    %v1809 = vld [vmem:[#allocation12 + $0x8] sm:$0xf]
    %v1810 = vld [vmem:[#allocation12 + $0xc] sm:$0xff]
    %v1811 = vld [vmem:[#allocation12 + $0x14] sm:$0xf]
    %v1812 = vld [vmem:[#allocation12 + $0x18] sm:$0xff]
    %v1813 = vld [vmem:[#allocation12 + $0x20] sm:$0xf]
    %v1814 = vld [vmem:[#allocation12 + $0x24] sm:$0xff]
    %v1815 = vld [vmem:[#allocation12 + $0x2c] sm:$0xf]
    %v1816 = vld [vmem:[#allocation12 + $0x30] sm:$0xff]
    %v1817 = vld [vmem:[#allocation12 + $0x38] sm:$0xf]
    %v1818 = vld [vmem:[#allocation12 + $0x3c] sm:$0xff]
    %v1819 = vld [vmem:[#allocation12 + $0x44] sm:$0xf]
    %v1820 = vld [vmem:[#allocation12 + $0x48] sm:$0xff]
    %v1821 = vld [vmem:[#allocation12 + $0x50] sm:$0xf]
    %v1822 = vld [vmem:[#allocation12 + $0x54] sm:$0xff]
    %v1823 = vld [vmem:[#allocation12 + $0x5c] sm:$0xf]
    %v1824 = vld [vmem:[#allocation12 + $0x60] sm:$0xff]
    %v1825 = vld [vmem:[#allocation12 + $0x68] sm:$0xf]
    %v1826 = vld [vmem:[#allocation12 + $0x6c] sm:$0xff]
    %v1827 = vld [vmem:[#allocation12 + $0x74] sm:$0xf]
    %v1828 = vld [vmem:[#allocation12 + $0x78] sm:$0xff]
    %v1829 = vld [vmem:[#allocation12 + $0x80] sm:$0xf]
    %v1830 = vld [vmem:[#allocation12 + $0x84] sm:$0xff]
    %v1831 = vld [vmem:[#allocation12 + $0x8c] sm:$0xf]
    %v1832 = vld [vmem:[#allocation12 + $0x90] sm:$0xff]
    %v1833 = vld [vmem:[#allocation12 + $0x98] sm:$0xf]
    %v1834 = vld [vmem:[#allocation12 + $0x9c] sm:$0xff]
    %v1835 = vld [vmem:[#allocation12 + $0xa4] sm:$0xf]
    %v1836 = vld [vmem:[#allocation12 + $0xa8] sm:$0xff]
    %v1837 = vld [vmem:[#allocation12 + $0xb0] sm:$0xf]
    %v1838 = vld [vmem:[#allocation12 + $0xb4] sm:$0xff]
    %v1839 = vld [vmem:[#allocation12 + $0xbc] sm:$0xf]
    %v1840 = vld [vmem:[%s6] sm:$0x7]
    %v1842 = vperm.slane %v1840, 0
    %v1843 = vperm.slane %v1840, 1
    %v1844 = vperm.slane %v1840, 2
    %v1880 = vunpack.c.l.b16 %v1808
    %v1881 = vunpack.c.h.b16 %v1808
    %v1882 = vunpack.c.l.b16 %v1809
    %v1883 = vunpack.c.l.b16 %v1810
    %v1884 = vunpack.c.h.b16 %v1810
    %v1885 = vunpack.c.l.b16 %v1811
    %v1886 = vunpack.c.l.b16 %v1812
    %v1887 = vunpack.c.h.b16 %v1812
    %v1888 = vunpack.c.l.b16 %v1813
    %v1889 = vunpack.c.l.b16 %v1814
    %v1890 = vunpack.c.h.b16 %v1814
    %v1891 = vunpack.c.l.b16 %v1815
    %v1892 = vunpack.c.l.b16 %v1816
    %v1893 = vunpack.c.h.b16 %v1816
    %v1894 = vunpack.c.l.b16 %v1817
    %v1895 = vunpack.c.l.b16 %v1818
    %v1896 = vunpack.c.h.b16 %v1818
    %v1897 = vunpack.c.l.b16 %v1819
    %v1898 = vunpack.c.l.b16 %v1820
    %v1899 = vunpack.c.h.b16 %v1820
    %v1900 = vunpack.c.l.b16 %v1821
    %v1901 = vunpack.c.l.b16 %v1822
    %v1902 = vunpack.c.h.b16 %v1822
    %v1903 = vunpack.c.l.b16 %v1823
    %v1904 = vunpack.c.l.b16 %v1824
    %v1905 = vunpack.c.h.b16 %v1824
    %v1906 = vunpack.c.l.b16 %v1825
    %v1907 = vunpack.c.l.b16 %v1826
    %v1908 = vunpack.c.h.b16 %v1826
    %v1909 = vunpack.c.l.b16 %v1827
    %v1910 = vunpack.c.l.b16 %v1828
    %v1911 = vunpack.c.h.b16 %v1828
    %v1912 = vunpack.c.l.b16 %v1829
    %v1913 = vunpack.c.l.b16 %v1830
    %v1914 = vunpack.c.h.b16 %v1830
    %v1915 = vunpack.c.l.b16 %v1831
    %v1916 = vunpack.c.l.b16 %v1832
    %v1917 = vunpack.c.h.b16 %v1832
    %v1918 = vunpack.c.l.b16 %v1833
    %v1919 = vunpack.c.l.b16 %v1834
    %v1920 = vunpack.c.h.b16 %v1834
    %v1921 = vunpack.c.l.b16 %v1835
    %v1922 = vunpack.c.l.b16 %v1836
    %v1923 = vunpack.c.h.b16 %v1836
    %v1924 = vunpack.c.l.b16 %v1837
    %v1925 = vunpack.c.l.b16 %v1838
    %v1926 = vunpack.c.h.b16 %v1838
    %v1927 = vunpack.c.l.b16 %v1839
    %v1928 = vpack.c.b16 %v1883, %v1880
    %v1929 = vpack.c.b16 %v1884, %v1881
    %v1930 = vpack.c.b16 %v1885, %v1882
    %v1931 = vpack.c.b16 %v1889, %v1886
    %v1932 = vpack.c.b16 %v1890, %v1887
    %v1933 = vpack.c.b16 %v1891, %v1888
    %v1934 = vpack.c.b16 %v1895, %v1892
    %v1935 = vpack.c.b16 %v1896, %v1893
    %v1936 = vpack.c.b16 %v1897, %v1894
    %v1937 = vpack.c.b16 %v1901, %v1898
    %v1938 = vpack.c.b16 %v1902, %v1899
    %v1939 = vpack.c.b16 %v1903, %v1900
    %v1940 = vpack.c.b16 %v1907, %v1904
    %v1941 = vpack.c.b16 %v1908, %v1905
    %v1942 = vpack.c.b16 %v1909, %v1906
    %v1943 = vpack.c.b16 %v1913, %v1910
    %v1944 = vpack.c.b16 %v1914, %v1911
    %v1945 = vpack.c.b16 %v1915, %v1912
    %v1946 = vpack.c.b16 %v1919, %v1916
    %v1947 = vpack.c.b16 %v1920, %v1917
    %v1948 = vpack.c.b16 %v1921, %v1918
    %v1949 = vpack.c.b16 %v1925, %v1922
    %v1950 = vpack.c.b16 %v1926, %v1923
    %v1951 = vpack.c.b16 %v1927, %v1924
    %1976 = vmatpush.bf16.msra.mxu0 %v1949
    %1977 = vmatpush.bf16.msra.mxu0 %v1946
    %1978 = vmatpush.bf16.msra.mxu0 %v1943
    %1979 = vmatpush.bf16.msra.mxu0 %v1940
    %1980 = vmatpush.bf16.msra.mxu0 %v1937
    %1981 = vmatpush.bf16.msra.mxu0 %v1934
    %1982 = vmatpush.bf16.msra.mxu0 %v1931
    %1983 = vmatpush.bf16.msra.mxu0 %v1928
    %1984 = vmatmul.bf16.gmra.mxu0 %v1800
    %v1985 = vpop.f32.mrf.mxu0
    %v1986 = vadd.f32 %v1842, %v1985
    %v1987 = vpop.f32.mrf.mxu0
    %v1988 = vadd.f32 %v1842, %v1987
    %1989 = vmatmul.bf16.gmra.mxu0 %v1801
    %v1990 = vpop.f32.mrf.mxu0
    %v1991 = vadd.f32 %v1842, %v1990
    %v1992 = vpop.f32.mrf.mxu0
    %v1993 = vadd.f32 %v1842, %v1992
    %1994 = vmatmul.bf16.gmra.mxu0 %v1802
    %v1995 = vpop.f32.mrf.mxu0
    %v1996 = vadd.f32 %v1842, %v1995
    %v1997 = vpop.f32.mrf.mxu0
    %v1998 = vadd.f32 %v1842, %v1997
    %1999 = vmatmul.bf16.gmra.mxu0 %v1803
    %v2000 = vpop.f32.mrf.mxu0
    %v2001 = vadd.f32 %v1842, %v2000
    %v2002 = vpop.f32.mrf.mxu0
    %v2003 = vadd.f32 %v1842, %v2002
    %2004 = vmatmul.bf16.gmra.mxu0 %v1804
    %v2005 = vpop.f32.mrf.mxu0
    %v2006 = vadd.f32 %v1842, %v2005
    %v2007 = vpop.f32.mrf.mxu0
    %v2008 = vadd.f32 %v1842, %v2007
    %2009 = vmatmul.bf16.gmra.mxu0 %v1805
    %v2010 = vpop.f32.mrf.mxu0
    %v2011 = vadd.f32 %v1842, %v2010
    %v2012 = vpop.f32.mrf.mxu0
    %v2013 = vadd.f32 %v1842, %v2012
    %2014 = vmatmul.bf16.gmra.mxu0 %v1806
    %v2015 = vpop.f32.mrf.mxu0
    %v2016 = vadd.f32 %v1842, %v2015
    %v2017 = vpop.f32.mrf.mxu0
    %v2018 = vadd.f32 %v1842, %v2017
    %2019 = vmatmul.bf16.gmra.mxu0 %v1807
    %v2020 = vpop.f32.mrf.mxu0
    %v2021 = vadd.f32 %v1842, %v2020
    %v2022 = vpop.f32.mrf.mxu0
    %v2023 = vadd.f32 %v1842, %v2022
    %2024 = vdwg.mxu0
    %2025 = vmatpush.bf16.msra.mxu0 %v1950
    %2026 = vmatpush.bf16.msra.mxu0 %v1947
    %2027 = vmatpush.bf16.msra.mxu0 %v1944
    %2028 = vmatpush.bf16.msra.mxu0 %v1941
    %2029 = vmatpush.bf16.msra.mxu0 %v1938
    %2030 = vmatpush.bf16.msra.mxu0 %v1935
    %2031 = vmatpush.bf16.msra.mxu0 %v1932
    %2032 = vmatpush.bf16.msra.mxu0 %v1929
    %2033 = vmatmul.bf16.gmra.mxu0 %v1800
    %v2034 = vpop.f32.mrf.mxu0
    %v2035 = vadd.f32 %v1843, %v2034
    %v2036 = vpop.f32.mrf.mxu0
    %v2037 = vadd.f32 %v1843, %v2036
    %2038 = vmatmul.bf16.gmra.mxu0 %v1801
    %v2039 = vpop.f32.mrf.mxu0
    %v2040 = vadd.f32 %v1843, %v2039
    %v2041 = vpop.f32.mrf.mxu0
    %v2042 = vadd.f32 %v1843, %v2041
    %2043 = vmatmul.bf16.gmra.mxu0 %v1802
    %v2044 = vpop.f32.mrf.mxu0
    %v2045 = vadd.f32 %v1843, %v2044
    %v2046 = vpop.f32.mrf.mxu0
    %v2047 = vadd.f32 %v1843, %v2046
    %2048 = vmatmul.bf16.gmra.mxu0 %v1803
    %v2049 = vpop.f32.mrf.mxu0
    %v2050 = vadd.f32 %v1843, %v2049
    %v2051 = vpop.f32.mrf.mxu0
    %v2052 = vadd.f32 %v1843, %v2051
    %2053 = vmatmul.bf16.gmra.mxu0 %v1804
    %v2054 = vpop.f32.mrf.mxu0
    %v2055 = vadd.f32 %v1843, %v2054
    %v2056 = vpop.f32.mrf.mxu0
    %v2057 = vadd.f32 %v1843, %v2056
    %2058 = vmatmul.bf16.gmra.mxu0 %v1805
    %v2059 = vpop.f32.mrf.mxu0
    %v2060 = vadd.f32 %v1843, %v2059
    %v2061 = vpop.f32.mrf.mxu0
    %v2062 = vadd.f32 %v1843, %v2061
    %2063 = vmatmul.bf16.gmra.mxu0 %v1806
    %v2064 = vpop.f32.mrf.mxu0
    %v2065 = vadd.f32 %v1843, %v2064
    %v2066 = vpop.f32.mrf.mxu0
    %v2067 = vadd.f32 %v1843, %v2066
    %2068 = vmatmul.bf16.gmra.mxu0 %v1807
    %v2069 = vpop.f32.mrf.mxu0
    %v2070 = vadd.f32 %v1843, %v2069
    %v2071 = vpop.f32.mrf.mxu0
    %v2072 = vadd.f32 %v1843, %v2071
    %2073 = vdwg.mxu0
    %2074 = vmatpush.bf16.msra.mxu0 %v1951
    %2075 = vmatpush.bf16.msra.mxu0 %v1948
    %2076 = vmatpush.bf16.msra.mxu0 %v1945
    %2077 = vmatpush.bf16.msra.mxu0 %v1942
    %2078 = vmatpush.bf16.msra.mxu0 %v1939
    %2079 = vmatpush.bf16.msra.mxu0 %v1936
    %2080 = vmatpush.bf16.msra.mxu0 %v1933
    %2081 = vmatpush.bf16.msra.mxu0 %v1930
    %2082 = vmatmul.bf16.gmra.mxu0 %v1800
    %v2083 = vpop.f32.mrf.mxu0
    %v2084 = vadd.f32 %v1844, %v2083
    %v2085 = vpop.f32.mrf.mxu0
    %v2086 = vadd.f32 %v1844, %v2085
    %2087 = vmatmul.bf16.gmra.mxu0 %v1801
    %v2088 = vpop.f32.mrf.mxu0
    %v2089 = vadd.f32 %v1844, %v2088
    %v2090 = vpop.f32.mrf.mxu0
    %v2091 = vadd.f32 %v1844, %v2090
    %2092 = vmatmul.bf16.gmra.mxu0 %v1802
    %v2093 = vpop.f32.mrf.mxu0
    %v2094 = vadd.f32 %v1844, %v2093
    %v2095 = vpop.f32.mrf.mxu0
    %v2096 = vadd.f32 %v1844, %v2095
    %2097 = vmatmul.bf16.gmra.mxu0 %v1803
    %v2098 = vpop.f32.mrf.mxu0
    %v2099 = vadd.f32 %v1844, %v2098
    %v2100 = vpop.f32.mrf.mxu0
    %v2101 = vadd.f32 %v1844, %v2100
    %2102 = vmatmul.bf16.gmra.mxu0 %v1804
    %v2103 = vpop.f32.mrf.mxu0
    %v2104 = vadd.f32 %v1844, %v2103
    %v2105 = vpop.f32.mrf.mxu0
    %v2106 = vadd.f32 %v1844, %v2105
    %2107 = vmatmul.bf16.gmra.mxu0 %v1805
    %v2108 = vpop.f32.mrf.mxu0
    %v2109 = vadd.f32 %v1844, %v2108
    %v2110 = vpop.f32.mrf.mxu0
    %v2111 = vadd.f32 %v1844, %v2110
    %2112 = vmatmul.bf16.gmra.mxu0 %v1806
    %v2113 = vpop.f32.mrf.mxu0
    %v2114 = vadd.f32 %v1844, %v2113
    %v2115 = vpop.f32.mrf.mxu0
    %v2116 = vadd.f32 %v1844, %v2115
    %2117 = vmatmul.bf16.gmra.mxu0 %v1807
    %v2118 = vpop.f32.mrf.mxu0
    %v2119 = vadd.f32 %v1844, %v2118
    %v2120 = vpop.f32.mrf.mxu0
    %v2121 = vadd.f32 %v1844, %v2120
    %2122 = vdwg.mxu0
    %2123 = vst [vmem:[#allocation2] sm:$0xff] %v1986
    %2124 = vst [vmem:[#allocation2 + $0x8] sm:$0xff] %v2035
    %2125 = vst [vmem:[#allocation2 + $0x10] sm:$0xff] %v2084
    %2126 = vst [vmem:[#allocation2 + $0x18] sm:$0xff] %v1988
    %2127 = vst [vmem:[#allocation2 + $0x20] sm:$0xff] %v2037
    %2128 = vst [vmem:[#allocation2 + $0x28] sm:$0xff] %v2086
    %2129 = vst [vmem:[#allocation2 + $0x30] sm:$0xff] %v1991
    %2130 = vst [vmem:[#allocation2 + $0x38] sm:$0xff] %v2040
    %2131 = vst [vmem:[#allocation2 + $0x40] sm:$0xff] %v2089
    %2132 = vst [vmem:[#allocation2 + $0x48] sm:$0xff] %v1993
    %2133 = vst [vmem:[#allocation2 + $0x50] sm:$0xff] %v2042
    %2134 = vst [vmem:[#allocation2 + $0x58] sm:$0xff] %v2091
    %2135 = vst [vmem:[#allocation2 + $0x60] sm:$0xff] %v1996
    %2136 = vst [vmem:[#allocation2 + $0x68] sm:$0xff] %v2045
    %2137 = vst [vmem:[#allocation2 + $0x70] sm:$0xff] %v2094
    %2138 = vst [vmem:[#allocation2 + $0x78] sm:$0xff] %v1998
    %2139 = vst [vmem:[#allocation2 + $0x80] sm:$0xff] %v2047
    %2140 = vst [vmem:[#allocation2 + $0x88] sm:$0xff] %v2096
    %2141 = vst [vmem:[#allocation2 + $0x90] sm:$0xff] %v2001
    %2142 = vst [vmem:[#allocation2 + $0x98] sm:$0xff] %v2050
    %2143 = vst [vmem:[#allocation2 + $0xa0] sm:$0xff] %v2099
    %2144 = vst [vmem:[#allocation2 + $0xa8] sm:$0xff] %v2003
    %2145 = vst [vmem:[#allocation2 + $0xb0] sm:$0xff] %v2052
    %2146 = vst [vmem:[#allocation2 + $0xb8] sm:$0xff] %v2101
    %2147 = vst [vmem:[#allocation2 + $0xc0] sm:$0xff] %v2006
    %2148 = vst [vmem:[#allocation2 + $0xc8] sm:$0xff] %v2055
    %2149 = vst [vmem:[#allocation2 + $0xd0] sm:$0xff] %v2104
    %2150 = vst [vmem:[#allocation2 + $0xd8] sm:$0xff] %v2008
    %2151 = vst [vmem:[#allocation2 + $0xe0] sm:$0xff] %v2057
    %2152 = vst [vmem:[#allocation2 + $0xe8] sm:$0xff] %v2106
    %2153 = vst [vmem:[#allocation2 + $0xf0] sm:$0xff] %v2011
    %2154 = vst [vmem:[#allocation2 + $0xf8] sm:$0xff] %v2060
    %2155 = vst [vmem:[#allocation2 + $0x100] sm:$0xff] %v2109
    %2156 = vst [vmem:[#allocation2 + $0x108] sm:$0xff] %v2013
    %2157 = vst [vmem:[#allocation2 + $0x110] sm:$0xff] %v2062
    %2158 = vst [vmem:[#allocation2 + $0x118] sm:$0xff] %v2111
    %2159 = vst [vmem:[#allocation2 + $0x120] sm:$0xff] %v2016
    %2160 = vst [vmem:[#allocation2 + $0x128] sm:$0xff] %v2065
    %2161 = vst [vmem:[#allocation2 + $0x130] sm:$0xff] %v2114
    %2162 = vst [vmem:[#allocation2 + $0x138] sm:$0xff] %v2018
    %2163 = vst [vmem:[#allocation2 + $0x140] sm:$0xff] %v2067
    %2164 = vst [vmem:[#allocation2 + $0x148] sm:$0xff] %v2116
    %2165 = vst [vmem:[#allocation2 + $0x150] sm:$0xff] %v2021
    %2166 = vst [vmem:[#allocation2 + $0x158] sm:$0xff] %v2070
    %2167 = vst [vmem:[#allocation2 + $0x160] sm:$0xff] %v2119
    %2168 = vst [vmem:[#allocation2 + $0x168] sm:$0xff] %v2023
    %2169 = vst [vmem:[#allocation2 + $0x170] sm:$0xff] %v2072
    %2170 = vst [vmem:[#allocation2 + $0x178] sm:$0xff] %v2121
    %v2171 = vld [vmem:[#allocation13] sm:$0xff]
    %v2172 = vld [vmem:[#allocation13 + $0x8] sm:$0xf]
    %v2173 = vld [vmem:[#allocation13 + $0xc] sm:$0xff]
    %v2174 = vld [vmem:[#allocation13 + $0x14] sm:$0xf]
    %v2175 = vld [vmem:[#allocation13 + $0x18] sm:$0xff]
    %v2176 = vld [vmem:[#allocation13 + $0x20] sm:$0xf]
    %v2177 = vld [vmem:[#allocation13 + $0x24] sm:$0xff]
    %v2178 = vld [vmem:[#allocation13 + $0x2c] sm:$0xf]
    %v2179 = vld [vmem:[#allocation13 + $0x30] sm:$0xff]
    %v2180 = vld [vmem:[#allocation13 + $0x38] sm:$0xf]
    %v2181 = vld [vmem:[#allocation13 + $0x3c] sm:$0xff]
    %v2182 = vld [vmem:[#allocation13 + $0x44] sm:$0xf]
    %v2183 = vld [vmem:[#allocation13 + $0x48] sm:$0xff]
    %v2184 = vld [vmem:[#allocation13 + $0x50] sm:$0xf]
    %v2185 = vld [vmem:[#allocation13 + $0x54] sm:$0xff]
    %v2186 = vld [vmem:[#allocation13 + $0x5c] sm:$0xf]
    %v2187 = vld [vmem:[#allocation13 + $0x60] sm:$0xff]
    %v2188 = vld [vmem:[#allocation13 + $0x68] sm:$0xf]
    %v2189 = vld [vmem:[#allocation13 + $0x6c] sm:$0xff]
    %v2190 = vld [vmem:[#allocation13 + $0x74] sm:$0xf]
    %v2191 = vld [vmem:[#allocation13 + $0x78] sm:$0xff]
    %v2192 = vld [vmem:[#allocation13 + $0x80] sm:$0xf]
    %v2193 = vld [vmem:[#allocation13 + $0x84] sm:$0xff]
    %v2194 = vld [vmem:[#allocation13 + $0x8c] sm:$0xf]
    %v2195 = vld [vmem:[#allocation13 + $0x90] sm:$0xff]
    %v2196 = vld [vmem:[#allocation13 + $0x98] sm:$0xf]
    %v2197 = vld [vmem:[#allocation13 + $0x9c] sm:$0xff]
    %v2198 = vld [vmem:[#allocation13 + $0xa4] sm:$0xf]
    %v2199 = vld [vmem:[#allocation13 + $0xa8] sm:$0xff]
    %v2200 = vld [vmem:[#allocation13 + $0xb0] sm:$0xf]
    %v2201 = vld [vmem:[#allocation13 + $0xb4] sm:$0xff]
    %v2202 = vld [vmem:[#allocation13 + $0xbc] sm:$0xf]
    %v2203 = vld [vmem:[%s8] sm:$0x1]
    %v2205 = vperm.slane %v2203, 0
    %s2207 = scalar_lea.vmem [#allocation16], 16
    %v2208 = vld [vmem:[%s2207] sm:$0xff]
    %v2209 = vld [vmem:[%s2207 + $0x8] sm:$0xff]
    %v2210 = vld [vmem:[%s449] sm:$0xff]
    %v2211 = vld [vmem:[%s449 + $0x8] sm:$0xff]
    %v2212 = vld [vmem:[%s449 + $0x10] sm:$0xff]
    %v2213 = vld [vmem:[%s449 + $0x18] sm:$0xff]
    %v2214 = vld [vmem:[%s449 + $0x20] sm:$0xff]
    %v2215 = vld [vmem:[%s449 + $0x28] sm:$0xff]
    %v2216 = vpack.c.bf16 %v2209, %v2208
    %v2249 = vunpack.c.l.b16 %v2171
    %v2250 = vunpack.c.h.b16 %v2171
    %v2251 = vunpack.c.l.b16 %v2172
    %v2252 = vunpack.c.l.b16 %v2173
    %v2253 = vunpack.c.h.b16 %v2173
    %v2254 = vunpack.c.l.b16 %v2174
    %v2255 = vunpack.c.l.b16 %v2175
    %v2256 = vunpack.c.h.b16 %v2175
    %v2257 = vunpack.c.l.b16 %v2176
    %v2258 = vunpack.c.l.b16 %v2177
    %v2259 = vunpack.c.h.b16 %v2177
    %v2260 = vunpack.c.l.b16 %v2178
    %v2261 = vunpack.c.l.b16 %v2179
    %v2262 = vunpack.c.h.b16 %v2179
    %v2263 = vunpack.c.l.b16 %v2180
    %v2264 = vunpack.c.l.b16 %v2181
    %v2265 = vunpack.c.h.b16 %v2181
    %v2266 = vunpack.c.l.b16 %v2182
    %v2267 = vunpack.c.l.b16 %v2183
    %v2268 = vunpack.c.h.b16 %v2183
    %v2269 = vunpack.c.l.b16 %v2184
    %v2270 = vunpack.c.l.b16 %v2185
    %v2271 = vunpack.c.h.b16 %v2185
    %v2272 = vunpack.c.l.b16 %v2186
    %v2273 = vunpack.c.l.b16 %v2187
    %v2274 = vunpack.c.h.b16 %v2187
    %v2275 = vunpack.c.l.b16 %v2188
    %v2276 = vunpack.c.l.b16 %v2189
    %v2277 = vunpack.c.h.b16 %v2189
    %v2278 = vunpack.c.l.b16 %v2190
    %v2279 = vunpack.c.l.b16 %v2191
    %v2280 = vunpack.c.h.b16 %v2191
    %v2281 = vunpack.c.l.b16 %v2192
    %v2282 = vunpack.c.l.b16 %v2193
    %v2283 = vunpack.c.h.b16 %v2193
    %v2284 = vunpack.c.l.b16 %v2194
    %v2285 = vunpack.c.l.b16 %v2195
    %v2286 = vunpack.c.h.b16 %v2195
    %v2287 = vunpack.c.l.b16 %v2196
    %v2288 = vunpack.c.l.b16 %v2197
    %v2289 = vunpack.c.h.b16 %v2197
    %v2290 = vunpack.c.l.b16 %v2198
    %v2291 = vunpack.c.l.b16 %v2199
    %v2292 = vunpack.c.h.b16 %v2199
    %v2293 = vunpack.c.l.b16 %v2200
    %v2294 = vunpack.c.l.b16 %v2201
    %v2295 = vunpack.c.h.b16 %v2201
    %v2296 = vunpack.c.l.b16 %v2202
    %v2297 = vpack.c.b16 %v2252, %v2249
    %v2298 = vpack.c.b16 %v2253, %v2250
    %v2299 = vpack.c.b16 %v2254, %v2251
    %v2300 = vpack.c.b16 %v2258, %v2255
    %v2301 = vpack.c.b16 %v2259, %v2256
    %v2302 = vpack.c.b16 %v2260, %v2257
    %v2303 = vpack.c.b16 %v2264, %v2261
    %v2304 = vpack.c.b16 %v2265, %v2262
    %v2305 = vpack.c.b16 %v2266, %v2263
    %v2306 = vpack.c.b16 %v2270, %v2267
    %v2307 = vpack.c.b16 %v2271, %v2268
    %v2308 = vpack.c.b16 %v2272, %v2269
    %v2309 = vpack.c.b16 %v2276, %v2273
    %v2310 = vpack.c.b16 %v2277, %v2274
    %v2311 = vpack.c.b16 %v2278, %v2275
    %v2312 = vpack.c.b16 %v2282, %v2279
    %v2313 = vpack.c.b16 %v2283, %v2280
    %v2314 = vpack.c.b16 %v2284, %v2281
    %v2315 = vpack.c.b16 %v2288, %v2285
    %v2316 = vpack.c.b16 %v2289, %v2286
    %v2317 = vpack.c.b16 %v2290, %v2287
    %v2318 = vpack.c.b16 %v2294, %v2291
    %v2319 = vpack.c.b16 %v2295, %v2292
    %v2320 = vpack.c.b16 %v2296, %v2293
    %2345 = vmatpush.bf16.msra.mxu0 %v2318
    %2346 = vmatpush.bf16.msra.mxu0 %v2315
    %2347 = vmatpush.bf16.msra.mxu0 %v2312
    %2348 = vmatpush.bf16.msra.mxu0 %v2309
    %2349 = vmatpush.bf16.msra.mxu0 %v2306
    %2350 = vmatpush.bf16.msra.mxu0 %v2303
    %2351 = vmatpush.bf16.msra.mxu0 %v2300
    %2352 = vmatpush.bf16.msra.mxu0 %v2297
    %2353 = vmatmul.bf16.gmra.mxu0 %v2216
    %v2354 = vpop.f32.mrf.mxu0
    %v2355 = vadd.f32 0.0, %v2354
    %v2356 = vpop.f32.mrf.mxu0
    %v2357 = vadd.f32 0.0, %v2356
    %2358 = vdwg.mxu0
    %2359 = vmatpush.bf16.msra.mxu0 %v2319
    %2360 = vmatpush.bf16.msra.mxu0 %v2316
    %2361 = vmatpush.bf16.msra.mxu0 %v2313
    %2362 = vmatpush.bf16.msra.mxu0 %v2310
    %2363 = vmatpush.bf16.msra.mxu0 %v2307
    %2364 = vmatpush.bf16.msra.mxu0 %v2304
    %2365 = vmatpush.bf16.msra.mxu0 %v2301
    %2366 = vmatpush.bf16.msra.mxu0 %v2298
    %2367 = vmatmul.bf16.gmra.mxu0 %v2216
    %v2368 = vpop.f32.mrf.mxu0
    %v2369 = vadd.f32 0.0, %v2368
    %v2370 = vpop.f32.mrf.mxu0
    %v2371 = vadd.f32 0.0, %v2370
    %2372 = vdwg.mxu0
    %2373 = vmatpush.bf16.msra.mxu0 %v2320
    %2374 = vmatpush.bf16.msra.mxu0 %v2317
    %2375 = vmatpush.bf16.msra.mxu0 %v2314
    %2376 = vmatpush.bf16.msra.mxu0 %v2311
    %2377 = vmatpush.bf16.msra.mxu0 %v2308
    %2378 = vmatpush.bf16.msra.mxu0 %v2305
    %2379 = vmatpush.bf16.msra.mxu0 %v2302
    %2380 = vmatpush.bf16.msra.mxu0 %v2299
    %2381 = vmatmul.bf16.gmra.mxu0 %v2216
    %v2382 = vpop.f32.mrf.mxu0
    %v2383 = vadd.f32 0.0, %v2382
    %v2384 = vpop.f32.mrf.mxu0
    %v2385 = vadd.f32 0.0, %v2384
    %2386 = vdwg.mxu0
    %v2387 = vadd.f32 %v2210, %v2355
    %v2388 = vadd.f32 %v2213, %v2357
    %v2389 = vxor.u32 %v2387, 2147483648
    %v2390 = vxor.u32 %v2388, 2147483648
    %v2391 = vmul.f32 %v2389, 1.442695
    %v2392 = vpow.pop %v2391
    %v2393 = vmul.f32 %v2390, 1.442695
    %v2394 = vpow.pop %v2393
    %v2395 = vadd.f32 %v2392, 1.0
    %v2396 = vadd.f32 %v2394, 1.0
    %v2397 = vrcp.pop %v2395
    %v2398 = vmul.f32 %v2395, %v2397
    %v2399 = vsub.f32 1.0, %v2398
    %v2400 = vmul.f32 %v2397, %v2399
    %v2401 = vadd.f32 %v2397, %v2400
    %vm2402 = vweird.f32 %v2395
    %vm2403 = vweird.f32 %v2397
    %vm2404 = vmor %vm2402, %vm2403
    %v2405 = vsel %vm2404, %v2397, %v2401
    %v2406 = vand.u32 2147483647, %v2395
    %vm2407 = vcmp.eq.f32.partialorder %v2406, 8.507059e+37
    %v2408 = vand.u32 %v2395, 2147483648
    %v2409 = vor.u32 1.1754944e-38, %v2408
    %v2410 = vsel %vm2407, %v2409, %v2405
    %v2411 = vmul.f32 1.0, %v2410
    %v2412 = vrcp.pop %v2396
    %v2413 = vmul.f32 %v2396, %v2412
    %v2414 = vsub.f32 1.0, %v2413
    %v2415 = vmul.f32 %v2412, %v2414
    %v2416 = vadd.f32 %v2412, %v2415
    %vm2417 = vweird.f32 %v2396
    %vm2418 = vweird.f32 %v2412
    %vm2419 = vmor %vm2417, %vm2418
    %v2420 = vsel %vm2419, %v2412, %v2416
    %v2421 = vand.u32 2147483647, %v2396
    %vm2422 = vcmp.eq.f32.partialorder %v2421, 8.507059e+37
    %v2423 = vand.u32 %v2396, 2147483648
    %v2424 = vor.u32 1.1754944e-38, %v2423
    %v2425 = vsel %vm2422, %v2424, %v2420
    %v2426 = vmul.f32 1.0, %v2425
    %v2427 = vadd.f32 %v2211, %v2369
    %v2428 = vadd.f32 %v2214, %v2371
    %v2429 = vxor.u32 %v2427, 2147483648
    %v2430 = vxor.u32 %v2428, 2147483648
    %v2431 = vmul.f32 %v2429, 1.442695
    %v2432 = vpow.pop %v2431
    %v2433 = vmul.f32 %v2430, 1.442695
    %v2434 = vpow.pop %v2433
    %v2435 = vadd.f32 %v2432, 1.0
    %v2436 = vadd.f32 %v2434, 1.0
    %v2437 = vrcp.pop %v2435
    %v2438 = vmul.f32 %v2435, %v2437
    %v2439 = vsub.f32 1.0, %v2438
    %v2440 = vmul.f32 %v2437, %v2439
    %v2441 = vadd.f32 %v2437, %v2440
    %vm2442 = vweird.f32 %v2435
    %vm2443 = vweird.f32 %v2437
    %vm2444 = vmor %vm2442, %vm2443
    %v2445 = vsel %vm2444, %v2437, %v2441
    %v2446 = vand.u32 2147483647, %v2435
    %vm2447 = vcmp.eq.f32.partialorder %v2446, 8.507059e+37
    %v2448 = vand.u32 %v2435, 2147483648
    %v2449 = vor.u32 1.1754944e-38, %v2448
    %v2450 = vsel %vm2447, %v2449, %v2445
    %v2451 = vmul.f32 1.0, %v2450
    %v2452 = vrcp.pop %v2436
    %v2453 = vmul.f32 %v2436, %v2452
    %v2454 = vsub.f32 1.0, %v2453
    %v2455 = vmul.f32 %v2452, %v2454
    %v2456 = vadd.f32 %v2452, %v2455
    %vm2457 = vweird.f32 %v2436
    %vm2458 = vweird.f32 %v2452
    %vm2459 = vmor %vm2457, %vm2458
    %v2460 = vsel %vm2459, %v2452, %v2456
    %v2461 = vand.u32 2147483647, %v2436
    %vm2462 = vcmp.eq.f32.partialorder %v2461, 8.507059e+37
    %v2463 = vand.u32 %v2436, 2147483648
    %v2464 = vor.u32 1.1754944e-38, %v2463
    %v2465 = vsel %vm2462, %v2464, %v2460
    %v2466 = vmul.f32 1.0, %v2465
    %v2467 = vadd.f32 %v2383, %v2205
    %v2468 = vadd.f32 %v2385, %v2205
    %v2469 = vmul.f32 %v2411, %v2467
    %v2470 = vmul.f32 %v2426, %v2468
    %v2471 = vadd.f32 %v2212, %v2469
    %v2472 = vadd.f32 %v2215, %v2470
    %v2473 = vtanh.pop %v2471
    %v2474 = vtanh.pop %v2472
    %v2475 = vsub.f32 1.0, %v2451
    %v2476 = vsub.f32 1.0, %v2466
    %v2477 = vmul.f32 %v2475, %v2473
    %v2478 = vmul.f32 %v2476, %v2474
    %v2479 = vmul.f32 %v2451, %v2208
    %v2480 = vmul.f32 %v2466, %v2209
    %v2481 = vadd.f32 %v2477, %v2479
    %v2482 = vadd.f32 %v2478, %v2480
    %2483 = vst [vmem:[#allocation15] sm:$0xff] %v2481
    %2484 = vst [vmem:[#allocation15 + $0x8] sm:$0xff] %v2482
    %v2485 = vld [vmem:[%s727] sm:$0xff]
    %v2486 = vld [vmem:[%s727 + $0x8] sm:$0xff]
    %v2487 = vld [vmem:[%s727 + $0x10] sm:$0xff]
    %v2488 = vld [vmem:[%s727 + $0x18] sm:$0xff]
    %v2489 = vld [vmem:[%s727 + $0x20] sm:$0xff]
    %v2490 = vld [vmem:[%s727 + $0x28] sm:$0xff]
    %v2491 = vpack.c.bf16 %v2482, %v2481
    %2492 = vmatpush.bf16.msra.mxu0 %v2318
    %2493 = vmatpush.bf16.msra.mxu0 %v2315
    %2494 = vmatpush.bf16.msra.mxu0 %v2312
    %2495 = vmatpush.bf16.msra.mxu0 %v2309
    %2496 = vmatpush.bf16.msra.mxu0 %v2306
    %2497 = vmatpush.bf16.msra.mxu0 %v2303
    %2498 = vmatpush.bf16.msra.mxu0 %v2300
    %2499 = vmatpush.bf16.msra.mxu0 %v2297
    %2500 = vmatmul.bf16.gmra.mxu0 %v2491
    %v2501 = vpop.f32.mrf.mxu0
    %v2502 = vadd.f32 0.0, %v2501
    %v2503 = vpop.f32.mrf.mxu0
    %v2504 = vadd.f32 0.0, %v2503
    %2505 = vdwg.mxu0
    %2506 = vmatpush.bf16.msra.mxu0 %v2319
    %2507 = vmatpush.bf16.msra.mxu0 %v2316
    %2508 = vmatpush.bf16.msra.mxu0 %v2313
    %2509 = vmatpush.bf16.msra.mxu0 %v2310
    %2510 = vmatpush.bf16.msra.mxu0 %v2307
    %2511 = vmatpush.bf16.msra.mxu0 %v2304
    %2512 = vmatpush.bf16.msra.mxu0 %v2301
    %2513 = vmatpush.bf16.msra.mxu0 %v2298
    %2514 = vmatmul.bf16.gmra.mxu0 %v2491
    %v2515 = vpop.f32.mrf.mxu0
    %v2516 = vadd.f32 0.0, %v2515
    %v2517 = vpop.f32.mrf.mxu0
    %v2518 = vadd.f32 0.0, %v2517
    %2519 = vdwg.mxu0
    %2520 = vmatpush.bf16.msra.mxu0 %v2320
    %2521 = vmatpush.bf16.msra.mxu0 %v2317
    %2522 = vmatpush.bf16.msra.mxu0 %v2314
    %2523 = vmatpush.bf16.msra.mxu0 %v2311
    %2524 = vmatpush.bf16.msra.mxu0 %v2308
    %2525 = vmatpush.bf16.msra.mxu0 %v2305
    %2526 = vmatpush.bf16.msra.mxu0 %v2302
    %2527 = vmatpush.bf16.msra.mxu0 %v2299
    %2528 = vmatmul.bf16.gmra.mxu0 %v2491
    %v2529 = vpop.f32.mrf.mxu0
    %v2530 = vadd.f32 0.0, %v2529
    %v2531 = vpop.f32.mrf.mxu0
    %v2532 = vadd.f32 0.0, %v2531
    %2533 = vdwg.mxu0
    %v2534 = vadd.f32 %v2485, %v2502
    %v2535 = vadd.f32 %v2488, %v2504
    %v2536 = vxor.u32 %v2534, 2147483648
    %v2537 = vxor.u32 %v2535, 2147483648
    %v2538 = vmul.f32 %v2536, 1.442695
    %v2539 = vpow.pop %v2538
    %v2540 = vmul.f32 %v2537, 1.442695
    %v2541 = vpow.pop %v2540
    %v2542 = vadd.f32 %v2539, 1.0
    %v2543 = vadd.f32 %v2541, 1.0
    %v2544 = vrcp.pop %v2542
    %v2545 = vmul.f32 %v2542, %v2544
    %v2546 = vsub.f32 1.0, %v2545
    %v2547 = vmul.f32 %v2544, %v2546
    %v2548 = vadd.f32 %v2544, %v2547
    %vm2549 = vweird.f32 %v2542
    %vm2550 = vweird.f32 %v2544
    %vm2551 = vmor %vm2549, %vm2550
    %v2552 = vsel %vm2551, %v2544, %v2548
    %v2553 = vand.u32 2147483647, %v2542
    %vm2554 = vcmp.eq.f32.partialorder %v2553, 8.507059e+37
    %v2555 = vand.u32 %v2542, 2147483648
    %v2556 = vor.u32 1.1754944e-38, %v2555
    %v2557 = vsel %vm2554, %v2556, %v2552
    %v2558 = vmul.f32 1.0, %v2557
    %v2559 = vrcp.pop %v2543
    %v2560 = vmul.f32 %v2543, %v2559
    %v2561 = vsub.f32 1.0, %v2560
    %v2562 = vmul.f32 %v2559, %v2561
    %v2563 = vadd.f32 %v2559, %v2562
    %vm2564 = vweird.f32 %v2543
    %vm2565 = vweird.f32 %v2559
    %vm2566 = vmor %vm2564, %vm2565
    %v2567 = vsel %vm2566, %v2559, %v2563
    %v2568 = vand.u32 2147483647, %v2543
    %vm2569 = vcmp.eq.f32.partialorder %v2568, 8.507059e+37
    %v2570 = vand.u32 %v2543, 2147483648
    %v2571 = vor.u32 1.1754944e-38, %v2570
    %v2572 = vsel %vm2569, %v2571, %v2567
    %v2573 = vmul.f32 1.0, %v2572
    %v2574 = vadd.f32 %v2486, %v2516
    %v2575 = vadd.f32 %v2489, %v2518
    %v2576 = vxor.u32 %v2574, 2147483648
    %v2577 = vxor.u32 %v2575, 2147483648
    %v2578 = vmul.f32 %v2576, 1.442695
    %v2579 = vpow.pop %v2578
    %v2580 = vmul.f32 %v2577, 1.442695
    %v2581 = vpow.pop %v2580
    %v2582 = vadd.f32 %v2579, 1.0
    %v2583 = vadd.f32 %v2581, 1.0
    %v2584 = vrcp.pop %v2582
    %v2585 = vmul.f32 %v2582, %v2584
    %v2586 = vsub.f32 1.0, %v2585
    %v2587 = vmul.f32 %v2584, %v2586
    %v2588 = vadd.f32 %v2584, %v2587
    %vm2589 = vweird.f32 %v2582
    %vm2590 = vweird.f32 %v2584
    %vm2591 = vmor %vm2589, %vm2590
    %v2592 = vsel %vm2591, %v2584, %v2588
    %v2593 = vand.u32 2147483647, %v2582
    %vm2594 = vcmp.eq.f32.partialorder %v2593, 8.507059e+37
    %v2595 = vand.u32 %v2582, 2147483648
    %v2596 = vor.u32 1.1754944e-38, %v2595
    %v2597 = vsel %vm2594, %v2596, %v2592
    %v2598 = vmul.f32 1.0, %v2597
    %v2599 = vrcp.pop %v2583
    %v2600 = vmul.f32 %v2583, %v2599
    %v2601 = vsub.f32 1.0, %v2600
    %v2602 = vmul.f32 %v2599, %v2601
    %v2603 = vadd.f32 %v2599, %v2602
    %vm2604 = vweird.f32 %v2583
    %vm2605 = vweird.f32 %v2599
    %vm2606 = vmor %vm2604, %vm2605
    %v2607 = vsel %vm2606, %v2599, %v2603
    %v2608 = vand.u32 2147483647, %v2583
    %vm2609 = vcmp.eq.f32.partialorder %v2608, 8.507059e+37
    %v2610 = vand.u32 %v2583, 2147483648
    %v2611 = vor.u32 1.1754944e-38, %v2610
    %v2612 = vsel %vm2609, %v2611, %v2607
    %v2613 = vmul.f32 1.0, %v2612
    %v2614 = vadd.f32 %v2530, %v2205
    %v2615 = vadd.f32 %v2532, %v2205
    %v2616 = vmul.f32 %v2558, %v2614
    %v2617 = vmul.f32 %v2573, %v2615
    %v2618 = vadd.f32 %v2487, %v2616
    %v2619 = vadd.f32 %v2490, %v2617
    %v2620 = vtanh.pop %v2618
    %v2621 = vtanh.pop %v2619
    %v2622 = vsub.f32 1.0, %v2598
    %v2623 = vsub.f32 1.0, %v2613
    %v2624 = vmul.f32 %v2622, %v2620
    %v2625 = vmul.f32 %v2623, %v2621
    %v2626 = vmul.f32 %v2598, %v2481
    %v2627 = vmul.f32 %v2613, %v2482
    %v2628 = vadd.f32 %v2624, %v2626
    %v2629 = vadd.f32 %v2625, %v2627
    %s2630 = scalar_lea.vmem [#allocation15], 16
    %2631 = vst [vmem:[%s2630] sm:$0xff] %v2628
    %2632 = vst [vmem:[%s2630 + $0x8] sm:$0xff] %v2629
    %v2633 = vld [vmem:[%s878] sm:$0xff]
    %v2634 = vld [vmem:[%s878 + $0x8] sm:$0xff]
    %v2635 = vld [vmem:[%s878 + $0x10] sm:$0xff]
    %v2636 = vld [vmem:[%s878 + $0x18] sm:$0xff]
    %v2637 = vld [vmem:[%s878 + $0x20] sm:$0xff]
    %v2638 = vld [vmem:[%s878 + $0x28] sm:$0xff]
    %v2639 = vpack.c.bf16 %v2629, %v2628
    %2640 = vmatpush.bf16.msra.mxu0 %v2318
    %2641 = vmatpush.bf16.msra.mxu0 %v2315
    %2642 = vmatpush.bf16.msra.mxu0 %v2312
    %2643 = vmatpush.bf16.msra.mxu0 %v2309
    %2644 = vmatpush.bf16.msra.mxu0 %v2306
    %2645 = vmatpush.bf16.msra.mxu0 %v2303
    %2646 = vmatpush.bf16.msra.mxu0 %v2300
    %2647 = vmatpush.bf16.msra.mxu0 %v2297
    %2648 = vmatmul.bf16.gmra.mxu0 %v2639
    %v2649 = vpop.f32.mrf.mxu0
    %v2650 = vadd.f32 0.0, %v2649
    %v2651 = vpop.f32.mrf.mxu0
    %v2652 = vadd.f32 0.0, %v2651
    %2653 = vdwg.mxu0
    %2654 = vmatpush.bf16.msra.mxu0 %v2319
    %2655 = vmatpush.bf16.msra.mxu0 %v2316
    %2656 = vmatpush.bf16.msra.mxu0 %v2313
    %2657 = vmatpush.bf16.msra.mxu0 %v2310
    %2658 = vmatpush.bf16.msra.mxu0 %v2307
    %2659 = vmatpush.bf16.msra.mxu0 %v2304
    %2660 = vmatpush.bf16.msra.mxu0 %v2301
    %2661 = vmatpush.bf16.msra.mxu0 %v2298
    %2662 = vmatmul.bf16.gmra.mxu0 %v2639
    %v2663 = vpop.f32.mrf.mxu0
    %v2664 = vadd.f32 0.0, %v2663
    %v2665 = vpop.f32.mrf.mxu0
    %v2666 = vadd.f32 0.0, %v2665
    %2667 = vdwg.mxu0
    %2668 = vmatpush.bf16.msra.mxu0 %v2320
    %2669 = vmatpush.bf16.msra.mxu0 %v2317
    %2670 = vmatpush.bf16.msra.mxu0 %v2314
    %2671 = vmatpush.bf16.msra.mxu0 %v2311
    %2672 = vmatpush.bf16.msra.mxu0 %v2308
    %2673 = vmatpush.bf16.msra.mxu0 %v2305
    %2674 = vmatpush.bf16.msra.mxu0 %v2302
    %2675 = vmatpush.bf16.msra.mxu0 %v2299
    %2676 = vmatmul.bf16.gmra.mxu0 %v2639
    %v2677 = vpop.f32.mrf.mxu0
    %v2678 = vadd.f32 0.0, %v2677
    %v2679 = vpop.f32.mrf.mxu0
    %v2680 = vadd.f32 0.0, %v2679
    %2681 = vdwg.mxu0
    %v2682 = vadd.f32 %v2633, %v2650
    %v2683 = vadd.f32 %v2636, %v2652
    %v2684 = vxor.u32 %v2682, 2147483648
    %v2685 = vxor.u32 %v2683, 2147483648
    %v2686 = vmul.f32 %v2684, 1.442695
    %v2687 = vpow.pop %v2686
    %v2688 = vmul.f32 %v2685, 1.442695
    %v2689 = vpow.pop %v2688
    %v2690 = vadd.f32 %v2687, 1.0
    %v2691 = vadd.f32 %v2689, 1.0
    %v2692 = vrcp.pop %v2690
    %v2693 = vmul.f32 %v2690, %v2692
    %v2694 = vsub.f32 1.0, %v2693
    %v2695 = vmul.f32 %v2692, %v2694
    %v2696 = vadd.f32 %v2692, %v2695
    %vm2697 = vweird.f32 %v2690
    %vm2698 = vweird.f32 %v2692
    %vm2699 = vmor %vm2697, %vm2698
    %v2700 = vsel %vm2699, %v2692, %v2696
    %v2701 = vand.u32 2147483647, %v2690
    %vm2702 = vcmp.eq.f32.partialorder %v2701, 8.507059e+37
    %v2703 = vand.u32 %v2690, 2147483648
    %v2704 = vor.u32 1.1754944e-38, %v2703
    %v2705 = vsel %vm2702, %v2704, %v2700
    %v2706 = vmul.f32 1.0, %v2705
    %v2707 = vrcp.pop %v2691
    %v2708 = vmul.f32 %v2691, %v2707
    %v2709 = vsub.f32 1.0, %v2708
    %v2710 = vmul.f32 %v2707, %v2709
    %v2711 = vadd.f32 %v2707, %v2710
    %vm2712 = vweird.f32 %v2691
    %vm2713 = vweird.f32 %v2707
    %vm2714 = vmor %vm2712, %vm2713
    %v2715 = vsel %vm2714, %v2707, %v2711
    %v2716 = vand.u32 2147483647, %v2691
    %vm2717 = vcmp.eq.f32.partialorder %v2716, 8.507059e+37
    %v2718 = vand.u32 %v2691, 2147483648
    %v2719 = vor.u32 1.1754944e-38, %v2718
    %v2720 = vsel %vm2717, %v2719, %v2715
    %v2721 = vmul.f32 1.0, %v2720
    %v2722 = vadd.f32 %v2634, %v2664
    %v2723 = vadd.f32 %v2637, %v2666
    %v2724 = vxor.u32 %v2722, 2147483648
    %v2725 = vxor.u32 %v2723, 2147483648
    %v2726 = vmul.f32 %v2724, 1.442695
    %v2727 = vpow.pop %v2726
    %v2728 = vmul.f32 %v2725, 1.442695
    %v2729 = vpow.pop %v2728
    %v2730 = vadd.f32 %v2727, 1.0
    %v2731 = vadd.f32 %v2729, 1.0
    %v2732 = vrcp.pop %v2730
    %v2733 = vmul.f32 %v2730, %v2732
    %v2734 = vsub.f32 1.0, %v2733
    %v2735 = vmul.f32 %v2732, %v2734
    %v2736 = vadd.f32 %v2732, %v2735
    %vm2737 = vweird.f32 %v2730
    %vm2738 = vweird.f32 %v2732
    %vm2739 = vmor %vm2737, %vm2738
    %v2740 = vsel %vm2739, %v2732, %v2736
    %v2741 = vand.u32 2147483647, %v2730
    %vm2742 = vcmp.eq.f32.partialorder %v2741, 8.507059e+37
    %v2743 = vand.u32 %v2730, 2147483648
    %v2744 = vor.u32 1.1754944e-38, %v2743
    %v2745 = vsel %vm2742, %v2744, %v2740
    %v2746 = vmul.f32 1.0, %v2745
    %v2747 = vrcp.pop %v2731
    %v2748 = vmul.f32 %v2731, %v2747
    %v2749 = vsub.f32 1.0, %v2748
    %v2750 = vmul.f32 %v2747, %v2749
    %v2751 = vadd.f32 %v2747, %v2750
    %vm2752 = vweird.f32 %v2731
    %vm2753 = vweird.f32 %v2747
    %vm2754 = vmor %vm2752, %vm2753
    %v2755 = vsel %vm2754, %v2747, %v2751
    %v2756 = vand.u32 2147483647, %v2731
    %vm2757 = vcmp.eq.f32.partialorder %v2756, 8.507059e+37
    %v2758 = vand.u32 %v2731, 2147483648
    %v2759 = vor.u32 1.1754944e-38, %v2758
    %v2760 = vsel %vm2757, %v2759, %v2755
    %v2761 = vmul.f32 1.0, %v2760
    %v2762 = vadd.f32 %v2678, %v2205
    %v2763 = vadd.f32 %v2680, %v2205
    %v2764 = vmul.f32 %v2706, %v2762
    %v2765 = vmul.f32 %v2721, %v2763
    %v2766 = vadd.f32 %v2635, %v2764
    %v2767 = vadd.f32 %v2638, %v2765
    %v2768 = vtanh.pop %v2766
    %v2769 = vtanh.pop %v2767
    %v2770 = vsub.f32 1.0, %v2746
    %v2771 = vsub.f32 1.0, %v2761
    %v2772 = vmul.f32 %v2770, %v2768
    %v2773 = vmul.f32 %v2771, %v2769
    %v2774 = vmul.f32 %v2746, %v2628
    %v2775 = vmul.f32 %v2761, %v2629
    %v2776 = vadd.f32 %v2772, %v2774
    %v2777 = vadd.f32 %v2773, %v2775
    %s2778 = scalar_lea.vmem [#allocation15], 32
    %2779 = vst [vmem:[%s2778] sm:$0xff] %v2776
    %2780 = vst [vmem:[%s2778 + $0x8] sm:$0xff] %v2777
    %v2781 = vld [vmem:[%s1029] sm:$0xff]
    %v2782 = vld [vmem:[%s1029 + $0x8] sm:$0xff]
    %v2783 = vld [vmem:[%s1029 + $0x10] sm:$0xff]
    %v2784 = vld [vmem:[%s1029 + $0x18] sm:$0xff]
    %v2785 = vld [vmem:[%s1029 + $0x20] sm:$0xff]
    %v2786 = vld [vmem:[%s1029 + $0x28] sm:$0xff]
    %v2787 = vpack.c.bf16 %v2777, %v2776
    %2788 = vmatpush.bf16.msra.mxu0 %v2318
    %2789 = vmatpush.bf16.msra.mxu0 %v2315
    %2790 = vmatpush.bf16.msra.mxu0 %v2312
    %2791 = vmatpush.bf16.msra.mxu0 %v2309
    %2792 = vmatpush.bf16.msra.mxu0 %v2306
    %2793 = vmatpush.bf16.msra.mxu0 %v2303
    %2794 = vmatpush.bf16.msra.mxu0 %v2300
    %2795 = vmatpush.bf16.msra.mxu0 %v2297
    %2796 = vmatmul.bf16.gmra.mxu0 %v2787
    %v2797 = vpop.f32.mrf.mxu0
    %v2798 = vadd.f32 0.0, %v2797
    %v2799 = vpop.f32.mrf.mxu0
    %v2800 = vadd.f32 0.0, %v2799
    %2801 = vdwg.mxu0
    %2802 = vmatpush.bf16.msra.mxu0 %v2319
    %2803 = vmatpush.bf16.msra.mxu0 %v2316
    %2804 = vmatpush.bf16.msra.mxu0 %v2313
    %2805 = vmatpush.bf16.msra.mxu0 %v2310
    %2806 = vmatpush.bf16.msra.mxu0 %v2307
    %2807 = vmatpush.bf16.msra.mxu0 %v2304
    %2808 = vmatpush.bf16.msra.mxu0 %v2301
    %2809 = vmatpush.bf16.msra.mxu0 %v2298
    %2810 = vmatmul.bf16.gmra.mxu0 %v2787
    %v2811 = vpop.f32.mrf.mxu0
    %v2812 = vadd.f32 0.0, %v2811
    %v2813 = vpop.f32.mrf.mxu0
    %v2814 = vadd.f32 0.0, %v2813
    %2815 = vdwg.mxu0
    %2816 = vmatpush.bf16.msra.mxu0 %v2320
    %2817 = vmatpush.bf16.msra.mxu0 %v2317
    %2818 = vmatpush.bf16.msra.mxu0 %v2314
    %2819 = vmatpush.bf16.msra.mxu0 %v2311
    %2820 = vmatpush.bf16.msra.mxu0 %v2308
    %2821 = vmatpush.bf16.msra.mxu0 %v2305
    %2822 = vmatpush.bf16.msra.mxu0 %v2302
    %2823 = vmatpush.bf16.msra.mxu0 %v2299
    %2824 = vmatmul.bf16.gmra.mxu0 %v2787
    %v2825 = vpop.f32.mrf.mxu0
    %v2826 = vadd.f32 0.0, %v2825
    %v2827 = vpop.f32.mrf.mxu0
    %v2828 = vadd.f32 0.0, %v2827
    %2829 = vdwg.mxu0
    %v2830 = vadd.f32 %v2781, %v2798
    %v2831 = vadd.f32 %v2784, %v2800
    %v2832 = vxor.u32 %v2830, 2147483648
    %v2833 = vxor.u32 %v2831, 2147483648
    %v2834 = vmul.f32 %v2832, 1.442695
    %v2835 = vpow.pop %v2834
    %v2836 = vmul.f32 %v2833, 1.442695
    %v2837 = vpow.pop %v2836
    %v2838 = vadd.f32 %v2835, 1.0
    %v2839 = vadd.f32 %v2837, 1.0
    %v2840 = vrcp.pop %v2838
    %v2841 = vmul.f32 %v2838, %v2840
    %v2842 = vsub.f32 1.0, %v2841
    %v2843 = vmul.f32 %v2840, %v2842
    %v2844 = vadd.f32 %v2840, %v2843
    %vm2845 = vweird.f32 %v2838
    %vm2846 = vweird.f32 %v2840
    %vm2847 = vmor %vm2845, %vm2846
    %v2848 = vsel %vm2847, %v2840, %v2844
    %v2849 = vand.u32 2147483647, %v2838
    %vm2850 = vcmp.eq.f32.partialorder %v2849, 8.507059e+37
    %v2851 = vand.u32 %v2838, 2147483648
    %v2852 = vor.u32 1.1754944e-38, %v2851
    %v2853 = vsel %vm2850, %v2852, %v2848
    %v2854 = vmul.f32 1.0, %v2853
    %v2855 = vrcp.pop %v2839
    %v2856 = vmul.f32 %v2839, %v2855
    %v2857 = vsub.f32 1.0, %v2856
    %v2858 = vmul.f32 %v2855, %v2857
    %v2859 = vadd.f32 %v2855, %v2858
    %vm2860 = vweird.f32 %v2839
    %vm2861 = vweird.f32 %v2855
    %vm2862 = vmor %vm2860, %vm2861
    %v2863 = vsel %vm2862, %v2855, %v2859
    %v2864 = vand.u32 2147483647, %v2839
    %vm2865 = vcmp.eq.f32.partialorder %v2864, 8.507059e+37
    %v2866 = vand.u32 %v2839, 2147483648
    %v2867 = vor.u32 1.1754944e-38, %v2866
    %v2868 = vsel %vm2865, %v2867, %v2863
    %v2869 = vmul.f32 1.0, %v2868
    %v2870 = vadd.f32 %v2782, %v2812
    %v2871 = vadd.f32 %v2785, %v2814
    %v2872 = vxor.u32 %v2870, 2147483648
    %v2873 = vxor.u32 %v2871, 2147483648
    %v2874 = vmul.f32 %v2872, 1.442695
    %v2875 = vpow.pop %v2874
    %v2876 = vmul.f32 %v2873, 1.442695
    %v2877 = vpow.pop %v2876
    %v2878 = vadd.f32 %v2875, 1.0
    %v2879 = vadd.f32 %v2877, 1.0
    %v2880 = vrcp.pop %v2878
    %v2881 = vmul.f32 %v2878, %v2880
    %v2882 = vsub.f32 1.0, %v2881
    %v2883 = vmul.f32 %v2880, %v2882
    %v2884 = vadd.f32 %v2880, %v2883
    %vm2885 = vweird.f32 %v2878
    %vm2886 = vweird.f32 %v2880
    %vm2887 = vmor %vm2885, %vm2886
    %v2888 = vsel %vm2887, %v2880, %v2884
    %v2889 = vand.u32 2147483647, %v2878
    %vm2890 = vcmp.eq.f32.partialorder %v2889, 8.507059e+37
    %v2891 = vand.u32 %v2878, 2147483648
    %v2892 = vor.u32 1.1754944e-38, %v2891
    %v2893 = vsel %vm2890, %v2892, %v2888
    %v2894 = vmul.f32 1.0, %v2893
    %v2895 = vrcp.pop %v2879
    %v2896 = vmul.f32 %v2879, %v2895
    %v2897 = vsub.f32 1.0, %v2896
    %v2898 = vmul.f32 %v2895, %v2897
    %v2899 = vadd.f32 %v2895, %v2898
    %vm2900 = vweird.f32 %v2879
    %vm2901 = vweird.f32 %v2895
    %vm2902 = vmor %vm2900, %vm2901
    %v2903 = vsel %vm2902, %v2895, %v2899
    %v2904 = vand.u32 2147483647, %v2879
    %vm2905 = vcmp.eq.f32.partialorder %v2904, 8.507059e+37
    %v2906 = vand.u32 %v2879, 2147483648
    %v2907 = vor.u32 1.1754944e-38, %v2906
    %v2908 = vsel %vm2905, %v2907, %v2903
    %v2909 = vmul.f32 1.0, %v2908
    %v2910 = vadd.f32 %v2826, %v2205
    %v2911 = vadd.f32 %v2828, %v2205
    %v2912 = vmul.f32 %v2854, %v2910
    %v2913 = vmul.f32 %v2869, %v2911
    %v2914 = vadd.f32 %v2783, %v2912
    %v2915 = vadd.f32 %v2786, %v2913
    %v2916 = vtanh.pop %v2914
    %v2917 = vtanh.pop %v2915
    %v2918 = vsub.f32 1.0, %v2894
    %v2919 = vsub.f32 1.0, %v2909
    %v2920 = vmul.f32 %v2918, %v2916
    %v2921 = vmul.f32 %v2919, %v2917
    %v2922 = vmul.f32 %v2894, %v2776
    %v2923 = vmul.f32 %v2909, %v2777
    %v2924 = vadd.f32 %v2920, %v2922
    %v2925 = vadd.f32 %v2921, %v2923
    %s2926 = scalar_lea.vmem [#allocation15], 48
    %2927 = vst [vmem:[%s2926] sm:$0xff] %v2924
    %2928 = vst [vmem:[%s2926 + $0x8] sm:$0xff] %v2925
    %v2929 = vld [vmem:[%s1180] sm:$0xff]
    %v2930 = vld [vmem:[%s1180 + $0x8] sm:$0xff]
    %v2931 = vld [vmem:[%s1180 + $0x10] sm:$0xff]
    %v2932 = vld [vmem:[%s1180 + $0x18] sm:$0xff]
    %v2933 = vld [vmem:[%s1180 + $0x20] sm:$0xff]
    %v2934 = vld [vmem:[%s1180 + $0x28] sm:$0xff]
    %v2935 = vpack.c.bf16 %v2925, %v2924
    %2936 = vmatpush.bf16.msra.mxu0 %v2318
    %2937 = vmatpush.bf16.msra.mxu0 %v2315
    %2938 = vmatpush.bf16.msra.mxu0 %v2312
    %2939 = vmatpush.bf16.msra.mxu0 %v2309
    %2940 = vmatpush.bf16.msra.mxu0 %v2306
    %2941 = vmatpush.bf16.msra.mxu0 %v2303
    %2942 = vmatpush.bf16.msra.mxu0 %v2300
    %2943 = vmatpush.bf16.msra.mxu0 %v2297
    %2944 = vmatmul.bf16.gmra.mxu0 %v2935
    %v2945 = vpop.f32.mrf.mxu0
    %v2946 = vadd.f32 0.0, %v2945
    %v2947 = vpop.f32.mrf.mxu0
    %v2948 = vadd.f32 0.0, %v2947
    %2949 = vdwg.mxu0
    %2950 = vmatpush.bf16.msra.mxu0 %v2319
    %2951 = vmatpush.bf16.msra.mxu0 %v2316
    %2952 = vmatpush.bf16.msra.mxu0 %v2313
    %2953 = vmatpush.bf16.msra.mxu0 %v2310
    %2954 = vmatpush.bf16.msra.mxu0 %v2307
    %2955 = vmatpush.bf16.msra.mxu0 %v2304
    %2956 = vmatpush.bf16.msra.mxu0 %v2301
    %2957 = vmatpush.bf16.msra.mxu0 %v2298
    %2958 = vmatmul.bf16.gmra.mxu0 %v2935
    %v2959 = vpop.f32.mrf.mxu0
    %v2960 = vadd.f32 0.0, %v2959
    %v2961 = vpop.f32.mrf.mxu0
    %v2962 = vadd.f32 0.0, %v2961
    %2963 = vdwg.mxu0
    %2964 = vmatpush.bf16.msra.mxu0 %v2320
    %2965 = vmatpush.bf16.msra.mxu0 %v2317
    %2966 = vmatpush.bf16.msra.mxu0 %v2314
    %2967 = vmatpush.bf16.msra.mxu0 %v2311
    %2968 = vmatpush.bf16.msra.mxu0 %v2308
    %2969 = vmatpush.bf16.msra.mxu0 %v2305
    %2970 = vmatpush.bf16.msra.mxu0 %v2302
    %2971 = vmatpush.bf16.msra.mxu0 %v2299
    %2972 = vmatmul.bf16.gmra.mxu0 %v2935
    %v2973 = vpop.f32.mrf.mxu0
    %v2974 = vadd.f32 0.0, %v2973
    %v2975 = vpop.f32.mrf.mxu0
    %v2976 = vadd.f32 0.0, %v2975
    %2977 = vdwg.mxu0
    %v2978 = vadd.f32 %v2929, %v2946
    %v2979 = vadd.f32 %v2932, %v2948
    %v2980 = vxor.u32 %v2978, 2147483648
    %v2981 = vxor.u32 %v2979, 2147483648
    %v2982 = vmul.f32 %v2980, 1.442695
    %v2983 = vpow.pop %v2982
    %v2984 = vmul.f32 %v2981, 1.442695
    %v2985 = vpow.pop %v2984
    %v2986 = vadd.f32 %v2983, 1.0
    %v2987 = vadd.f32 %v2985, 1.0
    %v2988 = vrcp.pop %v2986
    %v2989 = vmul.f32 %v2986, %v2988
    %v2990 = vsub.f32 1.0, %v2989
    %v2991 = vmul.f32 %v2988, %v2990
    %v2992 = vadd.f32 %v2988, %v2991
    %vm2993 = vweird.f32 %v2986
    %vm2994 = vweird.f32 %v2988
    %vm2995 = vmor %vm2993, %vm2994
    %v2996 = vsel %vm2995, %v2988, %v2992
    %v2997 = vand.u32 2147483647, %v2986
    %vm2998 = vcmp.eq.f32.partialorder %v2997, 8.507059e+37
    %v2999 = vand.u32 %v2986, 2147483648
    %v3000 = vor.u32 1.1754944e-38, %v2999
    %v3001 = vsel %vm2998, %v3000, %v2996
    %v3002 = vmul.f32 1.0, %v3001
    %v3003 = vrcp.pop %v2987
    %v3004 = vmul.f32 %v2987, %v3003
    %v3005 = vsub.f32 1.0, %v3004
    %v3006 = vmul.f32 %v3003, %v3005
    %v3007 = vadd.f32 %v3003, %v3006
    %vm3008 = vweird.f32 %v2987
    %vm3009 = vweird.f32 %v3003
    %vm3010 = vmor %vm3008, %vm3009
    %v3011 = vsel %vm3010, %v3003, %v3007
    %v3012 = vand.u32 2147483647, %v2987
    %vm3013 = vcmp.eq.f32.partialorder %v3012, 8.507059e+37
    %v3014 = vand.u32 %v2987, 2147483648
    %v3015 = vor.u32 1.1754944e-38, %v3014
    %v3016 = vsel %vm3013, %v3015, %v3011
    %v3017 = vmul.f32 1.0, %v3016
    %v3018 = vadd.f32 %v2930, %v2960
    %v3019 = vadd.f32 %v2933, %v2962
    %v3020 = vxor.u32 %v3018, 2147483648
    %v3021 = vxor.u32 %v3019, 2147483648
    %v3022 = vmul.f32 %v3020, 1.442695
    %v3023 = vpow.pop %v3022
    %v3024 = vmul.f32 %v3021, 1.442695
    %v3025 = vpow.pop %v3024
    %v3026 = vadd.f32 %v3023, 1.0
    %v3027 = vadd.f32 %v3025, 1.0
    %v3028 = vrcp.pop %v3026
    %v3029 = vmul.f32 %v3026, %v3028
    %v3030 = vsub.f32 1.0, %v3029
    %v3031 = vmul.f32 %v3028, %v3030
    %v3032 = vadd.f32 %v3028, %v3031
    %vm3033 = vweird.f32 %v3026
    %vm3034 = vweird.f32 %v3028
    %vm3035 = vmor %vm3033, %vm3034
    %v3036 = vsel %vm3035, %v3028, %v3032
    %v3037 = vand.u32 2147483647, %v3026
    %vm3038 = vcmp.eq.f32.partialorder %v3037, 8.507059e+37
    %v3039 = vand.u32 %v3026, 2147483648
    %v3040 = vor.u32 1.1754944e-38, %v3039
    %v3041 = vsel %vm3038, %v3040, %v3036
    %v3042 = vmul.f32 1.0, %v3041
    %v3043 = vrcp.pop %v3027
    %v3044 = vmul.f32 %v3027, %v3043
    %v3045 = vsub.f32 1.0, %v3044
    %v3046 = vmul.f32 %v3043, %v3045
    %v3047 = vadd.f32 %v3043, %v3046
    %vm3048 = vweird.f32 %v3027
    %vm3049 = vweird.f32 %v3043
    %vm3050 = vmor %vm3048, %vm3049
    %v3051 = vsel %vm3050, %v3043, %v3047
    %v3052 = vand.u32 2147483647, %v3027
    %vm3053 = vcmp.eq.f32.partialorder %v3052, 8.507059e+37
    %v3054 = vand.u32 %v3027, 2147483648
    %v3055 = vor.u32 1.1754944e-38, %v3054
    %v3056 = vsel %vm3053, %v3055, %v3051
    %v3057 = vmul.f32 1.0, %v3056
    %v3058 = vadd.f32 %v2974, %v2205
    %v3059 = vadd.f32 %v2976, %v2205
    %v3060 = vmul.f32 %v3002, %v3058
    %v3061 = vmul.f32 %v3017, %v3059
    %v3062 = vadd.f32 %v2931, %v3060
    %v3063 = vadd.f32 %v2934, %v3061
    %v3064 = vtanh.pop %v3062
    %v3065 = vtanh.pop %v3063
    %v3066 = vsub.f32 1.0, %v3042
    %v3067 = vsub.f32 1.0, %v3057
    %v3068 = vmul.f32 %v3066, %v3064
    %v3069 = vmul.f32 %v3067, %v3065
    %v3070 = vmul.f32 %v3042, %v2924
    %v3071 = vmul.f32 %v3057, %v2925
    %v3072 = vadd.f32 %v3068, %v3070
    %v3073 = vadd.f32 %v3069, %v3071
    %s3074 = scalar_lea.vmem [#allocation15], 64
    %3075 = vst [vmem:[%s3074] sm:$0xff] %v3072
    %3076 = vst [vmem:[%s3074 + $0x8] sm:$0xff] %v3073
    %v3077 = vld [vmem:[%s1331] sm:$0xff]
    %v3078 = vld [vmem:[%s1331 + $0x8] sm:$0xff]
    %v3079 = vld [vmem:[%s1331 + $0x10] sm:$0xff]
    %v3080 = vld [vmem:[%s1331 + $0x18] sm:$0xff]
    %v3081 = vld [vmem:[%s1331 + $0x20] sm:$0xff]
    %v3082 = vld [vmem:[%s1331 + $0x28] sm:$0xff]
    %v3083 = vpack.c.bf16 %v3073, %v3072
    %3084 = vmatpush.bf16.msra.mxu0 %v2318
    %3085 = vmatpush.bf16.msra.mxu0 %v2315
    %3086 = vmatpush.bf16.msra.mxu0 %v2312
    %3087 = vmatpush.bf16.msra.mxu0 %v2309
    %3088 = vmatpush.bf16.msra.mxu0 %v2306
    %3089 = vmatpush.bf16.msra.mxu0 %v2303
    %3090 = vmatpush.bf16.msra.mxu0 %v2300
    %3091 = vmatpush.bf16.msra.mxu0 %v2297
    %3092 = vmatmul.bf16.gmra.mxu0 %v3083
    %v3093 = vpop.f32.mrf.mxu0
    %v3094 = vadd.f32 0.0, %v3093
    %v3095 = vpop.f32.mrf.mxu0
    %v3096 = vadd.f32 0.0, %v3095
    %3097 = vdwg.mxu0
    %3098 = vmatpush.bf16.msra.mxu0 %v2319
    %3099 = vmatpush.bf16.msra.mxu0 %v2316
    %3100 = vmatpush.bf16.msra.mxu0 %v2313
    %3101 = vmatpush.bf16.msra.mxu0 %v2310
    %3102 = vmatpush.bf16.msra.mxu0 %v2307
    %3103 = vmatpush.bf16.msra.mxu0 %v2304
    %3104 = vmatpush.bf16.msra.mxu0 %v2301
    %3105 = vmatpush.bf16.msra.mxu0 %v2298
    %3106 = vmatmul.bf16.gmra.mxu0 %v3083
    %v3107 = vpop.f32.mrf.mxu0
    %v3108 = vadd.f32 0.0, %v3107
    %v3109 = vpop.f32.mrf.mxu0
    %v3110 = vadd.f32 0.0, %v3109
    %3111 = vdwg.mxu0
    %3112 = vmatpush.bf16.msra.mxu0 %v2320
    %3113 = vmatpush.bf16.msra.mxu0 %v2317
    %3114 = vmatpush.bf16.msra.mxu0 %v2314
    %3115 = vmatpush.bf16.msra.mxu0 %v2311
    %3116 = vmatpush.bf16.msra.mxu0 %v2308
    %3117 = vmatpush.bf16.msra.mxu0 %v2305
    %3118 = vmatpush.bf16.msra.mxu0 %v2302
    %3119 = vmatpush.bf16.msra.mxu0 %v2299
    %3120 = vmatmul.bf16.gmra.mxu0 %v3083
    %v3121 = vpop.f32.mrf.mxu0
    %v3122 = vadd.f32 0.0, %v3121
    %v3123 = vpop.f32.mrf.mxu0
    %v3124 = vadd.f32 0.0, %v3123
    %3125 = vdwg.mxu0
    %v3126 = vadd.f32 %v3077, %v3094
    %v3127 = vadd.f32 %v3080, %v3096
    %v3128 = vxor.u32 %v3126, 2147483648
    %v3129 = vxor.u32 %v3127, 2147483648
    %v3130 = vmul.f32 %v3128, 1.442695
    %v3131 = vpow.pop %v3130
    %v3132 = vmul.f32 %v3129, 1.442695
    %v3133 = vpow.pop %v3132
    %v3134 = vadd.f32 %v3131, 1.0
    %v3135 = vadd.f32 %v3133, 1.0
    %v3136 = vrcp.pop %v3134
    %v3137 = vmul.f32 %v3134, %v3136
    %v3138 = vsub.f32 1.0, %v3137
    %v3139 = vmul.f32 %v3136, %v3138
    %v3140 = vadd.f32 %v3136, %v3139
    %vm3141 = vweird.f32 %v3134
    %vm3142 = vweird.f32 %v3136
    %vm3143 = vmor %vm3141, %vm3142
    %v3144 = vsel %vm3143, %v3136, %v3140
    %v3145 = vand.u32 2147483647, %v3134
    %vm3146 = vcmp.eq.f32.partialorder %v3145, 8.507059e+37
    %v3147 = vand.u32 %v3134, 2147483648
    %v3148 = vor.u32 1.1754944e-38, %v3147
    %v3149 = vsel %vm3146, %v3148, %v3144
    %v3150 = vmul.f32 1.0, %v3149
    %v3151 = vrcp.pop %v3135
    %v3152 = vmul.f32 %v3135, %v3151
    %v3153 = vsub.f32 1.0, %v3152
    %v3154 = vmul.f32 %v3151, %v3153
    %v3155 = vadd.f32 %v3151, %v3154
    %vm3156 = vweird.f32 %v3135
    %vm3157 = vweird.f32 %v3151
    %vm3158 = vmor %vm3156, %vm3157
    %v3159 = vsel %vm3158, %v3151, %v3155
    %v3160 = vand.u32 2147483647, %v3135
    %vm3161 = vcmp.eq.f32.partialorder %v3160, 8.507059e+37
    %v3162 = vand.u32 %v3135, 2147483648
    %v3163 = vor.u32 1.1754944e-38, %v3162
    %v3164 = vsel %vm3161, %v3163, %v3159
    %v3165 = vmul.f32 1.0, %v3164
    %v3166 = vadd.f32 %v3078, %v3108
    %v3167 = vadd.f32 %v3081, %v3110
    %v3168 = vxor.u32 %v3166, 2147483648
    %v3169 = vxor.u32 %v3167, 2147483648
    %v3170 = vmul.f32 %v3168, 1.442695
    %v3171 = vpow.pop %v3170
    %v3172 = vmul.f32 %v3169, 1.442695
    %v3173 = vpow.pop %v3172
    %v3174 = vadd.f32 %v3171, 1.0
    %v3175 = vadd.f32 %v3173, 1.0
    %v3176 = vrcp.pop %v3174
    %v3177 = vmul.f32 %v3174, %v3176
    %v3178 = vsub.f32 1.0, %v3177
    %v3179 = vmul.f32 %v3176, %v3178
    %v3180 = vadd.f32 %v3176, %v3179
    %vm3181 = vweird.f32 %v3174
    %vm3182 = vweird.f32 %v3176
    %vm3183 = vmor %vm3181, %vm3182
    %v3184 = vsel %vm3183, %v3176, %v3180
    %v3185 = vand.u32 2147483647, %v3174
    %vm3186 = vcmp.eq.f32.partialorder %v3185, 8.507059e+37
    %v3187 = vand.u32 %v3174, 2147483648
    %v3188 = vor.u32 1.1754944e-38, %v3187
    %v3189 = vsel %vm3186, %v3188, %v3184
    %v3190 = vmul.f32 1.0, %v3189
    %v3191 = vrcp.pop %v3175
    %v3192 = vmul.f32 %v3175, %v3191
    %v3193 = vsub.f32 1.0, %v3192
    %v3194 = vmul.f32 %v3191, %v3193
    %v3195 = vadd.f32 %v3191, %v3194
    %vm3196 = vweird.f32 %v3175
    %vm3197 = vweird.f32 %v3191
    %vm3198 = vmor %vm3196, %vm3197
    %v3199 = vsel %vm3198, %v3191, %v3195
    %v3200 = vand.u32 2147483647, %v3175
    %vm3201 = vcmp.eq.f32.partialorder %v3200, 8.507059e+37
    %v3202 = vand.u32 %v3175, 2147483648
    %v3203 = vor.u32 1.1754944e-38, %v3202
    %v3204 = vsel %vm3201, %v3203, %v3199
    %v3205 = vmul.f32 1.0, %v3204
    %v3206 = vadd.f32 %v3122, %v2205
    %v3207 = vadd.f32 %v3124, %v2205
    %v3208 = vmul.f32 %v3150, %v3206
    %v3209 = vmul.f32 %v3165, %v3207
    %v3210 = vadd.f32 %v3079, %v3208
    %v3211 = vadd.f32 %v3082, %v3209
    %v3212 = vtanh.pop %v3210
    %v3213 = vtanh.pop %v3211
    %v3214 = vsub.f32 1.0, %v3190
    %v3215 = vsub.f32 1.0, %v3205
    %v3216 = vmul.f32 %v3214, %v3212
    %v3217 = vmul.f32 %v3215, %v3213
    %v3218 = vmul.f32 %v3190, %v3072
    %v3219 = vmul.f32 %v3205, %v3073
    %v3220 = vadd.f32 %v3216, %v3218
    %v3221 = vadd.f32 %v3217, %v3219
    %s3222 = scalar_lea.vmem [#allocation15], 80
    %3223 = vst [vmem:[%s3222] sm:$0xff] %v3220
    %3224 = vst [vmem:[%s3222 + $0x8] sm:$0xff] %v3221
    %v3225 = vld [vmem:[%s1482] sm:$0xff]
    %v3226 = vld [vmem:[%s1482 + $0x8] sm:$0xff]
    %v3227 = vld [vmem:[%s1482 + $0x10] sm:$0xff]
    %v3228 = vld [vmem:[%s1482 + $0x18] sm:$0xff]
    %v3229 = vld [vmem:[%s1482 + $0x20] sm:$0xff]
    %v3230 = vld [vmem:[%s1482 + $0x28] sm:$0xff]
    %v3231 = vpack.c.bf16 %v3221, %v3220
    %3232 = vmatpush.bf16.msra.mxu0 %v2318
    %3233 = vmatpush.bf16.msra.mxu0 %v2315
    %3234 = vmatpush.bf16.msra.mxu0 %v2312
    %3235 = vmatpush.bf16.msra.mxu0 %v2309
    %3236 = vmatpush.bf16.msra.mxu0 %v2306
    %3237 = vmatpush.bf16.msra.mxu0 %v2303
    %3238 = vmatpush.bf16.msra.mxu0 %v2300
    %3239 = vmatpush.bf16.msra.mxu0 %v2297
    %3240 = vmatmul.bf16.gmra.mxu0 %v3231
    %v3241 = vpop.f32.mrf.mxu0
    %v3242 = vadd.f32 0.0, %v3241
    %v3243 = vpop.f32.mrf.mxu0
    %v3244 = vadd.f32 0.0, %v3243
    %3245 = vdwg.mxu0
    %3246 = vmatpush.bf16.msra.mxu0 %v2319
    %3247 = vmatpush.bf16.msra.mxu0 %v2316
    %3248 = vmatpush.bf16.msra.mxu0 %v2313
    %3249 = vmatpush.bf16.msra.mxu0 %v2310
    %3250 = vmatpush.bf16.msra.mxu0 %v2307
    %3251 = vmatpush.bf16.msra.mxu0 %v2304
    %3252 = vmatpush.bf16.msra.mxu0 %v2301
    %3253 = vmatpush.bf16.msra.mxu0 %v2298
    %3254 = vmatmul.bf16.gmra.mxu0 %v3231
    %v3255 = vpop.f32.mrf.mxu0
    %v3256 = vadd.f32 0.0, %v3255
    %v3257 = vpop.f32.mrf.mxu0
    %v3258 = vadd.f32 0.0, %v3257
    %3259 = vdwg.mxu0
    %3260 = vmatpush.bf16.msra.mxu0 %v2320
    %3261 = vmatpush.bf16.msra.mxu0 %v2317
    %3262 = vmatpush.bf16.msra.mxu0 %v2314
    %3263 = vmatpush.bf16.msra.mxu0 %v2311
    %3264 = vmatpush.bf16.msra.mxu0 %v2308
    %3265 = vmatpush.bf16.msra.mxu0 %v2305
    %3266 = vmatpush.bf16.msra.mxu0 %v2302
    %3267 = vmatpush.bf16.msra.mxu0 %v2299
    %3268 = vmatmul.bf16.gmra.mxu0 %v3231
    %v3269 = vpop.f32.mrf.mxu0
    %v3270 = vadd.f32 0.0, %v3269
    %v3271 = vpop.f32.mrf.mxu0
    %v3272 = vadd.f32 0.0, %v3271
    %3273 = vdwg.mxu0
    %v3274 = vadd.f32 %v3225, %v3242
    %v3275 = vadd.f32 %v3228, %v3244
    %v3276 = vxor.u32 %v3274, 2147483648
    %v3277 = vxor.u32 %v3275, 2147483648
    %v3278 = vmul.f32 %v3276, 1.442695
    %v3279 = vpow.pop %v3278
    %v3280 = vmul.f32 %v3277, 1.442695
    %v3281 = vpow.pop %v3280
    %v3282 = vadd.f32 %v3279, 1.0
    %v3283 = vadd.f32 %v3281, 1.0
    %v3284 = vrcp.pop %v3282
    %v3285 = vmul.f32 %v3282, %v3284
    %v3286 = vsub.f32 1.0, %v3285
    %v3287 = vmul.f32 %v3284, %v3286
    %v3288 = vadd.f32 %v3284, %v3287
    %vm3289 = vweird.f32 %v3282
    %vm3290 = vweird.f32 %v3284
    %vm3291 = vmor %vm3289, %vm3290
    %v3292 = vsel %vm3291, %v3284, %v3288
    %v3293 = vand.u32 2147483647, %v3282
    %vm3294 = vcmp.eq.f32.partialorder %v3293, 8.507059e+37
    %v3295 = vand.u32 %v3282, 2147483648
    %v3296 = vor.u32 1.1754944e-38, %v3295
    %v3297 = vsel %vm3294, %v3296, %v3292
    %v3298 = vmul.f32 1.0, %v3297
    %v3299 = vrcp.pop %v3283
    %v3300 = vmul.f32 %v3283, %v3299
    %v3301 = vsub.f32 1.0, %v3300
    %v3302 = vmul.f32 %v3299, %v3301
    %v3303 = vadd.f32 %v3299, %v3302
    %vm3304 = vweird.f32 %v3283
    %vm3305 = vweird.f32 %v3299
    %vm3306 = vmor %vm3304, %vm3305
    %v3307 = vsel %vm3306, %v3299, %v3303
    %v3308 = vand.u32 2147483647, %v3283
    %vm3309 = vcmp.eq.f32.partialorder %v3308, 8.507059e+37
    %v3310 = vand.u32 %v3283, 2147483648
    %v3311 = vor.u32 1.1754944e-38, %v3310
    %v3312 = vsel %vm3309, %v3311, %v3307
    %v3313 = vmul.f32 1.0, %v3312
    %v3314 = vadd.f32 %v3226, %v3256
    %v3315 = vadd.f32 %v3229, %v3258
    %v3316 = vxor.u32 %v3314, 2147483648
    %v3317 = vxor.u32 %v3315, 2147483648
    %v3318 = vmul.f32 %v3316, 1.442695
    %v3319 = vpow.pop %v3318
    %v3320 = vmul.f32 %v3317, 1.442695
    %v3321 = vpow.pop %v3320
    %v3322 = vadd.f32 %v3319, 1.0
    %v3323 = vadd.f32 %v3321, 1.0
    %v3324 = vrcp.pop %v3322
    %v3325 = vmul.f32 %v3322, %v3324
    %v3326 = vsub.f32 1.0, %v3325
    %v3327 = vmul.f32 %v3324, %v3326
    %v3328 = vadd.f32 %v3324, %v3327
    %vm3329 = vweird.f32 %v3322
    %vm3330 = vweird.f32 %v3324
    %vm3331 = vmor %vm3329, %vm3330
    %v3332 = vsel %vm3331, %v3324, %v3328
    %v3333 = vand.u32 2147483647, %v3322
    %vm3334 = vcmp.eq.f32.partialorder %v3333, 8.507059e+37
    %v3335 = vand.u32 %v3322, 2147483648
    %v3336 = vor.u32 1.1754944e-38, %v3335
    %v3337 = vsel %vm3334, %v3336, %v3332
    %v3338 = vmul.f32 1.0, %v3337
    %v3339 = vrcp.pop %v3323
    %v3340 = vmul.f32 %v3323, %v3339
    %v3341 = vsub.f32 1.0, %v3340
    %v3342 = vmul.f32 %v3339, %v3341
    %v3343 = vadd.f32 %v3339, %v3342
    %vm3344 = vweird.f32 %v3323
    %vm3345 = vweird.f32 %v3339
    %vm3346 = vmor %vm3344, %vm3345
    %v3347 = vsel %vm3346, %v3339, %v3343
    %v3348 = vand.u32 2147483647, %v3323
    %vm3349 = vcmp.eq.f32.partialorder %v3348, 8.507059e+37
    %v3350 = vand.u32 %v3323, 2147483648
    %v3351 = vor.u32 1.1754944e-38, %v3350
    %v3352 = vsel %vm3349, %v3351, %v3347
    %v3353 = vmul.f32 1.0, %v3352
    %v3354 = vadd.f32 %v3270, %v2205
    %v3355 = vadd.f32 %v3272, %v2205
    %v3356 = vmul.f32 %v3298, %v3354
    %v3357 = vmul.f32 %v3313, %v3355
    %v3358 = vadd.f32 %v3227, %v3356
    %v3359 = vadd.f32 %v3230, %v3357
    %v3360 = vtanh.pop %v3358
    %v3361 = vtanh.pop %v3359
    %v3362 = vsub.f32 1.0, %v3338
    %v3363 = vsub.f32 1.0, %v3353
    %v3364 = vmul.f32 %v3362, %v3360
    %v3365 = vmul.f32 %v3363, %v3361
    %v3366 = vmul.f32 %v3338, %v3220
    %v3367 = vmul.f32 %v3353, %v3221
    %v3368 = vadd.f32 %v3364, %v3366
    %v3369 = vadd.f32 %v3365, %v3367
    %s3370 = scalar_lea.vmem [#allocation15], 96
    %3371 = vst [vmem:[%s3370] sm:$0xff] %v3368
    %3372 = vst [vmem:[%s3370 + $0x8] sm:$0xff] %v3369
    %v3373 = vld [vmem:[%s1633] sm:$0xff]
    %v3374 = vld [vmem:[%s1633 + $0x8] sm:$0xff]
    %v3375 = vld [vmem:[%s1633 + $0x10] sm:$0xff]
    %v3376 = vld [vmem:[%s1633 + $0x18] sm:$0xff]
    %v3377 = vld [vmem:[%s1633 + $0x20] sm:$0xff]
    %v3378 = vld [vmem:[%s1633 + $0x28] sm:$0xff]
    %v3379 = vpack.c.bf16 %v3369, %v3368
    %3380 = vmatpush.bf16.msra.mxu0 %v2318
    %3381 = vmatpush.bf16.msra.mxu0 %v2315
    %3382 = vmatpush.bf16.msra.mxu0 %v2312
    %3383 = vmatpush.bf16.msra.mxu0 %v2309
    %3384 = vmatpush.bf16.msra.mxu0 %v2306
    %3385 = vmatpush.bf16.msra.mxu0 %v2303
    %3386 = vmatpush.bf16.msra.mxu0 %v2300
    %3387 = vmatpush.bf16.msra.mxu0 %v2297
    %3388 = vmatmul.bf16.gmra.mxu0 %v3379
    %v3389 = vpop.f32.mrf.mxu0
    %v3390 = vadd.f32 0.0, %v3389
    %v3391 = vpop.f32.mrf.mxu0
    %v3392 = vadd.f32 0.0, %v3391
    %3393 = vdwg.mxu0
    %3394 = vmatpush.bf16.msra.mxu0 %v2319
    %3395 = vmatpush.bf16.msra.mxu0 %v2316
    %3396 = vmatpush.bf16.msra.mxu0 %v2313
    %3397 = vmatpush.bf16.msra.mxu0 %v2310
    %3398 = vmatpush.bf16.msra.mxu0 %v2307
    %3399 = vmatpush.bf16.msra.mxu0 %v2304
    %3400 = vmatpush.bf16.msra.mxu0 %v2301
    %3401 = vmatpush.bf16.msra.mxu0 %v2298
    %3402 = vmatmul.bf16.gmra.mxu0 %v3379
    %v3403 = vpop.f32.mrf.mxu0
    %v3404 = vadd.f32 0.0, %v3403
    %v3405 = vpop.f32.mrf.mxu0
    %v3406 = vadd.f32 0.0, %v3405
    %3407 = vdwg.mxu0
    %3408 = vmatpush.bf16.msra.mxu0 %v2320
    %3409 = vmatpush.bf16.msra.mxu0 %v2317
    %3410 = vmatpush.bf16.msra.mxu0 %v2314
    %3411 = vmatpush.bf16.msra.mxu0 %v2311
    %3412 = vmatpush.bf16.msra.mxu0 %v2308
    %3413 = vmatpush.bf16.msra.mxu0 %v2305
    %3414 = vmatpush.bf16.msra.mxu0 %v2302
    %3415 = vmatpush.bf16.msra.mxu0 %v2299
    %3416 = vmatmul.bf16.gmra.mxu0 %v3379
    %v3417 = vpop.f32.mrf.mxu0
    %v3418 = vadd.f32 0.0, %v3417
    %v3419 = vpop.f32.mrf.mxu0
    %v3420 = vadd.f32 0.0, %v3419
    %3421 = vdwg.mxu0
    %v3422 = vadd.f32 %v3373, %v3390
    %v3423 = vadd.f32 %v3376, %v3392
    %v3424 = vxor.u32 %v3422, 2147483648
    %v3425 = vxor.u32 %v3423, 2147483648
    %v3426 = vmul.f32 %v3424, 1.442695
    %v3427 = vpow.pop %v3426
    %v3428 = vmul.f32 %v3425, 1.442695
    %v3429 = vpow.pop %v3428
    %v3430 = vadd.f32 %v3427, 1.0
    %v3431 = vadd.f32 %v3429, 1.0
    %v3432 = vrcp.pop %v3430
    %v3433 = vmul.f32 %v3430, %v3432
    %v3434 = vsub.f32 1.0, %v3433
    %v3435 = vmul.f32 %v3432, %v3434
    %v3436 = vadd.f32 %v3432, %v3435
    %vm3437 = vweird.f32 %v3430
    %vm3438 = vweird.f32 %v3432
    %vm3439 = vmor %vm3437, %vm3438
    %v3440 = vsel %vm3439, %v3432, %v3436
    %v3441 = vand.u32 2147483647, %v3430
    %vm3442 = vcmp.eq.f32.partialorder %v3441, 8.507059e+37
    %v3443 = vand.u32 %v3430, 2147483648
    %v3444 = vor.u32 1.1754944e-38, %v3443
    %v3445 = vsel %vm3442, %v3444, %v3440
    %v3446 = vmul.f32 1.0, %v3445
    %v3447 = vrcp.pop %v3431
    %v3448 = vmul.f32 %v3431, %v3447
    %v3449 = vsub.f32 1.0, %v3448
    %v3450 = vmul.f32 %v3447, %v3449
    %v3451 = vadd.f32 %v3447, %v3450
    %vm3452 = vweird.f32 %v3431
    %vm3453 = vweird.f32 %v3447
    %vm3454 = vmor %vm3452, %vm3453
    %v3455 = vsel %vm3454, %v3447, %v3451
    %v3456 = vand.u32 2147483647, %v3431
    %vm3457 = vcmp.eq.f32.partialorder %v3456, 8.507059e+37
    %v3458 = vand.u32 %v3431, 2147483648
    %v3459 = vor.u32 1.1754944e-38, %v3458
    %v3460 = vsel %vm3457, %v3459, %v3455
    %v3461 = vmul.f32 1.0, %v3460
    %v3462 = vadd.f32 %v3374, %v3404
    %v3463 = vadd.f32 %v3377, %v3406
    %v3464 = vxor.u32 %v3462, 2147483648
    %v3465 = vxor.u32 %v3463, 2147483648
    %v3466 = vmul.f32 %v3464, 1.442695
    %v3467 = vpow.pop %v3466
    %v3468 = vmul.f32 %v3465, 1.442695
    %v3469 = vpow.pop %v3468
    %v3470 = vadd.f32 %v3467, 1.0
    %v3471 = vadd.f32 %v3469, 1.0
    %v3472 = vrcp.pop %v3470
    %v3473 = vmul.f32 %v3470, %v3472
    %v3474 = vsub.f32 1.0, %v3473
    %v3475 = vmul.f32 %v3472, %v3474
    %v3476 = vadd.f32 %v3472, %v3475
    %vm3477 = vweird.f32 %v3470
    %vm3478 = vweird.f32 %v3472
    %vm3479 = vmor %vm3477, %vm3478
    %v3480 = vsel %vm3479, %v3472, %v3476
    %v3481 = vand.u32 2147483647, %v3470
    %vm3482 = vcmp.eq.f32.partialorder %v3481, 8.507059e+37
    %v3483 = vand.u32 %v3470, 2147483648
    %v3484 = vor.u32 1.1754944e-38, %v3483
    %v3485 = vsel %vm3482, %v3484, %v3480
    %v3486 = vmul.f32 1.0, %v3485
    %v3487 = vrcp.pop %v3471
    %v3488 = vmul.f32 %v3471, %v3487
    %v3489 = vsub.f32 1.0, %v3488
    %v3490 = vmul.f32 %v3487, %v3489
    %v3491 = vadd.f32 %v3487, %v3490
    %vm3492 = vweird.f32 %v3471
    %vm3493 = vweird.f32 %v3487
    %vm3494 = vmor %vm3492, %vm3493
    %v3495 = vsel %vm3494, %v3487, %v3491
    %v3496 = vand.u32 2147483647, %v3471
    %vm3497 = vcmp.eq.f32.partialorder %v3496, 8.507059e+37
    %v3498 = vand.u32 %v3471, 2147483648
    %v3499 = vor.u32 1.1754944e-38, %v3498
    %v3500 = vsel %vm3497, %v3499, %v3495
    %v3501 = vmul.f32 1.0, %v3500
    %v3502 = vadd.f32 %v3418, %v2205
    %v3503 = vadd.f32 %v3420, %v2205
    %v3504 = vmul.f32 %v3446, %v3502
    %v3505 = vmul.f32 %v3461, %v3503
    %v3506 = vadd.f32 %v3375, %v3504
    %v3507 = vadd.f32 %v3378, %v3505
    %v3508 = vtanh.pop %v3506
    %v3509 = vtanh.pop %v3507
    %v3510 = vsub.f32 1.0, %v3486
    %v3511 = vsub.f32 1.0, %v3501
    %v3512 = vmul.f32 %v3510, %v3508
    %v3513 = vmul.f32 %v3511, %v3509
    %v3514 = vmul.f32 %v3486, %v3368
    %v3515 = vmul.f32 %v3501, %v3369
    %v3516 = vadd.f32 %v3512, %v3514
    %v3517 = vadd.f32 %v3513, %v3515
    %s3518 = scalar_lea.vmem [#allocation15], 112
    %3519 = vst [vmem:[%s3518] sm:$0xff] %v3516
    %3520 = vst [vmem:[%s3518 + $0x8] sm:$0xff] %v3517
    %3521 = vst [vmem:[%s2207] sm:$0xff] %v3516
    %3522 = vst [vmem:[%s2207 + $0x8] sm:$0xff] %v3517
    // Predicated region
    $region66: #{encoder_rnn_forward.1} parent=1 // pred_check
      _
    $region67: #{encoder_rnn_forward.1} parent=1 // pred_check_branch
      %3524 = sbr.rel (0) target = $region69
    $region68: #{encoder_rnn_forward.1} parent=1 // pred_region
      %3526 = vsyncadd [#allocation6], 0
      %s3527 = sshll.u32 [#allocation15], 4
      %s3528 = int_to_ptr.vmem [resolvable:$true] %s3527
      %s3529 = sshll.u32 %s9, 4
      %s3530 = int_to_ptr.hbm [resolvable:$true] %s3529
      %3535 = dma.vmem_to_hbm [thread:$0]  %s3528, 2048, %s3530, [#allocation6], 128, 128, 8
    $region69: #{encoder_rnn_forward.1} parent=1 // pred_fallthru
      _
    // Predicated region
    $region70: #{encoder_rnn_forward.1} parent=1 // pred_check
      _
    $region71: #{encoder_rnn_forward.1} parent=1 // pred_check_branch
      %3537 = sbr.rel (0) target = $region73
    $region72: #{encoder_rnn_forward.1} parent=1 // pred_region
      %3539 = vsyncadd [#allocation17], 0
      %s3540 = sshll.u32 [#allocation16], 4
      %s3541 = int_to_ptr.vmem [resolvable:$true] %s3540
      %s3542 = sshll.u32 %s10, 4
      %s3543 = int_to_ptr.hbm [resolvable:$true] %s3542
      %3548 = dma.vmem_to_hbm [thread:$0]  %s3541, 512, %s3543, [#allocation17], 128, 128, 8
    $region73: #{encoder_rnn_forward.1} parent=1 // pred_fallthru
      _
    // Predicated region
    $region74: #{encoder_rnn_forward.1} parent=1 // pred_check
      _
    $region75: #{encoder_rnn_forward.1} parent=1 // pred_check_branch
      %3550 = sbr.rel (0) target = $region77
    $region76: #{encoder_rnn_forward.1} parent=1 // pred_region
      %3552 = dma.done [#allocation6], 2048
    $region77: #{encoder_rnn_forward.1} parent=1 // pred_fallthru
      _
    // Predicated region
    $region78: #{encoder_rnn_forward.1} parent=1 // pred_check
      _
    $region79: #{encoder_rnn_forward.1} parent=1 // pred_check_branch
      %3554 = sbr.rel (0) target = $region81
    $region80: #{encoder_rnn_forward.1} parent=1 // pred_region
      %3556 = dma.done [#allocation17], 512
    $region81: #{encoder_rnn_forward.1} parent=1 // pred_fallthru
      _
    %3557 = vsyncpa [#allocation5], 1
    %3558 = vsyncpa [#allocation8], 1
    %3559 = vsyncpa [#allocation11], 1
    %3560 = vsyncpa [#allocation14], 1
    %3561 = vsyncpa [#allocation6], 1
    %3562 = vsyncpa [#allocation17], 1

</llo_original>
